<compile_context>
chip_gen: v5e
topology: v5e:2x2
jax: 0.10.0
libtpu: 0.0.40
codegen_flags: <defaults>
</compile_context>

<pallas_src>
import functools

import jax
import jax.numpy as jnp
from jax import lax
from jax.experimental import pallas as pl
from jax.experimental.pallas import tpu as pltpu

# ----------------------------- model config ---------------------------------
IMAGE_SIZE = 16
PATCH_SIZE = 4
CHANNELS = 3
DIM = 32
DEPTH = 2
HEADS = 4
DIM_HEAD = 8
MLP_DIM = 64
NUM_CLASSES = 10
BATCH = 2

NUM_PATCHES = (IMAGE_SIZE // PATCH_SIZE) ** 2          # 16
PATCH_DIM = CHANNELS * PATCH_SIZE ** 2                 # 48
SEQ = NUM_PATCHES + 1                                  # 17 (cls token + patches)
INNER = HEADS * DIM_HEAD                               # 32
LN_EPS = 1e-5


# ------------------------------- kernel --------------------------------------
def _layernorm(v, g, b):
    mu = jnp.mean(v, axis=-1, keepdims=True)
    var = jnp.mean((v - mu) ** 2, axis=-1, keepdims=True)
    return (v - mu) * lax.rsqrt(var + LN_EPS) * g + b


def vit_kernel(p_ref, ew_ref, eb_ref, cls_ref, pos_ref,
               g1_ref, b1_ref, wqkv_ref, wo_ref, bo_ref,
               g2_ref, b2_ref, wf1_ref, bf1_ref, wf2_ref, bf2_ref,
               hg_ref, hb_ref, hw_ref, hbias_ref,
               o_ref, *, batch, depth, heads, dim_head):
    """Entire ViT forward for all batch elements in one kernel invocation.

    p_ref   : (B, SEQ, PATCH_DIM)  -- seq row 0 is a zero pad (replaced by cls)
    ew/eb   : (PATCH_DIM, DIM) / (1, DIM)
    cls/pos : (1, 1, DIM) / (1, SEQ, DIM)
    per-layer refs are stacked along leading DEPTH axis
    head    : hg/hb (1, DIM), hw (DIM, C), hbias (1, C)
    o_ref   : (B, C)
    """
    inner = heads * dim_head
    scale = dim_head ** (-0.5)

    # Hoist all parameter loads once (reused across the unrolled batch loop).
    ew = ew_ref[...]
    eb = eb_ref[...]
    cls_tok = cls_ref[0]                    # (1, D)
    pos = pos_ref[0]                        # (SEQ, D)
    layer_w = []
    for l in range(depth):
        layer_w.append((g1_ref[l], b1_ref[l], wqkv_ref[l], wo_ref[l], bo_ref[l],
                        g2_ref[l], b2_ref[l], wf1_ref[l], bf1_ref[l],
                        wf2_ref[l], bf2_ref[l]))
    hg = hg_ref[...]
    hb = hb_ref[...]
    hw = hw_ref[...]
    hbias = hbias_ref[...]

    for b in range(batch):                  # B=2: static unroll, no grid steps
        # --- patch embedding + cls token + positional embedding -------------
        p = p_ref[b]                                                  # (SEQ, PD)
        emb = jnp.dot(p, ew, preferred_element_type=jnp.float32) + eb  # (SEQ, D)
        rows = lax.broadcasted_iota(jnp.int32, emb.shape, 0)
        x = jnp.where(rows == 0, cls_tok, emb) + pos                  # (SEQ, D)

        # --- transformer blocks ---------------------------------------------
        for l in range(depth):
            (g1, b1, wqkv, wo, bo, g2, b2, wf1, bf1, wf2, bf2) = layer_w[l]

            # PreNorm attention + residual
            xn = _layernorm(x, g1, b1)
            qkv = jnp.dot(xn, wqkv, preferred_element_type=jnp.float32)  # (SEQ, 3*inner)

            attn_out = jnp.zeros(x.shape, jnp.float32) + bo           # out-proj bias once
            for h in range(heads):
                lo = h * dim_head
                hi = lo + dim_head
                q = qkv[:, lo:hi]
                k = qkv[:, inner + lo:inner + hi]
                v = qkv[:, 2 * inner + lo:2 * inner + hi]
                dots = lax.dot_general(q, k, (((1,), (1,)), ((), ())),
                                       preferred_element_type=jnp.float32) * scale
                dots = dots - jnp.max(dots, axis=-1, keepdims=True)
                e = jnp.exp(dots)
                attn = e * pl.reciprocal(jnp.sum(e, axis=-1, keepdims=True),
                                         approx=True)
                oh = jnp.dot(attn, v, preferred_element_type=jnp.float32)  # (SEQ, dh)
                # concat-over-heads @ W_out == sum_h oh @ W_out[h*dh:(h+1)*dh, :]
                # (wo row-slices are 8-sublane aligned)
                attn_out = attn_out + jnp.dot(oh, wo[lo:hi, :],
                                              preferred_element_type=jnp.float32)
            x = x + attn_out

            # PreNorm feed-forward + residual
            xn2 = _layernorm(x, g2, b2)
            h1 = jnp.dot(xn2, wf1, preferred_element_type=jnp.float32) + bf1
            # TODO(synk): PyTorch nn.GELU() is exact erf GELU; tanh approximation
            # used for robust Mosaic lowering (numerical diff < 1e-3).
            h1 = jax.nn.gelu(h1, approximate=True)
            ff = jnp.dot(h1, wf2, preferred_element_type=jnp.float32) + bf2
            x = x + ff

        # --- classifier head (pool='cls') ------------------------------------
        cls_row = x[:1, :]                                            # (1, D)
        hn = _layernorm(cls_row, hg, hb)
        logits = jnp.dot(hn, hw, preferred_element_type=jnp.float32) + hbias  # (1, C)
        o_ref[b:b + 1, :] = logits


# ------------------------------ pallas wrapper --------------------------------
def vit_forward(img, params):
    # img is NCHW (B, C, H, W), matching the PyTorch module.
    B, C, H, W = img.shape
    p = PATCH_SIZE
    # Rearrange 'b c (h p1) (w p2) -> b (h w) (p1 p2 c)'   (pure glue, host side)
    patches = img.reshape(B, C, H // p, p, W // p, p)
    patches = patches.transpose(0, 2, 4, 3, 5, 1)
    patches = patches.reshape(B, (H // p) * (W // p), p * p * C)
    # prepend a zero row; the kernel overwrites seq row 0 with the cls token.
    patches_padded = jnp.pad(patches, ((0, 0), (1, 0), (0, 0)))       # (B, SEQ, PD)

    args = [patches_padded,
            params["emb_w"], params["emb_b"], params["cls"], params["pos"],
            params["g1"], params["b1"], params["wqkv"], params["wo"], params["bo"],
            params["g2"], params["b2"], params["wf1"], params["bf1"],
            params["wf2"], params["bf2"],
            params["head_g"], params["head_b"], params["head_w"], params["head_bias"]]

    def full(shape):
        return pl.BlockSpec(shape, lambda i, _s=len(shape): (0,) * _s)

    kernel = functools.partial(vit_kernel, batch=B, depth=DEPTH,
                               heads=HEADS, dim_head=DIM_HEAD)
    return pl.pallas_call(
        kernel,
        out_shape=jax.ShapeDtypeStruct((B, NUM_CLASSES), jnp.float32),
        grid=(1,),                                   # single fused invocation
        in_specs=[full(a.shape) for a in args],
        out_specs=full((B, NUM_CLASSES)),
        compiler_params=pltpu.CompilerParams(dimension_semantics=("arbitrary",)),
    )(*args)


# ------------------------------ parameter init -------------------------------
def init_params(key):
    def nrm(k, shape, scale=0.02):
        return scale * jax.random.normal(k, shape, jnp.float32)

    keys = iter(jax.random.split(key, 64))
    params = {
        "emb_w": nrm(next(keys), (PATCH_DIM, DIM)),
        "emb_b": jnp.zeros((1, DIM), jnp.float32),
        "cls": jax.random.normal(next(keys), (1, 1, DIM), jnp.float32),
        "pos": jax.random.normal(next(keys), (1, SEQ, DIM), jnp.float32),
        "head_g": jnp.ones((1, DIM), jnp.float32),
        "head_b": jnp.zeros((1, DIM), jnp.float32),
        "head_w": nrm(next(keys), (DIM, NUM_CLASSES)),
        "head_bias": jnp.zeros((1, NUM_CLASSES), jnp.float32),
        # per-layer params stacked along a leading DEPTH axis
        "g1": jnp.ones((DEPTH, 1, DIM), jnp.float32),
        "b1": jnp.zeros((DEPTH, 1, DIM), jnp.float32),
        "wqkv": nrm(next(keys), (DEPTH, DIM, 3 * INNER)),
        "wo": nrm(next(keys), (DEPTH, INNER, DIM)),
        "bo": jnp.zeros((DEPTH, 1, DIM), jnp.float32),
        "g2": jnp.ones((DEPTH, 1, DIM), jnp.float32),
        "b2": jnp.zeros((DEPTH, 1, DIM), jnp.float32),
        "wf1": nrm(next(keys), (DEPTH, DIM, MLP_DIM)),
        "bf1": jnp.zeros((DEPTH, 1, MLP_DIM), jnp.float32),
        "wf2": nrm(next(keys), (DEPTH, MLP_DIM, DIM)),
        "bf2": jnp.zeros((DEPTH, 1, DIM), jnp.float32),
    }
    return params


# ---------------------------------- main -------------------------------------
if __name__ == "__main__":
    root = jax.random.PRNGKey(0)
    k_img, k_params = jax.random.split(root)
    img = jax.random.normal(k_img, (BATCH, CHANNELS, IMAGE_SIZE, IMAGE_SIZE),
                            jnp.float32)
    params = init_params(k_params)

    logits = jax.jit(vit_forward)(img, params)
    logits = jax.block_until_ready(logits)

    assert logits.shape == (BATCH, NUM_CLASSES)
    assert jnp.all(jnp.isfinite(logits))
    print("KERNEL_OK")
</pallas_src>

<mosaic_0001>
module attributes {stable_mosaic.version = 11 : i64} {
  func.func @vit_kernel(%arg0: i32, %arg1: memref<2x17x48xf32, #tpu.memory_space<vmem>>, %arg2: memref<48x32xf32, #tpu.memory_space<vmem>>, %arg3: memref<1x32xf32, #tpu.memory_space<vmem>>, %arg4: memref<1x1x32xf32, #tpu.memory_space<vmem>>, %arg5: memref<1x17x32xf32, #tpu.memory_space<vmem>>, %arg6: memref<2x1x32xf32, #tpu.memory_space<vmem>>, %arg7: memref<2x1x32xf32, #tpu.memory_space<vmem>>, %arg8: memref<2x32x96xf32, #tpu.memory_space<vmem>>, %arg9: memref<2x32x32xf32, #tpu.memory_space<vmem>>, %arg10: memref<2x1x32xf32, #tpu.memory_space<vmem>>, %arg11: memref<2x1x32xf32, #tpu.memory_space<vmem>>, %arg12: memref<2x1x32xf32, #tpu.memory_space<vmem>>, %arg13: memref<2x32x64xf32, #tpu.memory_space<vmem>>, %arg14: memref<2x1x64xf32, #tpu.memory_space<vmem>>, %arg15: memref<2x64x32xf32, #tpu.memory_space<vmem>>, %arg16: memref<2x1x32xf32, #tpu.memory_space<vmem>>, %arg17: memref<1x32xf32, #tpu.memory_space<vmem>>, %arg18: memref<1x32xf32, #tpu.memory_space<vmem>>, %arg19: memref<32x10xf32, #tpu.memory_space<vmem>>, %arg20: memref<1x10xf32, #tpu.memory_space<vmem>>, %arg21: memref<2x10xf32, #tpu.memory_space<vmem>>) attributes {dimension_semantics = [#tpu.dimension_semantics<arbitrary>], iteration_bounds = array<i64: 1>, scalar_prefetch = 0 : i64, scratch_operands = 0 : i64, tpu.core_type = #tpu.core_type<tc>, window_params = [{pipeline_mode = #tpu.pipeline_mode<synchronous>, transform_indices = @transform_0, window_bounds = array<i64: 2, 17, 48>}, {pipeline_mode = #tpu.pipeline_mode<synchronous>, transform_indices = @transform_1, window_bounds = array<i64: 48, 32>}, {pipeline_mode = #tpu.pipeline_mode<synchronous>, transform_indices = @transform_2, window_bounds = array<i64: 1, 32>}, {pipeline_mode = #tpu.pipeline_mode<synchronous>, transform_indices = @transform_3, window_bounds = array<i64: 1, 1, 32>}, {pipeline_mode = #tpu.pipeline_mode<synchronous>, transform_indices = @transform_4, window_bounds = array<i64: 1, 17, 32>}, {pipeline_mode = #tpu.pipeline_mode<synchronous>, transform_indices = @transform_5, window_bounds = array<i64: 2, 1, 32>}, {pipeline_mode = #tpu.pipeline_mode<synchronous>, transform_indices = @transform_6, window_bounds = array<i64: 2, 1, 32>}, {pipeline_mode = #tpu.pipeline_mode<synchronous>, transform_indices = @transform_7, window_bounds = array<i64: 2, 32, 96>}, {pipeline_mode = #tpu.pipeline_mode<synchronous>, transform_indices = @transform_8, window_bounds = array<i64: 2, 32, 32>}, {pipeline_mode = #tpu.pipeline_mode<synchronous>, transform_indices = @transform_9, window_bounds = array<i64: 2, 1, 32>}, {pipeline_mode = #tpu.pipeline_mode<synchronous>, transform_indices = @transform_10, window_bounds = array<i64: 2, 1, 32>}, {pipeline_mode = #tpu.pipeline_mode<synchronous>, transform_indices = @transform_11, window_bounds = array<i64: 2, 1, 32>}, {pipeline_mode = #tpu.pipeline_mode<synchronous>, transform_indices = @transform_12, window_bounds = array<i64: 2, 32, 64>}, {pipeline_mode = #tpu.pipeline_mode<synchronous>, transform_indices = @transform_13, window_bounds = array<i64: 2, 1, 64>}, {pipeline_mode = #tpu.pipeline_mode<synchronous>, transform_indices = @transform_14, window_bounds = array<i64: 2, 64, 32>}, {pipeline_mode = #tpu.pipeline_mode<synchronous>, transform_indices = @transform_15, window_bounds = array<i64: 2, 1, 32>}, {pipeline_mode = #tpu.pipeline_mode<synchronous>, transform_indices = @transform_16, window_bounds = array<i64: 1, 32>}, {pipeline_mode = #tpu.pipeline_mode<synchronous>, transform_indices = @transform_17, window_bounds = array<i64: 1, 32>}, {pipeline_mode = #tpu.pipeline_mode<synchronous>, transform_indices = @transform_18, window_bounds = array<i64: 32, 10>}, {pipeline_mode = #tpu.pipeline_mode<synchronous>, transform_indices = @transform_19, window_bounds = array<i64: 1, 10>}, {pipeline_mode = #tpu.pipeline_mode<synchronous>, transform_indices = @transform_20, window_bounds = array<i64: 2, 10>}]} {
    %c0 = arith.constant 0 : index
    %c0_0 = arith.constant 0 : index
    %0 = vector.load %arg2[%c0, %c0_0] : memref<48x32xf32, #tpu.memory_space<vmem>>, vector<48x32xf32>
    %c0_1 = arith.constant 0 : index
    %c0_2 = arith.constant 0 : index
    %1 = vector.load %arg3[%c0_1, %c0_2] : memref<1x32xf32, #tpu.memory_space<vmem>>, vector<1x32xf32>
    %c0_3 = arith.constant 0 : index
    %c0_4 = arith.constant 0 : index
    %c0_5 = arith.constant 0 : index
    %2 = vector.load %arg4[%c0_3, %c0_4, %c0_5] : memref<1x1x32xf32, #tpu.memory_space<vmem>>, vector<1x1x32xf32>
    %3 = vector.shape_cast %2 : vector<1x1x32xf32> to vector<1x32xf32>
    %c0_6 = arith.constant 0 : index
    %c0_7 = arith.constant 0 : index
    %c0_8 = arith.constant 0 : index
    %4 = vector.load %arg5[%c0_6, %c0_7, %c0_8] : memref<1x17x32xf32, #tpu.memory_space<vmem>>, vector<1x17x32xf32>
    %5 = vector.shape_cast %4 : vector<1x17x32xf32> to vector<17x32xf32>
    %c0_9 = arith.constant 0 : index
    %c0_10 = arith.constant 0 : index
    %c0_11 = arith.constant 0 : index
    %6 = vector.load %arg6[%c0_9, %c0_10, %c0_11] : memref<2x1x32xf32, #tpu.memory_space<vmem>>, vector<1x1x32xf32>
    %7 = vector.shape_cast %6 : vector<1x1x32xf32> to vector<1x32xf32>
    %c0_12 = arith.constant 0 : index
    %c0_13 = arith.constant 0 : index
    %c0_14 = arith.constant 0 : index
    %8 = vector.load %arg7[%c0_12, %c0_13, %c0_14] : memref<2x1x32xf32, #tpu.memory_space<vmem>>, vector<1x1x32xf32>
    %9 = vector.shape_cast %8 : vector<1x1x32xf32> to vector<1x32xf32>
    %c0_15 = arith.constant 0 : index
    %c0_16 = arith.constant 0 : index
    %c0_17 = arith.constant 0 : index
    %10 = vector.load %arg8[%c0_15, %c0_16, %c0_17] : memref<2x32x96xf32, #tpu.memory_space<vmem>>, vector<1x32x96xf32>
    %11 = vector.shape_cast %10 : vector<1x32x96xf32> to vector<32x96xf32>
    %c0_18 = arith.constant 0 : index
    %c0_19 = arith.constant 0 : index
    %c0_20 = arith.constant 0 : index
    %12 = vector.load %arg9[%c0_18, %c0_19, %c0_20] : memref<2x32x32xf32, #tpu.memory_space<vmem>>, vector<1x32x32xf32>
    %13 = vector.shape_cast %12 : vector<1x32x32xf32> to vector<32x32xf32>
    %c0_21 = arith.constant 0 : index
    %c0_22 = arith.constant 0 : index
    %c0_23 = arith.constant 0 : index
    %14 = vector.load %arg10[%c0_21, %c0_22, %c0_23] : memref<2x1x32xf32, #tpu.memory_space<vmem>>, vector<1x1x32xf32>
    %15 = vector.shape_cast %14 : vector<1x1x32xf32> to vector<1x32xf32>
    %c0_24 = arith.constant 0 : index
    %c0_25 = arith.constant 0 : index
    %c0_26 = arith.constant 0 : index
    %16 = vector.load %arg11[%c0_24, %c0_25, %c0_26] : memref<2x1x32xf32, #tpu.memory_space<vmem>>, vector<1x1x32xf32>
    %17 = vector.shape_cast %16 : vector<1x1x32xf32> to vector<1x32xf32>
    %c0_27 = arith.constant 0 : index
    %c0_28 = arith.constant 0 : index
    %c0_29 = arith.constant 0 : index
    %18 = vector.load %arg12[%c0_27, %c0_28, %c0_29] : memref<2x1x32xf32, #tpu.memory_space<vmem>>, vector<1x1x32xf32>
    %19 = vector.shape_cast %18 : vector<1x1x32xf32> to vector<1x32xf32>
    %c0_30 = arith.constant 0 : index
    %c0_31 = arith.constant 0 : index
    %c0_32 = arith.constant 0 : index
    %20 = vector.load %arg13[%c0_30, %c0_31, %c0_32] : memref<2x32x64xf32, #tpu.memory_space<vmem>>, vector<1x32x64xf32>
    %21 = vector.shape_cast %20 : vector<1x32x64xf32> to vector<32x64xf32>
    %c0_33 = arith.constant 0 : index
    %c0_34 = arith.constant 0 : index
    %c0_35 = arith.constant 0 : index
    %22 = vector.load %arg14[%c0_33, %c0_34, %c0_35] : memref<2x1x64xf32, #tpu.memory_space<vmem>>, vector<1x1x64xf32>
    %23 = vector.shape_cast %22 : vector<1x1x64xf32> to vector<1x64xf32>
    %c0_36 = arith.constant 0 : index
    %c0_37 = arith.constant 0 : index
    %c0_38 = arith.constant 0 : index
    %24 = vector.load %arg15[%c0_36, %c0_37, %c0_38] : memref<2x64x32xf32, #tpu.memory_space<vmem>>, vector<1x64x32xf32>
    %25 = vector.shape_cast %24 : vector<1x64x32xf32> to vector<64x32xf32>
    %c0_39 = arith.constant 0 : index
    %c0_40 = arith.constant 0 : index
    %c0_41 = arith.constant 0 : index
    %26 = vector.load %arg16[%c0_39, %c0_40, %c0_41] : memref<2x1x32xf32, #tpu.memory_space<vmem>>, vector<1x1x32xf32>
    %27 = vector.shape_cast %26 : vector<1x1x32xf32> to vector<1x32xf32>
    %c1 = arith.constant 1 : index
    %c0_42 = arith.constant 0 : index
    %c0_43 = arith.constant 0 : index
    %28 = vector.load %arg6[%c1, %c0_42, %c0_43] : memref<2x1x32xf32, #tpu.memory_space<vmem>>, vector<1x1x32xf32>
    %29 = vector.shape_cast %28 : vector<1x1x32xf32> to vector<1x32xf32>
    %c1_44 = arith.constant 1 : index
    %c0_45 = arith.constant 0 : index
    %c0_46 = arith.constant 0 : index
    %30 = vector.load %arg7[%c1_44, %c0_45, %c0_46] : memref<2x1x32xf32, #tpu.memory_space<vmem>>, vector<1x1x32xf32>
    %31 = vector.shape_cast %30 : vector<1x1x32xf32> to vector<1x32xf32>
    %c1_47 = arith.constant 1 : index
    %c0_48 = arith.constant 0 : index
    %c0_49 = arith.constant 0 : index
    %32 = vector.load %arg8[%c1_47, %c0_48, %c0_49] : memref<2x32x96xf32, #tpu.memory_space<vmem>>, vector<1x32x96xf32>
    %33 = vector.shape_cast %32 : vector<1x32x96xf32> to vector<32x96xf32>
    %c1_50 = arith.constant 1 : index
    %c0_51 = arith.constant 0 : index
    %c0_52 = arith.constant 0 : index
    %34 = vector.load %arg9[%c1_50, %c0_51, %c0_52] : memref<2x32x32xf32, #tpu.memory_space<vmem>>, vector<1x32x32xf32>
    %35 = vector.shape_cast %34 : vector<1x32x32xf32> to vector<32x32xf32>
    %c1_53 = arith.constant 1 : index
    %c0_54 = arith.constant 0 : index
    %c0_55 = arith.constant 0 : index
    %36 = vector.load %arg10[%c1_53, %c0_54, %c0_55] : memref<2x1x32xf32, #tpu.memory_space<vmem>>, vector<1x1x32xf32>
    %37 = vector.shape_cast %36 : vector<1x1x32xf32> to vector<1x32xf32>
    %c1_56 = arith.constant 1 : index
    %c0_57 = arith.constant 0 : index
    %c0_58 = arith.constant 0 : index
    %38 = vector.load %arg11[%c1_56, %c0_57, %c0_58] : memref<2x1x32xf32, #tpu.memory_space<vmem>>, vector<1x1x32xf32>
    %39 = vector.shape_cast %38 : vector<1x1x32xf32> to vector<1x32xf32>
    %c1_59 = arith.constant 1 : index
    %c0_60 = arith.constant 0 : index
    %c0_61 = arith.constant 0 : index
    %40 = vector.load %arg12[%c1_59, %c0_60, %c0_61] : memref<2x1x32xf32, #tpu.memory_space<vmem>>, vector<1x1x32xf32>
    %41 = vector.shape_cast %40 : vector<1x1x32xf32> to vector<1x32xf32>
    %c1_62 = arith.constant 1 : index
    %c0_63 = arith.constant 0 : index
    %c0_64 = arith.constant 0 : index
    %42 = vector.load %arg13[%c1_62, %c0_63, %c0_64] : memref<2x32x64xf32, #tpu.memory_space<vmem>>, vector<1x32x64xf32>
    %43 = vector.shape_cast %42 : vector<1x32x64xf32> to vector<32x64xf32>
    %c1_65 = arith.constant 1 : index
    %c0_66 = arith.constant 0 : index
    %c0_67 = arith.constant 0 : index
    %44 = vector.load %arg14[%c1_65, %c0_66, %c0_67] : memref<2x1x64xf32, #tpu.memory_space<vmem>>, vector<1x1x64xf32>
    %45 = vector.shape_cast %44 : vector<1x1x64xf32> to vector<1x64xf32>
    %c1_68 = arith.constant 1 : index
    %c0_69 = arith.constant 0 : index
    %c0_70 = arith.constant 0 : index
    %46 = vector.load %arg15[%c1_68, %c0_69, %c0_70] : memref<2x64x32xf32, #tpu.memory_space<vmem>>, vector<1x64x32xf32>
    %47 = vector.shape_cast %46 : vector<1x64x32xf32> to vector<64x32xf32>
    %c1_71 = arith.constant 1 : index
    %c0_72 = arith.constant 0 : index
    %c0_73 = arith.constant 0 : index
    %48 = vector.load %arg16[%c1_71, %c0_72, %c0_73] : memref<2x1x32xf32, #tpu.memory_space<vmem>>, vector<1x1x32xf32>
    %49 = vector.shape_cast %48 : vector<1x1x32xf32> to vector<1x32xf32>
    %c0_74 = arith.constant 0 : index
    %c0_75 = arith.constant 0 : index
    %50 = vector.load %arg17[%c0_74, %c0_75] : memref<1x32xf32, #tpu.memory_space<vmem>>, vector<1x32xf32>
    %c0_76 = arith.constant 0 : index
    %c0_77 = arith.constant 0 : index
    %51 = vector.load %arg18[%c0_76, %c0_77] : memref<1x32xf32, #tpu.memory_space<vmem>>, vector<1x32xf32>
    %c0_78 = arith.constant 0 : index
    %c0_79 = arith.constant 0 : index
    %52 = vector.load %arg19[%c0_78, %c0_79] : memref<32x10xf32, #tpu.memory_space<vmem>>, vector<32x10xf32>
    %c0_80 = arith.constant 0 : index
    %c0_81 = arith.constant 0 : index
    %53 = vector.load %arg20[%c0_80, %c0_81] : memref<1x10xf32, #tpu.memory_space<vmem>>, vector<1x10xf32>
    %c0_82 = arith.constant 0 : index
    %c0_83 = arith.constant 0 : index
    %c0_84 = arith.constant 0 : index
    %54 = vector.load %arg1[%c0_82, %c0_83, %c0_84] : memref<2x17x48xf32, #tpu.memory_space<vmem>>, vector<1x17x48xf32>
    %55 = vector.shape_cast %54 : vector<1x17x48xf32> to vector<17x48xf32>
    %cst = arith.constant dense<0.000000e+00> : vector<17x32xf32>
    %56 = tpu.matmul %55, %0, %cst {dimension_numbers = #tpu.dot_dimension_numbers<[1], [0], [0], [1], [0, 0, 1, 1], [], []>} : vector<17x48xf32>, vector<48x32xf32>, vector<17x32xf32> -> vector<17x32xf32>
    %57 = vector.broadcast %1 : vector<1x32xf32> to vector<17x32xf32>
    %58 = arith.addf %56, %57 : vector<17x32xf32>
    %59 = tpu.iota {dimensions = array<i32: 0>} : vector<17x32xi32>
    %c0_i32 = arith.constant 0 : i32
    %60 = vector.broadcast %c0_i32 : i32 to vector<17x32xi32>
    %61 = arith.cmpi eq, %59, %60 : vector<17x32xi32>
    %62 = vector.shape_cast %3 : vector<1x32xf32> to vector<1x32xf32>
    %63 = vector.broadcast %62 : vector<1x32xf32> to vector<17x32xf32>
    %64 = arith.select %61, %63, %58 : vector<17x32xi1>, vector<17x32xf32>
    %65 = arith.addf %64, %5 : vector<17x32xf32>
    %cst_85 = arith.constant dense<0.000000e+00> : vector<17xf32>
    %66 = vector.multi_reduction <add>, %65, %cst_85 [1] : vector<17x32xf32> to vector<17xf32>
    %67 = vector.shape_cast %66 : vector<17xf32> to vector<17x1xf32>
    %cst_86 = arith.constant 3.200000e+01 : f32
    %68 = vector.broadcast %cst_86 : f32 to vector<17x1xf32>
    %69 = arith.divf %67, %68 : vector<17x1xf32>
    %70 = vector.broadcast %69 : vector<17x1xf32> to vector<17x32xf32>
    %71 = arith.subf %65, %70 : vector<17x32xf32>
    %72 = arith.mulf %71, %71 : vector<17x32xf32>
    %cst_87 = arith.constant dense<0.000000e+00> : vector<17xf32>
    %73 = vector.multi_reduction <add>, %72, %cst_87 [1] : vector<17x32xf32> to vector<17xf32>
    %74 = vector.shape_cast %73 : vector<17xf32> to vector<17x1xf32>
    %cst_88 = arith.constant 3.200000e+01 : f32
    %75 = vector.broadcast %cst_88 : f32 to vector<17x1xf32>
    %76 = arith.divf %74, %75 : vector<17x1xf32>
    %77 = vector.broadcast %69 : vector<17x1xf32> to vector<17x32xf32>
    %78 = arith.subf %65, %77 : vector<17x32xf32>
    %cst_89 = arith.constant 9.99999974E-6 : f32
    %79 = vector.broadcast %cst_89 : f32 to vector<17x1xf32>
    %80 = arith.addf %76, %79 : vector<17x1xf32>
    %81 = math.rsqrt %80 : vector<17x1xf32>
    %82 = vector.broadcast %81 : vector<17x1xf32> to vector<17x32xf32>
    %83 = arith.mulf %78, %82 : vector<17x32xf32>
    %84 = vector.broadcast %7 : vector<1x32xf32> to vector<17x32xf32>
    %85 = arith.mulf %83, %84 : vector<17x32xf32>
    %86 = vector.broadcast %9 : vector<1x32xf32> to vector<17x32xf32>
    %87 = arith.addf %85, %86 : vector<17x32xf32>
    %cst_90 = arith.constant dense<0.000000e+00> : vector<17x96xf32>
    %88 = tpu.matmul %87, %11, %cst_90 {dimension_numbers = #tpu.dot_dimension_numbers<[1], [0], [0], [1], [0, 0, 1, 1], [], []>} : vector<17x32xf32>, vector<32x96xf32>, vector<17x96xf32> -> vector<17x96xf32>
    %cst_91 = arith.constant 0.000000e+00 : f32
    %89 = vector.broadcast %cst_91 : f32 to vector<17x32xf32>
    %90 = vector.broadcast %15 : vector<1x32xf32> to vector<17x32xf32>
    %91 = arith.addf %89, %90 : vector<17x32xf32>
    %92 = vector.extract_strided_slice %88 {offsets = [0, 0], sizes = [17, 8], strides = [1, 1]} : vector<17x96xf32> to vector<17x8xf32>
    %93 = vector.extract_strided_slice %88 {offsets = [0, 32], sizes = [17, 8], strides = [1, 1]} : vector<17x96xf32> to vector<17x8xf32>
    %94 = vector.extract_strided_slice %88 {offsets = [0, 64], sizes = [17, 8], strides = [1, 1]} : vector<17x96xf32> to vector<17x8xf32>
    %cst_92 = arith.constant dense<0.000000e+00> : vector<17x17xf32>
    %95 = tpu.matmul %92, %93, %cst_92 {dimension_numbers = #tpu.dot_dimension_numbers<[1], [1], [0], [0], [0, 0, 1, 0], [], []>} : vector<17x8xf32>, vector<17x8xf32>, vector<17x17xf32> -> vector<17x17xf32>
    %cst_93 = arith.constant 0.353553385 : f32
    %96 = vector.broadcast %cst_93 : f32 to vector<17x17xf32>
    %97 = arith.mulf %95, %96 : vector<17x17xf32>
    %cst_94 = arith.constant dense<0xFF800000> : vector<17xf32>
    %98 = vector.multi_reduction <maximumf>, %97, %cst_94 [1] : vector<17x17xf32> to vector<17xf32>
    %99 = vector.shape_cast %98 : vector<17xf32> to vector<17x1xf32>
    %100 = vector.broadcast %99 : vector<17x1xf32> to vector<17x17xf32>
    %101 = arith.subf %97, %100 : vector<17x17xf32>
    %102 = math.exp %101 : vector<17x17xf32>
    %cst_95 = arith.constant dense<0.000000e+00> : vector<17xf32>
    %103 = vector.multi_reduction <add>, %102, %cst_95 [1] : vector<17x17xf32> to vector<17xf32>
    %104 = vector.shape_cast %103 : vector<17xf32> to vector<17x1xf32>
    %105 = tpu.reciprocal %104 {approx = true} : vector<17x1xf32> -> vector<17x1xf32>
    %106 = vector.broadcast %105 : vector<17x1xf32> to vector<17x17xf32>
    %107 = arith.mulf %102, %106 : vector<17x17xf32>
    %cst_96 = arith.constant dense<0.000000e+00> : vector<17x8xf32>
    %108 = tpu.matmul %107, %94, %cst_96 {dimension_numbers = #tpu.dot_dimension_numbers<[1], [0], [0], [1], [0, 0, 1, 1], [], []>} : vector<17x17xf32>, vector<17x8xf32>, vector<17x8xf32> -> vector<17x8xf32>
    %109 = vector.extract_strided_slice %13 {offsets = [0, 0], sizes = [8, 32], strides = [1, 1]} : vector<32x32xf32> to vector<8x32xf32>
    %cst_97 = arith.constant dense<0.000000e+00> : vector<17x32xf32>
    %110 = tpu.matmul %108, %109, %cst_97 {dimension_numbers = #tpu.dot_dimension_numbers<[1], [0], [0], [1], [0, 0, 1, 1], [], []>} : vector<17x8xf32>, vector<8x32xf32>, vector<17x32xf32> -> vector<17x32xf32>
    %111 = arith.addf %91, %110 : vector<17x32xf32>
    %112 = vector.extract_strided_slice %88 {offsets = [0, 8], sizes = [17, 8], strides = [1, 1]} : vector<17x96xf32> to vector<17x8xf32>
    %113 = vector.extract_strided_slice %88 {offsets = [0, 40], sizes = [17, 8], strides = [1, 1]} : vector<17x96xf32> to vector<17x8xf32>
    %114 = vector.extract_strided_slice %88 {offsets = [0, 72], sizes = [17, 8], strides = [1, 1]} : vector<17x96xf32> to vector<17x8xf32>
    %cst_98 = arith.constant dense<0.000000e+00> : vector<17x17xf32>
    %115 = tpu.matmul %112, %113, %cst_98 {dimension_numbers = #tpu.dot_dimension_numbers<[1], [1], [0], [0], [0, 0, 1, 0], [], []>} : vector<17x8xf32>, vector<17x8xf32>, vector<17x17xf32> -> vector<17x17xf32>
    %cst_99 = arith.constant 0.353553385 : f32
    %116 = vector.broadcast %cst_99 : f32 to vector<17x17xf32>
    %117 = arith.mulf %115, %116 : vector<17x17xf32>
    %cst_100 = arith.constant dense<0xFF800000> : vector<17xf32>
    %118 = vector.multi_reduction <maximumf>, %117, %cst_100 [1] : vector<17x17xf32> to vector<17xf32>
    %119 = vector.shape_cast %118 : vector<17xf32> to vector<17x1xf32>
    %120 = vector.broadcast %119 : vector<17x1xf32> to vector<17x17xf32>
    %121 = arith.subf %117, %120 : vector<17x17xf32>
    %122 = math.exp %121 : vector<17x17xf32>
    %cst_101 = arith.constant dense<0.000000e+00> : vector<17xf32>
    %123 = vector.multi_reduction <add>, %122, %cst_101 [1] : vector<17x17xf32> to vector<17xf32>
    %124 = vector.shape_cast %123 : vector<17xf32> to vector<17x1xf32>
    %125 = tpu.reciprocal %124 {approx = true} : vector<17x1xf32> -> vector<17x1xf32>
    %126 = vector.broadcast %125 : vector<17x1xf32> to vector<17x17xf32>
    %127 = arith.mulf %122, %126 : vector<17x17xf32>
    %cst_102 = arith.constant dense<0.000000e+00> : vector<17x8xf32>
    %128 = tpu.matmul %127, %114, %cst_102 {dimension_numbers = #tpu.dot_dimension_numbers<[1], [0], [0], [1], [0, 0, 1, 1], [], []>} : vector<17x17xf32>, vector<17x8xf32>, vector<17x8xf32> -> vector<17x8xf32>
    %129 = vector.extract_strided_slice %13 {offsets = [8, 0], sizes = [8, 32], strides = [1, 1]} : vector<32x32xf32> to vector<8x32xf32>
    %cst_103 = arith.constant dense<0.000000e+00> : vector<17x32xf32>
    %130 = tpu.matmul %128, %129, %cst_103 {dimension_numbers = #tpu.dot_dimension_numbers<[1], [0], [0], [1], [0, 0, 1, 1], [], []>} : vector<17x8xf32>, vector<8x32xf32>, vector<17x32xf32> -> vector<17x32xf32>
    %131 = arith.addf %111, %130 : vector<17x32xf32>
    %132 = vector.extract_strided_slice %88 {offsets = [0, 16], sizes = [17, 8], strides = [1, 1]} : vector<17x96xf32> to vector<17x8xf32>
    %133 = vector.extract_strided_slice %88 {offsets = [0, 48], sizes = [17, 8], strides = [1, 1]} : vector<17x96xf32> to vector<17x8xf32>
    %134 = vector.extract_strided_slice %88 {offsets = [0, 80], sizes = [17, 8], strides = [1, 1]} : vector<17x96xf32> to vector<17x8xf32>
    %cst_104 = arith.constant dense<0.000000e+00> : vector<17x17xf32>
    %135 = tpu.matmul %132, %133, %cst_104 {dimension_numbers = #tpu.dot_dimension_numbers<[1], [1], [0], [0], [0, 0, 1, 0], [], []>} : vector<17x8xf32>, vector<17x8xf32>, vector<17x17xf32> -> vector<17x17xf32>
    %cst_105 = arith.constant 0.353553385 : f32
    %136 = vector.broadcast %cst_105 : f32 to vector<17x17xf32>
    %137 = arith.mulf %135, %136 : vector<17x17xf32>
    %cst_106 = arith.constant dense<0xFF800000> : vector<17xf32>
    %138 = vector.multi_reduction <maximumf>, %137, %cst_106 [1] : vector<17x17xf32> to vector<17xf32>
    %139 = vector.shape_cast %138 : vector<17xf32> to vector<17x1xf32>
    %140 = vector.broadcast %139 : vector<17x1xf32> to vector<17x17xf32>
    %141 = arith.subf %137, %140 : vector<17x17xf32>
    %142 = math.exp %141 : vector<17x17xf32>
    %cst_107 = arith.constant dense<0.000000e+00> : vector<17xf32>
    %143 = vector.multi_reduction <add>, %142, %cst_107 [1] : vector<17x17xf32> to vector<17xf32>
    %144 = vector.shape_cast %143 : vector<17xf32> to vector<17x1xf32>
    %145 = tpu.reciprocal %144 {approx = true} : vector<17x1xf32> -> vector<17x1xf32>
    %146 = vector.broadcast %145 : vector<17x1xf32> to vector<17x17xf32>
    %147 = arith.mulf %142, %146 : vector<17x17xf32>
    %cst_108 = arith.constant dense<0.000000e+00> : vector<17x8xf32>
    %148 = tpu.matmul %147, %134, %cst_108 {dimension_numbers = #tpu.dot_dimension_numbers<[1], [0], [0], [1], [0, 0, 1, 1], [], []>} : vector<17x17xf32>, vector<17x8xf32>, vector<17x8xf32> -> vector<17x8xf32>
    %149 = vector.extract_strided_slice %13 {offsets = [16, 0], sizes = [8, 32], strides = [1, 1]} : vector<32x32xf32> to vector<8x32xf32>
    %cst_109 = arith.constant dense<0.000000e+00> : vector<17x32xf32>
    %150 = tpu.matmul %148, %149, %cst_109 {dimension_numbers = #tpu.dot_dimension_numbers<[1], [0], [0], [1], [0, 0, 1, 1], [], []>} : vector<17x8xf32>, vector<8x32xf32>, vector<17x32xf32> -> vector<17x32xf32>
    %151 = arith.addf %131, %150 : vector<17x32xf32>
    %152 = vector.extract_strided_slice %88 {offsets = [0, 24], sizes = [17, 8], strides = [1, 1]} : vector<17x96xf32> to vector<17x8xf32>
    %153 = vector.extract_strided_slice %88 {offsets = [0, 56], sizes = [17, 8], strides = [1, 1]} : vector<17x96xf32> to vector<17x8xf32>
    %154 = vector.extract_strided_slice %88 {offsets = [0, 88], sizes = [17, 8], strides = [1, 1]} : vector<17x96xf32> to vector<17x8xf32>
    %cst_110 = arith.constant dense<0.000000e+00> : vector<17x17xf32>
    %155 = tpu.matmul %152, %153, %cst_110 {dimension_numbers = #tpu.dot_dimension_numbers<[1], [1], [0], [0], [0, 0, 1, 0], [], []>} : vector<17x8xf32>, vector<17x8xf32>, vector<17x17xf32> -> vector<17x17xf32>
    %cst_111 = arith.constant 0.353553385 : f32
    %156 = vector.broadcast %cst_111 : f32 to vector<17x17xf32>
    %157 = arith.mulf %155, %156 : vector<17x17xf32>
    %cst_112 = arith.constant dense<0xFF800000> : vector<17xf32>
    %158 = vector.multi_reduction <maximumf>, %157, %cst_112 [1] : vector<17x17xf32> to vector<17xf32>
    %159 = vector.shape_cast %158 : vector<17xf32> to vector<17x1xf32>
    %160 = vector.broadcast %159 : vector<17x1xf32> to vector<17x17xf32>
    %161 = arith.subf %157, %160 : vector<17x17xf32>
    %162 = math.exp %161 : vector<17x17xf32>
    %cst_113 = arith.constant dense<0.000000e+00> : vector<17xf32>
    %163 = vector.multi_reduction <add>, %162, %cst_113 [1] : vector<17x17xf32> to vector<17xf32>
    %164 = vector.shape_cast %163 : vector<17xf32> to vector<17x1xf32>
    %165 = tpu.reciprocal %164 {approx = true} : vector<17x1xf32> -> vector<17x1xf32>
    %166 = vector.broadcast %165 : vector<17x1xf32> to vector<17x17xf32>
    %167 = arith.mulf %162, %166 : vector<17x17xf32>
    %cst_114 = arith.constant dense<0.000000e+00> : vector<17x8xf32>
    %168 = tpu.matmul %167, %154, %cst_114 {dimension_numbers = #tpu.dot_dimension_numbers<[1], [0], [0], [1], [0, 0, 1, 1], [], []>} : vector<17x17xf32>, vector<17x8xf32>, vector<17x8xf32> -> vector<17x8xf32>
    %169 = vector.extract_strided_slice %13 {offsets = [24, 0], sizes = [8, 32], strides = [1, 1]} : vector<32x32xf32> to vector<8x32xf32>
    %cst_115 = arith.constant dense<0.000000e+00> : vector<17x32xf32>
    %170 = tpu.matmul %168, %169, %cst_115 {dimension_numbers = #tpu.dot_dimension_numbers<[1], [0], [0], [1], [0, 0, 1, 1], [], []>} : vector<17x8xf32>, vector<8x32xf32>, vector<17x32xf32> -> vector<17x32xf32>
    %171 = arith.addf %151, %170 : vector<17x32xf32>
    %172 = arith.addf %65, %171 : vector<17x32xf32>
    %cst_116 = arith.constant dense<0.000000e+00> : vector<17xf32>
    %173 = vector.multi_reduction <add>, %172, %cst_116 [1] : vector<17x32xf32> to vector<17xf32>
    %174 = vector.shape_cast %173 : vector<17xf32> to vector<17x1xf32>
    %cst_117 = arith.constant 3.200000e+01 : f32
    %175 = vector.broadcast %cst_117 : f32 to vector<17x1xf32>
    %176 = arith.divf %174, %175 : vector<17x1xf32>
    %177 = vector.broadcast %176 : vector<17x1xf32> to vector<17x32xf32>
    %178 = arith.subf %172, %177 : vector<17x32xf32>
    %179 = arith.mulf %178, %178 : vector<17x32xf32>
    %cst_118 = arith.constant dense<0.000000e+00> : vector<17xf32>
    %180 = vector.multi_reduction <add>, %179, %cst_118 [1] : vector<17x32xf32> to vector<17xf32>
    %181 = vector.shape_cast %180 : vector<17xf32> to vector<17x1xf32>
    %cst_119 = arith.constant 3.200000e+01 : f32
    %182 = vector.broadcast %cst_119 : f32 to vector<17x1xf32>
    %183 = arith.divf %181, %182 : vector<17x1xf32>
    %184 = vector.broadcast %176 : vector<17x1xf32> to vector<17x32xf32>
    %185 = arith.subf %172, %184 : vector<17x32xf32>
    %cst_120 = arith.constant 9.99999974E-6 : f32
    %186 = vector.broadcast %cst_120 : f32 to vector<17x1xf32>
    %187 = arith.addf %183, %186 : vector<17x1xf32>
    %188 = math.rsqrt %187 : vector<17x1xf32>
    %189 = vector.broadcast %188 : vector<17x1xf32> to vector<17x32xf32>
    %190 = arith.mulf %185, %189 : vector<17x32xf32>
    %191 = vector.broadcast %17 : vector<1x32xf32> to vector<17x32xf32>
    %192 = arith.mulf %190, %191 : vector<17x32xf32>
    %193 = vector.broadcast %19 : vector<1x32xf32> to vector<17x32xf32>
    %194 = arith.addf %192, %193 : vector<17x32xf32>
    %cst_121 = arith.constant dense<0.000000e+00> : vector<17x64xf32>
    %195 = tpu.matmul %194, %21, %cst_121 {dimension_numbers = #tpu.dot_dimension_numbers<[1], [0], [0], [1], [0, 0, 1, 1], [], []>} : vector<17x32xf32>, vector<32x64xf32>, vector<17x64xf32> -> vector<17x64xf32>
    %196 = vector.broadcast %23 : vector<1x64xf32> to vector<17x64xf32>
    %197 = arith.addf %195, %196 : vector<17x64xf32>
    %198 = arith.mulf %197, %197 : vector<17x64xf32>
    %199 = arith.mulf %197, %198 : vector<17x64xf32>
    %cst_122 = arith.constant 4.471500e-02 : f32
    %200 = vector.broadcast %cst_122 : f32 to vector<17x64xf32>
    %201 = arith.mulf %200, %199 : vector<17x64xf32>
    %202 = arith.addf %197, %201 : vector<17x64xf32>
    %cst_123 = arith.constant 0.797884583 : f32
    %203 = vector.broadcast %cst_123 : f32 to vector<17x64xf32>
    %204 = arith.mulf %203, %202 : vector<17x64xf32>
    %205 = math.tanh %204 : vector<17x64xf32>
    %cst_124 = arith.constant 1.000000e+00 : f32
    %206 = vector.broadcast %cst_124 : f32 to vector<17x64xf32>
    %207 = arith.addf %206, %205 : vector<17x64xf32>
    %cst_125 = arith.constant 5.000000e-01 : f32
    %208 = vector.broadcast %cst_125 : f32 to vector<17x64xf32>
    %209 = arith.mulf %208, %207 : vector<17x64xf32>
    %210 = arith.mulf %197, %209 : vector<17x64xf32>
    %cst_126 = arith.constant dense<0.000000e+00> : vector<17x32xf32>
    %211 = tpu.matmul %210, %25, %cst_126 {dimension_numbers = #tpu.dot_dimension_numbers<[1], [0], [0], [1], [0, 0, 1, 1], [], []>} : vector<17x64xf32>, vector<64x32xf32>, vector<17x32xf32> -> vector<17x32xf32>
    %212 = vector.broadcast %27 : vector<1x32xf32> to vector<17x32xf32>
    %213 = arith.addf %211, %212 : vector<17x32xf32>
    %214 = arith.addf %172, %213 : vector<17x32xf32>
    %cst_127 = arith.constant dense<0.000000e+00> : vector<17xf32>
    %215 = vector.multi_reduction <add>, %214, %cst_127 [1] : vector<17x32xf32> to vector<17xf32>
    %216 = vector.shape_cast %215 : vector<17xf32> to vector<17x1xf32>
    %cst_128 = arith.constant 3.200000e+01 : f32
    %217 = vector.broadcast %cst_128 : f32 to vector<17x1xf32>
    %218 = arith.divf %216, %217 : vector<17x1xf32>
    %219 = vector.broadcast %218 : vector<17x1xf32> to vector<17x32xf32>
    %220 = arith.subf %214, %219 : vector<17x32xf32>
    %221 = arith.mulf %220, %220 : vector<17x32xf32>
    %cst_129 = arith.constant dense<0.000000e+00> : vector<17xf32>
    %222 = vector.multi_reduction <add>, %221, %cst_129 [1] : vector<17x32xf32> to vector<17xf32>
    %223 = vector.shape_cast %222 : vector<17xf32> to vector<17x1xf32>
    %cst_130 = arith.constant 3.200000e+01 : f32
    %224 = vector.broadcast %cst_130 : f32 to vector<17x1xf32>
    %225 = arith.divf %223, %224 : vector<17x1xf32>
    %226 = vector.broadcast %218 : vector<17x1xf32> to vector<17x32xf32>
    %227 = arith.subf %214, %226 : vector<17x32xf32>
    %cst_131 = arith.constant 9.99999974E-6 : f32
    %228 = vector.broadcast %cst_131 : f32 to vector<17x1xf32>
    %229 = arith.addf %225, %228 : vector<17x1xf32>
    %230 = math.rsqrt %229 : vector<17x1xf32>
    %231 = vector.broadcast %230 : vector<17x1xf32> to vector<17x32xf32>
    %232 = arith.mulf %227, %231 : vector<17x32xf32>
    %233 = vector.broadcast %29 : vector<1x32xf32> to vector<17x32xf32>
    %234 = arith.mulf %232, %233 : vector<17x32xf32>
    %235 = vector.broadcast %31 : vector<1x32xf32> to vector<17x32xf32>
    %236 = arith.addf %234, %235 : vector<17x32xf32>
    %cst_132 = arith.constant dense<0.000000e+00> : vector<17x96xf32>
    %237 = tpu.matmul %236, %33, %cst_132 {dimension_numbers = #tpu.dot_dimension_numbers<[1], [0], [0], [1], [0, 0, 1, 1], [], []>} : vector<17x32xf32>, vector<32x96xf32>, vector<17x96xf32> -> vector<17x96xf32>
    %cst_133 = arith.constant 0.000000e+00 : f32
    %238 = vector.broadcast %cst_133 : f32 to vector<17x32xf32>
    %239 = vector.broadcast %37 : vector<1x32xf32> to vector<17x32xf32>
    %240 = arith.addf %238, %239 : vector<17x32xf32>
    %241 = vector.extract_strided_slice %237 {offsets = [0, 0], sizes = [17, 8], strides = [1, 1]} : vector<17x96xf32> to vector<17x8xf32>
    %242 = vector.extract_strided_slice %237 {offsets = [0, 32], sizes = [17, 8], strides = [1, 1]} : vector<17x96xf32> to vector<17x8xf32>
    %243 = vector.extract_strided_slice %237 {offsets = [0, 64], sizes = [17, 8], strides = [1, 1]} : vector<17x96xf32> to vector<17x8xf32>
    %cst_134 = arith.constant dense<0.000000e+00> : vector<17x17xf32>
    %244 = tpu.matmul %241, %242, %cst_134 {dimension_numbers = #tpu.dot_dimension_numbers<[1], [1], [0], [0], [0, 0, 1, 0], [], []>} : vector<17x8xf32>, vector<17x8xf32>, vector<17x17xf32> -> vector<17x17xf32>
    %cst_135 = arith.constant 0.353553385 : f32
    %245 = vector.broadcast %cst_135 : f32 to vector<17x17xf32>
    %246 = arith.mulf %244, %245 : vector<17x17xf32>
    %cst_136 = arith.constant dense<0xFF800000> : vector<17xf32>
    %247 = vector.multi_reduction <maximumf>, %246, %cst_136 [1] : vector<17x17xf32> to vector<17xf32>
    %248 = vector.shape_cast %247 : vector<17xf32> to vector<17x1xf32>
    %249 = vector.broadcast %248 : vector<17x1xf32> to vector<17x17xf32>
    %250 = arith.subf %246, %249 : vector<17x17xf32>
    %251 = math.exp %250 : vector<17x17xf32>
    %cst_137 = arith.constant dense<0.000000e+00> : vector<17xf32>
    %252 = vector.multi_reduction <add>, %251, %cst_137 [1] : vector<17x17xf32> to vector<17xf32>
    %253 = vector.shape_cast %252 : vector<17xf32> to vector<17x1xf32>
    %254 = tpu.reciprocal %253 {approx = true} : vector<17x1xf32> -> vector<17x1xf32>
    %255 = vector.broadcast %254 : vector<17x1xf32> to vector<17x17xf32>
    %256 = arith.mulf %251, %255 : vector<17x17xf32>
    %cst_138 = arith.constant dense<0.000000e+00> : vector<17x8xf32>
    %257 = tpu.matmul %256, %243, %cst_138 {dimension_numbers = #tpu.dot_dimension_numbers<[1], [0], [0], [1], [0, 0, 1, 1], [], []>} : vector<17x17xf32>, vector<17x8xf32>, vector<17x8xf32> -> vector<17x8xf32>
    %258 = vector.extract_strided_slice %35 {offsets = [0, 0], sizes = [8, 32], strides = [1, 1]} : vector<32x32xf32> to vector<8x32xf32>
    %cst_139 = arith.constant dense<0.000000e+00> : vector<17x32xf32>
    %259 = tpu.matmul %257, %258, %cst_139 {dimension_numbers = #tpu.dot_dimension_numbers<[1], [0], [0], [1], [0, 0, 1, 1], [], []>} : vector<17x8xf32>, vector<8x32xf32>, vector<17x32xf32> -> vector<17x32xf32>
    %260 = arith.addf %240, %259 : vector<17x32xf32>
    %261 = vector.extract_strided_slice %237 {offsets = [0, 8], sizes = [17, 8], strides = [1, 1]} : vector<17x96xf32> to vector<17x8xf32>
    %262 = vector.extract_strided_slice %237 {offsets = [0, 40], sizes = [17, 8], strides = [1, 1]} : vector<17x96xf32> to vector<17x8xf32>
    %263 = vector.extract_strided_slice %237 {offsets = [0, 72], sizes = [17, 8], strides = [1, 1]} : vector<17x96xf32> to vector<17x8xf32>
    %cst_140 = arith.constant dense<0.000000e+00> : vector<17x17xf32>
    %264 = tpu.matmul %261, %262, %cst_140 {dimension_numbers = #tpu.dot_dimension_numbers<[1], [1], [0], [0], [0, 0, 1, 0], [], []>} : vector<17x8xf32>, vector<17x8xf32>, vector<17x17xf32> -> vector<17x17xf32>
    %cst_141 = arith.constant 0.353553385 : f32
    %265 = vector.broadcast %cst_141 : f32 to vector<17x17xf32>
    %266 = arith.mulf %264, %265 : vector<17x17xf32>
    %cst_142 = arith.constant dense<0xFF800000> : vector<17xf32>
    %267 = vector.multi_reduction <maximumf>, %266, %cst_142 [1] : vector<17x17xf32> to vector<17xf32>
    %268 = vector.shape_cast %267 : vector<17xf32> to vector<17x1xf32>
    %269 = vector.broadcast %268 : vector<17x1xf32> to vector<17x17xf32>
    %270 = arith.subf %266, %269 : vector<17x17xf32>
    %271 = math.exp %270 : vector<17x17xf32>
    %cst_143 = arith.constant dense<0.000000e+00> : vector<17xf32>
    %272 = vector.multi_reduction <add>, %271, %cst_143 [1] : vector<17x17xf32> to vector<17xf32>
    %273 = vector.shape_cast %272 : vector<17xf32> to vector<17x1xf32>
    %274 = tpu.reciprocal %273 {approx = true} : vector<17x1xf32> -> vector<17x1xf32>
    %275 = vector.broadcast %274 : vector<17x1xf32> to vector<17x17xf32>
    %276 = arith.mulf %271, %275 : vector<17x17xf32>
    %cst_144 = arith.constant dense<0.000000e+00> : vector<17x8xf32>
    %277 = tpu.matmul %276, %263, %cst_144 {dimension_numbers = #tpu.dot_dimension_numbers<[1], [0], [0], [1], [0, 0, 1, 1], [], []>} : vector<17x17xf32>, vector<17x8xf32>, vector<17x8xf32> -> vector<17x8xf32>
    %278 = vector.extract_strided_slice %35 {offsets = [8, 0], sizes = [8, 32], strides = [1, 1]} : vector<32x32xf32> to vector<8x32xf32>
    %cst_145 = arith.constant dense<0.000000e+00> : vector<17x32xf32>
    %279 = tpu.matmul %277, %278, %cst_145 {dimension_numbers = #tpu.dot_dimension_numbers<[1], [0], [0], [1], [0, 0, 1, 1], [], []>} : vector<17x8xf32>, vector<8x32xf32>, vector<17x32xf32> -> vector<17x32xf32>
    %280 = arith.addf %260, %279 : vector<17x32xf32>
    %281 = vector.extract_strided_slice %237 {offsets = [0, 16], sizes = [17, 8], strides = [1, 1]} : vector<17x96xf32> to vector<17x8xf32>
    %282 = vector.extract_strided_slice %237 {offsets = [0, 48], sizes = [17, 8], strides = [1, 1]} : vector<17x96xf32> to vector<17x8xf32>
    %283 = vector.extract_strided_slice %237 {offsets = [0, 80], sizes = [17, 8], strides = [1, 1]} : vector<17x96xf32> to vector<17x8xf32>
    %cst_146 = arith.constant dense<0.000000e+00> : vector<17x17xf32>
    %284 = tpu.matmul %281, %282, %cst_146 {dimension_numbers = #tpu.dot_dimension_numbers<[1], [1], [0], [0], [0, 0, 1, 0], [], []>} : vector<17x8xf32>, vector<17x8xf32>, vector<17x17xf32> -> vector<17x17xf32>
    %cst_147 = arith.constant 0.353553385 : f32
    %285 = vector.broadcast %cst_147 : f32 to vector<17x17xf32>
    %286 = arith.mulf %284, %285 : vector<17x17xf32>
    %cst_148 = arith.constant dense<0xFF800000> : vector<17xf32>
    %287 = vector.multi_reduction <maximumf>, %286, %cst_148 [1] : vector<17x17xf32> to vector<17xf32>
    %288 = vector.shape_cast %287 : vector<17xf32> to vector<17x1xf32>
    %289 = vector.broadcast %288 : vector<17x1xf32> to vector<17x17xf32>
    %290 = arith.subf %286, %289 : vector<17x17xf32>
    %291 = math.exp %290 : vector<17x17xf32>
    %cst_149 = arith.constant dense<0.000000e+00> : vector<17xf32>
    %292 = vector.multi_reduction <add>, %291, %cst_149 [1] : vector<17x17xf32> to vector<17xf32>
    %293 = vector.shape_cast %292 : vector<17xf32> to vector<17x1xf32>
    %294 = tpu.reciprocal %293 {approx = true} : vector<17x1xf32> -> vector<17x1xf32>
    %295 = vector.broadcast %294 : vector<17x1xf32> to vector<17x17xf32>
    %296 = arith.mulf %291, %295 : vector<17x17xf32>
    %cst_150 = arith.constant dense<0.000000e+00> : vector<17x8xf32>
    %297 = tpu.matmul %296, %283, %cst_150 {dimension_numbers = #tpu.dot_dimension_numbers<[1], [0], [0], [1], [0, 0, 1, 1], [], []>} : vector<17x17xf32>, vector<17x8xf32>, vector<17x8xf32> -> vector<17x8xf32>
    %298 = vector.extract_strided_slice %35 {offsets = [16, 0], sizes = [8, 32], strides = [1, 1]} : vector<32x32xf32> to vector<8x32xf32>
    %cst_151 = arith.constant dense<0.000000e+00> : vector<17x32xf32>
    %299 = tpu.matmul %297, %298, %cst_151 {dimension_numbers = #tpu.dot_dimension_numbers<[1], [0], [0], [1], [0, 0, 1, 1], [], []>} : vector<17x8xf32>, vector<8x32xf32>, vector<17x32xf32> -> vector<17x32xf32>
    %300 = arith.addf %280, %299 : vector<17x32xf32>
    %301 = vector.extract_strided_slice %237 {offsets = [0, 24], sizes = [17, 8], strides = [1, 1]} : vector<17x96xf32> to vector<17x8xf32>
    %302 = vector.extract_strided_slice %237 {offsets = [0, 56], sizes = [17, 8], strides = [1, 1]} : vector<17x96xf32> to vector<17x8xf32>
    %303 = vector.extract_strided_slice %237 {offsets = [0, 88], sizes = [17, 8], strides = [1, 1]} : vector<17x96xf32> to vector<17x8xf32>
    %cst_152 = arith.constant dense<0.000000e+00> : vector<17x17xf32>
    %304 = tpu.matmul %301, %302, %cst_152 {dimension_numbers = #tpu.dot_dimension_numbers<[1], [1], [0], [0], [0, 0, 1, 0], [], []>} : vector<17x8xf32>, vector<17x8xf32>, vector<17x17xf32> -> vector<17x17xf32>
    %cst_153 = arith.constant 0.353553385 : f32
    %305 = vector.broadcast %cst_153 : f32 to vector<17x17xf32>
    %306 = arith.mulf %304, %305 : vector<17x17xf32>
    %cst_154 = arith.constant dense<0xFF800000> : vector<17xf32>
    %307 = vector.multi_reduction <maximumf>, %306, %cst_154 [1] : vector<17x17xf32> to vector<17xf32>
    %308 = vector.shape_cast %307 : vector<17xf32> to vector<17x1xf32>
    %309 = vector.broadcast %308 : vector<17x1xf32> to vector<17x17xf32>
    %310 = arith.subf %306, %309 : vector<17x17xf32>
    %311 = math.exp %310 : vector<17x17xf32>
    %cst_155 = arith.constant dense<0.000000e+00> : vector<17xf32>
    %312 = vector.multi_reduction <add>, %311, %cst_155 [1] : vector<17x17xf32> to vector<17xf32>
    %313 = vector.shape_cast %312 : vector<17xf32> to vector<17x1xf32>
    %314 = tpu.reciprocal %313 {approx = true} : vector<17x1xf32> -> vector<17x1xf32>
    %315 = vector.broadcast %314 : vector<17x1xf32> to vector<17x17xf32>
    %316 = arith.mulf %311, %315 : vector<17x17xf32>
    %cst_156 = arith.constant dense<0.000000e+00> : vector<17x8xf32>
    %317 = tpu.matmul %316, %303, %cst_156 {dimension_numbers = #tpu.dot_dimension_numbers<[1], [0], [0], [1], [0, 0, 1, 1], [], []>} : vector<17x17xf32>, vector<17x8xf32>, vector<17x8xf32> -> vector<17x8xf32>
    %318 = vector.extract_strided_slice %35 {offsets = [24, 0], sizes = [8, 32], strides = [1, 1]} : vector<32x32xf32> to vector<8x32xf32>
    %cst_157 = arith.constant dense<0.000000e+00> : vector<17x32xf32>
    %319 = tpu.matmul %317, %318, %cst_157 {dimension_numbers = #tpu.dot_dimension_numbers<[1], [0], [0], [1], [0, 0, 1, 1], [], []>} : vector<17x8xf32>, vector<8x32xf32>, vector<17x32xf32> -> vector<17x32xf32>
    %320 = arith.addf %300, %319 : vector<17x32xf32>
    %321 = arith.addf %214, %320 : vector<17x32xf32>
    %cst_158 = arith.constant dense<0.000000e+00> : vector<17xf32>
    %322 = vector.multi_reduction <add>, %321, %cst_158 [1] : vector<17x32xf32> to vector<17xf32>
    %323 = vector.shape_cast %322 : vector<17xf32> to vector<17x1xf32>
    %cst_159 = arith.constant 3.200000e+01 : f32
    %324 = vector.broadcast %cst_159 : f32 to vector<17x1xf32>
    %325 = arith.divf %323, %324 : vector<17x1xf32>
    %326 = vector.broadcast %325 : vector<17x1xf32> to vector<17x32xf32>
    %327 = arith.subf %321, %326 : vector<17x32xf32>
    %328 = arith.mulf %327, %327 : vector<17x32xf32>
    %cst_160 = arith.constant dense<0.000000e+00> : vector<17xf32>
    %329 = vector.multi_reduction <add>, %328, %cst_160 [1] : vector<17x32xf32> to vector<17xf32>
    %330 = vector.shape_cast %329 : vector<17xf32> to vector<17x1xf32>
    %cst_161 = arith.constant 3.200000e+01 : f32
    %331 = vector.broadcast %cst_161 : f32 to vector<17x1xf32>
    %332 = arith.divf %330, %331 : vector<17x1xf32>
    %333 = vector.broadcast %325 : vector<17x1xf32> to vector<17x32xf32>
    %334 = arith.subf %321, %333 : vector<17x32xf32>
    %cst_162 = arith.constant 9.99999974E-6 : f32
    %335 = vector.broadcast %cst_162 : f32 to vector<17x1xf32>
    %336 = arith.addf %332, %335 : vector<17x1xf32>
    %337 = math.rsqrt %336 : vector<17x1xf32>
    %338 = vector.broadcast %337 : vector<17x1xf32> to vector<17x32xf32>
    %339 = arith.mulf %334, %338 : vector<17x32xf32>
    %340 = vector.broadcast %39 : vector<1x32xf32> to vector<17x32xf32>
    %341 = arith.mulf %339, %340 : vector<17x32xf32>
    %342 = vector.broadcast %41 : vector<1x32xf32> to vector<17x32xf32>
    %343 = arith.addf %341, %342 : vector<17x32xf32>
    %cst_163 = arith.constant dense<0.000000e+00> : vector<17x64xf32>
    %344 = tpu.matmul %343, %43, %cst_163 {dimension_numbers = #tpu.dot_dimension_numbers<[1], [0], [0], [1], [0, 0, 1, 1], [], []>} : vector<17x32xf32>, vector<32x64xf32>, vector<17x64xf32> -> vector<17x64xf32>
    %345 = vector.broadcast %45 : vector<1x64xf32> to vector<17x64xf32>
    %346 = arith.addf %344, %345 : vector<17x64xf32>
    %347 = arith.mulf %346, %346 : vector<17x64xf32>
    %348 = arith.mulf %346, %347 : vector<17x64xf32>
    %cst_164 = arith.constant 4.471500e-02 : f32
    %349 = vector.broadcast %cst_164 : f32 to vector<17x64xf32>
    %350 = arith.mulf %349, %348 : vector<17x64xf32>
    %351 = arith.addf %346, %350 : vector<17x64xf32>
    %cst_165 = arith.constant 0.797884583 : f32
    %352 = vector.broadcast %cst_165 : f32 to vector<17x64xf32>
    %353 = arith.mulf %352, %351 : vector<17x64xf32>
    %354 = math.tanh %353 : vector<17x64xf32>
    %cst_166 = arith.constant 1.000000e+00 : f32
    %355 = vector.broadcast %cst_166 : f32 to vector<17x64xf32>
    %356 = arith.addf %355, %354 : vector<17x64xf32>
    %cst_167 = arith.constant 5.000000e-01 : f32
    %357 = vector.broadcast %cst_167 : f32 to vector<17x64xf32>
    %358 = arith.mulf %357, %356 : vector<17x64xf32>
    %359 = arith.mulf %346, %358 : vector<17x64xf32>
    %cst_168 = arith.constant dense<0.000000e+00> : vector<17x32xf32>
    %360 = tpu.matmul %359, %47, %cst_168 {dimension_numbers = #tpu.dot_dimension_numbers<[1], [0], [0], [1], [0, 0, 1, 1], [], []>} : vector<17x64xf32>, vector<64x32xf32>, vector<17x32xf32> -> vector<17x32xf32>
    %361 = vector.broadcast %49 : vector<1x32xf32> to vector<17x32xf32>
    %362 = arith.addf %360, %361 : vector<17x32xf32>
    %363 = arith.addf %321, %362 : vector<17x32xf32>
    %364 = vector.extract_strided_slice %363 {offsets = [0, 0], sizes = [1, 32], strides = [1, 1]} : vector<17x32xf32> to vector<1x32xf32>
    %cst_169 = arith.constant dense<0.000000e+00> : vector<1xf32>
    %365 = vector.multi_reduction <add>, %364, %cst_169 [1] : vector<1x32xf32> to vector<1xf32>
    %366 = vector.shape_cast %365 : vector<1xf32> to vector<1x1xf32>
    %cst_170 = arith.constant 3.200000e+01 : f32
    %367 = vector.broadcast %cst_170 : f32 to vector<1x1xf32>
    %368 = arith.divf %366, %367 : vector<1x1xf32>
    %369 = vector.broadcast %368 : vector<1x1xf32> to vector<1x32xf32>
    %370 = arith.subf %364, %369 : vector<1x32xf32>
    %371 = arith.mulf %370, %370 : vector<1x32xf32>
    %cst_171 = arith.constant dense<0.000000e+00> : vector<1xf32>
    %372 = vector.multi_reduction <add>, %371, %cst_171 [1] : vector<1x32xf32> to vector<1xf32>
    %373 = vector.shape_cast %372 : vector<1xf32> to vector<1x1xf32>
    %cst_172 = arith.constant 3.200000e+01 : f32
    %374 = vector.broadcast %cst_172 : f32 to vector<1x1xf32>
    %375 = arith.divf %373, %374 : vector<1x1xf32>
    %376 = vector.broadcast %368 : vector<1x1xf32> to vector<1x32xf32>
    %377 = arith.subf %364, %376 : vector<1x32xf32>
    %cst_173 = arith.constant 9.99999974E-6 : f32
    %378 = vector.broadcast %cst_173 : f32 to vector<1x1xf32>
    %379 = arith.addf %375, %378 : vector<1x1xf32>
    %380 = math.rsqrt %379 : vector<1x1xf32>
    %381 = vector.broadcast %380 : vector<1x1xf32> to vector<1x32xf32>
    %382 = arith.mulf %377, %381 : vector<1x32xf32>
    %383 = arith.mulf %382, %50 : vector<1x32xf32>
    %384 = arith.addf %383, %51 : vector<1x32xf32>
    %cst_174 = arith.constant dense<0.000000e+00> : vector<1x10xf32>
    %385 = tpu.matmul %384, %52, %cst_174 {dimension_numbers = #tpu.dot_dimension_numbers<[1], [0], [0], [1], [0, 0, 1, 1], [], []>} : vector<1x32xf32>, vector<32x10xf32>, vector<1x10xf32> -> vector<1x10xf32>
    %386 = arith.addf %385, %53 : vector<1x10xf32>
    %c0_175 = arith.constant 0 : index
    %c0_176 = arith.constant 0 : index
    %387 = vector.load %arg21[%c0_175, %c0_176] : memref<2x10xf32, #tpu.memory_space<vmem>>, vector<1x10xf32>
    tpu.vector_store %arg21[%c0_175, %c0_176], %386 {strides = array<i32>} : memref<2x10xf32, #tpu.memory_space<vmem>>, vector<1x10xf32>,
    %c1_177 = arith.constant 1 : index
    %c0_178 = arith.constant 0 : index
    %c0_179 = arith.constant 0 : index
    %388 = vector.load %arg1[%c1_177, %c0_178, %c0_179] : memref<2x17x48xf32, #tpu.memory_space<vmem>>, vector<1x17x48xf32>
    %389 = vector.shape_cast %388 : vector<1x17x48xf32> to vector<17x48xf32>
    %cst_180 = arith.constant dense<0.000000e+00> : vector<17x32xf32>
    %390 = tpu.matmul %389, %0, %cst_180 {dimension_numbers = #tpu.dot_dimension_numbers<[1], [0], [0], [1], [0, 0, 1, 1], [], []>} : vector<17x48xf32>, vector<48x32xf32>, vector<17x32xf32> -> vector<17x32xf32>
    %391 = vector.broadcast %1 : vector<1x32xf32> to vector<17x32xf32>
    %392 = arith.addf %390, %391 : vector<17x32xf32>
    %393 = tpu.iota {dimensions = array<i32: 0>} : vector<17x32xi32>
    %c0_i32_181 = arith.constant 0 : i32
    %394 = vector.broadcast %c0_i32_181 : i32 to vector<17x32xi32>
    %395 = arith.cmpi eq, %393, %394 : vector<17x32xi32>
    %396 = vector.shape_cast %3 : vector<1x32xf32> to vector<1x32xf32>
    %397 = vector.broadcast %396 : vector<1x32xf32> to vector<17x32xf32>
    %398 = arith.select %395, %397, %392 : vector<17x32xi1>, vector<17x32xf32>
    %399 = arith.addf %398, %5 : vector<17x32xf32>
    %cst_182 = arith.constant dense<0.000000e+00> : vector<17xf32>
    %400 = vector.multi_reduction <add>, %399, %cst_182 [1] : vector<17x32xf32> to vector<17xf32>
    %401 = vector.shape_cast %400 : vector<17xf32> to vector<17x1xf32>
    %cst_183 = arith.constant 3.200000e+01 : f32
    %402 = vector.broadcast %cst_183 : f32 to vector<17x1xf32>
    %403 = arith.divf %401, %402 : vector<17x1xf32>
    %404 = vector.broadcast %403 : vector<17x1xf32> to vector<17x32xf32>
    %405 = arith.subf %399, %404 : vector<17x32xf32>
    %406 = arith.mulf %405, %405 : vector<17x32xf32>
    %cst_184 = arith.constant dense<0.000000e+00> : vector<17xf32>
    %407 = vector.multi_reduction <add>, %406, %cst_184 [1] : vector<17x32xf32> to vector<17xf32>
    %408 = vector.shape_cast %407 : vector<17xf32> to vector<17x1xf32>
    %cst_185 = arith.constant 3.200000e+01 : f32
    %409 = vector.broadcast %cst_185 : f32 to vector<17x1xf32>
    %410 = arith.divf %408, %409 : vector<17x1xf32>
    %411 = vector.broadcast %403 : vector<17x1xf32> to vector<17x32xf32>
    %412 = arith.subf %399, %411 : vector<17x32xf32>
    %cst_186 = arith.constant 9.99999974E-6 : f32
    %413 = vector.broadcast %cst_186 : f32 to vector<17x1xf32>
    %414 = arith.addf %410, %413 : vector<17x1xf32>
    %415 = math.rsqrt %414 : vector<17x1xf32>
    %416 = vector.broadcast %415 : vector<17x1xf32> to vector<17x32xf32>
    %417 = arith.mulf %412, %416 : vector<17x32xf32>
    %418 = vector.broadcast %7 : vector<1x32xf32> to vector<17x32xf32>
    %419 = arith.mulf %417, %418 : vector<17x32xf32>
    %420 = vector.broadcast %9 : vector<1x32xf32> to vector<17x32xf32>
    %421 = arith.addf %419, %420 : vector<17x32xf32>
    %cst_187 = arith.constant dense<0.000000e+00> : vector<17x96xf32>
    %422 = tpu.matmul %421, %11, %cst_187 {dimension_numbers = #tpu.dot_dimension_numbers<[1], [0], [0], [1], [0, 0, 1, 1], [], []>} : vector<17x32xf32>, vector<32x96xf32>, vector<17x96xf32> -> vector<17x96xf32>
    %cst_188 = arith.constant 0.000000e+00 : f32
    %423 = vector.broadcast %cst_188 : f32 to vector<17x32xf32>
    %424 = vector.broadcast %15 : vector<1x32xf32> to vector<17x32xf32>
    %425 = arith.addf %423, %424 : vector<17x32xf32>
    %426 = vector.extract_strided_slice %422 {offsets = [0, 0], sizes = [17, 8], strides = [1, 1]} : vector<17x96xf32> to vector<17x8xf32>
    %427 = vector.extract_strided_slice %422 {offsets = [0, 32], sizes = [17, 8], strides = [1, 1]} : vector<17x96xf32> to vector<17x8xf32>
    %428 = vector.extract_strided_slice %422 {offsets = [0, 64], sizes = [17, 8], strides = [1, 1]} : vector<17x96xf32> to vector<17x8xf32>
    %cst_189 = arith.constant dense<0.000000e+00> : vector<17x17xf32>
    %429 = tpu.matmul %426, %427, %cst_189 {dimension_numbers = #tpu.dot_dimension_numbers<[1], [1], [0], [0], [0, 0, 1, 0], [], []>} : vector<17x8xf32>, vector<17x8xf32>, vector<17x17xf32> -> vector<17x17xf32>
    %cst_190 = arith.constant 0.353553385 : f32
    %430 = vector.broadcast %cst_190 : f32 to vector<17x17xf32>
    %431 = arith.mulf %429, %430 : vector<17x17xf32>
    %cst_191 = arith.constant dense<0xFF800000> : vector<17xf32>
    %432 = vector.multi_reduction <maximumf>, %431, %cst_191 [1] : vector<17x17xf32> to vector<17xf32>
    %433 = vector.shape_cast %432 : vector<17xf32> to vector<17x1xf32>
    %434 = vector.broadcast %433 : vector<17x1xf32> to vector<17x17xf32>
    %435 = arith.subf %431, %434 : vector<17x17xf32>
    %436 = math.exp %435 : vector<17x17xf32>
    %cst_192 = arith.constant dense<0.000000e+00> : vector<17xf32>
    %437 = vector.multi_reduction <add>, %436, %cst_192 [1] : vector<17x17xf32> to vector<17xf32>
    %438 = vector.shape_cast %437 : vector<17xf32> to vector<17x1xf32>
    %439 = tpu.reciprocal %438 {approx = true} : vector<17x1xf32> -> vector<17x1xf32>
    %440 = vector.broadcast %439 : vector<17x1xf32> to vector<17x17xf32>
    %441 = arith.mulf %436, %440 : vector<17x17xf32>
    %cst_193 = arith.constant dense<0.000000e+00> : vector<17x8xf32>
    %442 = tpu.matmul %441, %428, %cst_193 {dimension_numbers = #tpu.dot_dimension_numbers<[1], [0], [0], [1], [0, 0, 1, 1], [], []>} : vector<17x17xf32>, vector<17x8xf32>, vector<17x8xf32> -> vector<17x8xf32>
    %443 = vector.extract_strided_slice %13 {offsets = [0, 0], sizes = [8, 32], strides = [1, 1]} : vector<32x32xf32> to vector<8x32xf32>
    %cst_194 = arith.constant dense<0.000000e+00> : vector<17x32xf32>
    %444 = tpu.matmul %442, %443, %cst_194 {dimension_numbers = #tpu.dot_dimension_numbers<[1], [0], [0], [1], [0, 0, 1, 1], [], []>} : vector<17x8xf32>, vector<8x32xf32>, vector<17x32xf32> -> vector<17x32xf32>
    %445 = arith.addf %425, %444 : vector<17x32xf32>
    %446 = vector.extract_strided_slice %422 {offsets = [0, 8], sizes = [17, 8], strides = [1, 1]} : vector<17x96xf32> to vector<17x8xf32>
    %447 = vector.extract_strided_slice %422 {offsets = [0, 40], sizes = [17, 8], strides = [1, 1]} : vector<17x96xf32> to vector<17x8xf32>
    %448 = vector.extract_strided_slice %422 {offsets = [0, 72], sizes = [17, 8], strides = [1, 1]} : vector<17x96xf32> to vector<17x8xf32>
    %cst_195 = arith.constant dense<0.000000e+00> : vector<17x17xf32>
    %449 = tpu.matmul %446, %447, %cst_195 {dimension_numbers = #tpu.dot_dimension_numbers<[1], [1], [0], [0], [0, 0, 1, 0], [], []>} : vector<17x8xf32>, vector<17x8xf32>, vector<17x17xf32> -> vector<17x17xf32>
    %cst_196 = arith.constant 0.353553385 : f32
    %450 = vector.broadcast %cst_196 : f32 to vector<17x17xf32>
    %451 = arith.mulf %449, %450 : vector<17x17xf32>
    %cst_197 = arith.constant dense<0xFF800000> : vector<17xf32>
    %452 = vector.multi_reduction <maximumf>, %451, %cst_197 [1] : vector<17x17xf32> to vector<17xf32>
    %453 = vector.shape_cast %452 : vector<17xf32> to vector<17x1xf32>
    %454 = vector.broadcast %453 : vector<17x1xf32> to vector<17x17xf32>
    %455 = arith.subf %451, %454 : vector<17x17xf32>
    %456 = math.exp %455 : vector<17x17xf32>
    %cst_198 = arith.constant dense<0.000000e+00> : vector<17xf32>
    %457 = vector.multi_reduction <add>, %456, %cst_198 [1] : vector<17x17xf32> to vector<17xf32>
    %458 = vector.shape_cast %457 : vector<17xf32> to vector<17x1xf32>
    %459 = tpu.reciprocal %458 {approx = true} : vector<17x1xf32> -> vector<17x1xf32>
    %460 = vector.broadcast %459 : vector<17x1xf32> to vector<17x17xf32>
    %461 = arith.mulf %456, %460 : vector<17x17xf32>
    %cst_199 = arith.constant dense<0.000000e+00> : vector<17x8xf32>
    %462 = tpu.matmul %461, %448, %cst_199 {dimension_numbers = #tpu.dot_dimension_numbers<[1], [0], [0], [1], [0, 0, 1, 1], [], []>} : vector<17x17xf32>, vector<17x8xf32>, vector<17x8xf32> -> vector<17x8xf32>
    %463 = vector.extract_strided_slice %13 {offsets = [8, 0], sizes = [8, 32], strides = [1, 1]} : vector<32x32xf32> to vector<8x32xf32>
    %cst_200 = arith.constant dense<0.000000e+00> : vector<17x32xf32>
    %464 = tpu.matmul %462, %463, %cst_200 {dimension_numbers = #tpu.dot_dimension_numbers<[1], [0], [0], [1], [0, 0, 1, 1], [], []>} : vector<17x8xf32>, vector<8x32xf32>, vector<17x32xf32> -> vector<17x32xf32>
    %465 = arith.addf %445, %464 : vector<17x32xf32>
    %466 = vector.extract_strided_slice %422 {offsets = [0, 16], sizes = [17, 8], strides = [1, 1]} : vector<17x96xf32> to vector<17x8xf32>
    %467 = vector.extract_strided_slice %422 {offsets = [0, 48], sizes = [17, 8], strides = [1, 1]} : vector<17x96xf32> to vector<17x8xf32>
    %468 = vector.extract_strided_slice %422 {offsets = [0, 80], sizes = [17, 8], strides = [1, 1]} : vector<17x96xf32> to vector<17x8xf32>
    %cst_201 = arith.constant dense<0.000000e+00> : vector<17x17xf32>
    %469 = tpu.matmul %466, %467, %cst_201 {dimension_numbers = #tpu.dot_dimension_numbers<[1], [1], [0], [0], [0, 0, 1, 0], [], []>} : vector<17x8xf32>, vector<17x8xf32>, vector<17x17xf32> -> vector<17x17xf32>
    %cst_202 = arith.constant 0.353553385 : f32
    %470 = vector.broadcast %cst_202 : f32 to vector<17x17xf32>
    %471 = arith.mulf %469, %470 : vector<17x17xf32>
    %cst_203 = arith.constant dense<0xFF800000> : vector<17xf32>
    %472 = vector.multi_reduction <maximumf>, %471, %cst_203 [1] : vector<17x17xf32> to vector<17xf32>
    %473 = vector.shape_cast %472 : vector<17xf32> to vector<17x1xf32>
    %474 = vector.broadcast %473 : vector<17x1xf32> to vector<17x17xf32>
    %475 = arith.subf %471, %474 : vector<17x17xf32>
    %476 = math.exp %475 : vector<17x17xf32>
    %cst_204 = arith.constant dense<0.000000e+00> : vector<17xf32>
    %477 = vector.multi_reduction <add>, %476, %cst_204 [1] : vector<17x17xf32> to vector<17xf32>
    %478 = vector.shape_cast %477 : vector<17xf32> to vector<17x1xf32>
    %479 = tpu.reciprocal %478 {approx = true} : vector<17x1xf32> -> vector<17x1xf32>
    %480 = vector.broadcast %479 : vector<17x1xf32> to vector<17x17xf32>
    %481 = arith.mulf %476, %480 : vector<17x17xf32>
    %cst_205 = arith.constant dense<0.000000e+00> : vector<17x8xf32>
    %482 = tpu.matmul %481, %468, %cst_205 {dimension_numbers = #tpu.dot_dimension_numbers<[1], [0], [0], [1], [0, 0, 1, 1], [], []>} : vector<17x17xf32>, vector<17x8xf32>, vector<17x8xf32> -> vector<17x8xf32>
    %483 = vector.extract_strided_slice %13 {offsets = [16, 0], sizes = [8, 32], strides = [1, 1]} : vector<32x32xf32> to vector<8x32xf32>
    %cst_206 = arith.constant dense<0.000000e+00> : vector<17x32xf32>
    %484 = tpu.matmul %482, %483, %cst_206 {dimension_numbers = #tpu.dot_dimension_numbers<[1], [0], [0], [1], [0, 0, 1, 1], [], []>} : vector<17x8xf32>, vector<8x32xf32>, vector<17x32xf32> -> vector<17x32xf32>
    %485 = arith.addf %465, %484 : vector<17x32xf32>
    %486 = vector.extract_strided_slice %422 {offsets = [0, 24], sizes = [17, 8], strides = [1, 1]} : vector<17x96xf32> to vector<17x8xf32>
    %487 = vector.extract_strided_slice %422 {offsets = [0, 56], sizes = [17, 8], strides = [1, 1]} : vector<17x96xf32> to vector<17x8xf32>
    %488 = vector.extract_strided_slice %422 {offsets = [0, 88], sizes = [17, 8], strides = [1, 1]} : vector<17x96xf32> to vector<17x8xf32>
    %cst_207 = arith.constant dense<0.000000e+00> : vector<17x17xf32>
    %489 = tpu.matmul %486, %487, %cst_207 {dimension_numbers = #tpu.dot_dimension_numbers<[1], [1], [0], [0], [0, 0, 1, 0], [], []>} : vector<17x8xf32>, vector<17x8xf32>, vector<17x17xf32> -> vector<17x17xf32>
    %cst_208 = arith.constant 0.353553385 : f32
    %490 = vector.broadcast %cst_208 : f32 to vector<17x17xf32>
    %491 = arith.mulf %489, %490 : vector<17x17xf32>
    %cst_209 = arith.constant dense<0xFF800000> : vector<17xf32>
    %492 = vector.multi_reduction <maximumf>, %491, %cst_209 [1] : vector<17x17xf32> to vector<17xf32>
    %493 = vector.shape_cast %492 : vector<17xf32> to vector<17x1xf32>
    %494 = vector.broadcast %493 : vector<17x1xf32> to vector<17x17xf32>
    %495 = arith.subf %491, %494 : vector<17x17xf32>
    %496 = math.exp %495 : vector<17x17xf32>
    %cst_210 = arith.constant dense<0.000000e+00> : vector<17xf32>
    %497 = vector.multi_reduction <add>, %496, %cst_210 [1] : vector<17x17xf32> to vector<17xf32>
    %498 = vector.shape_cast %497 : vector<17xf32> to vector<17x1xf32>
    %499 = tpu.reciprocal %498 {approx = true} : vector<17x1xf32> -> vector<17x1xf32>
    %500 = vector.broadcast %499 : vector<17x1xf32> to vector<17x17xf32>
    %501 = arith.mulf %496, %500 : vector<17x17xf32>
    %cst_211 = arith.constant dense<0.000000e+00> : vector<17x8xf32>
    %502 = tpu.matmul %501, %488, %cst_211 {dimension_numbers = #tpu.dot_dimension_numbers<[1], [0], [0], [1], [0, 0, 1, 1], [], []>} : vector<17x17xf32>, vector<17x8xf32>, vector<17x8xf32> -> vector<17x8xf32>
    %503 = vector.extract_strided_slice %13 {offsets = [24, 0], sizes = [8, 32], strides = [1, 1]} : vector<32x32xf32> to vector<8x32xf32>
    %cst_212 = arith.constant dense<0.000000e+00> : vector<17x32xf32>
    %504 = tpu.matmul %502, %503, %cst_212 {dimension_numbers = #tpu.dot_dimension_numbers<[1], [0], [0], [1], [0, 0, 1, 1], [], []>} : vector<17x8xf32>, vector<8x32xf32>, vector<17x32xf32> -> vector<17x32xf32>
    %505 = arith.addf %485, %504 : vector<17x32xf32>
    %506 = arith.addf %399, %505 : vector<17x32xf32>
    %cst_213 = arith.constant dense<0.000000e+00> : vector<17xf32>
    %507 = vector.multi_reduction <add>, %506, %cst_213 [1] : vector<17x32xf32> to vector<17xf32>
    %508 = vector.shape_cast %507 : vector<17xf32> to vector<17x1xf32>
    %cst_214 = arith.constant 3.200000e+01 : f32
    %509 = vector.broadcast %cst_214 : f32 to vector<17x1xf32>
    %510 = arith.divf %508, %509 : vector<17x1xf32>
    %511 = vector.broadcast %510 : vector<17x1xf32> to vector<17x32xf32>
    %512 = arith.subf %506, %511 : vector<17x32xf32>
    %513 = arith.mulf %512, %512 : vector<17x32xf32>
    %cst_215 = arith.constant dense<0.000000e+00> : vector<17xf32>
    %514 = vector.multi_reduction <add>, %513, %cst_215 [1] : vector<17x32xf32> to vector<17xf32>
    %515 = vector.shape_cast %514 : vector<17xf32> to vector<17x1xf32>
    %cst_216 = arith.constant 3.200000e+01 : f32
    %516 = vector.broadcast %cst_216 : f32 to vector<17x1xf32>
    %517 = arith.divf %515, %516 : vector<17x1xf32>
    %518 = vector.broadcast %510 : vector<17x1xf32> to vector<17x32xf32>
    %519 = arith.subf %506, %518 : vector<17x32xf32>
    %cst_217 = arith.constant 9.99999974E-6 : f32
    %520 = vector.broadcast %cst_217 : f32 to vector<17x1xf32>
    %521 = arith.addf %517, %520 : vector<17x1xf32>
    %522 = math.rsqrt %521 : vector<17x1xf32>
    %523 = vector.broadcast %522 : vector<17x1xf32> to vector<17x32xf32>
    %524 = arith.mulf %519, %523 : vector<17x32xf32>
    %525 = vector.broadcast %17 : vector<1x32xf32> to vector<17x32xf32>
    %526 = arith.mulf %524, %525 : vector<17x32xf32>
    %527 = vector.broadcast %19 : vector<1x32xf32> to vector<17x32xf32>
    %528 = arith.addf %526, %527 : vector<17x32xf32>
    %cst_218 = arith.constant dense<0.000000e+00> : vector<17x64xf32>
    %529 = tpu.matmul %528, %21, %cst_218 {dimension_numbers = #tpu.dot_dimension_numbers<[1], [0], [0], [1], [0, 0, 1, 1], [], []>} : vector<17x32xf32>, vector<32x64xf32>, vector<17x64xf32> -> vector<17x64xf32>
    %530 = vector.broadcast %23 : vector<1x64xf32> to vector<17x64xf32>
    %531 = arith.addf %529, %530 : vector<17x64xf32>
    %532 = arith.mulf %531, %531 : vector<17x64xf32>
    %533 = arith.mulf %531, %532 : vector<17x64xf32>
    %cst_219 = arith.constant 4.471500e-02 : f32
    %534 = vector.broadcast %cst_219 : f32 to vector<17x64xf32>
    %535 = arith.mulf %534, %533 : vector<17x64xf32>
    %536 = arith.addf %531, %535 : vector<17x64xf32>
    %cst_220 = arith.constant 0.797884583 : f32
    %537 = vector.broadcast %cst_220 : f32 to vector<17x64xf32>
    %538 = arith.mulf %537, %536 : vector<17x64xf32>
    %539 = math.tanh %538 : vector<17x64xf32>
    %cst_221 = arith.constant 1.000000e+00 : f32
    %540 = vector.broadcast %cst_221 : f32 to vector<17x64xf32>
    %541 = arith.addf %540, %539 : vector<17x64xf32>
    %cst_222 = arith.constant 5.000000e-01 : f32
    %542 = vector.broadcast %cst_222 : f32 to vector<17x64xf32>
    %543 = arith.mulf %542, %541 : vector<17x64xf32>
    %544 = arith.mulf %531, %543 : vector<17x64xf32>
    %cst_223 = arith.constant dense<0.000000e+00> : vector<17x32xf32>
    %545 = tpu.matmul %544, %25, %cst_223 {dimension_numbers = #tpu.dot_dimension_numbers<[1], [0], [0], [1], [0, 0, 1, 1], [], []>} : vector<17x64xf32>, vector<64x32xf32>, vector<17x32xf32> -> vector<17x32xf32>
    %546 = vector.broadcast %27 : vector<1x32xf32> to vector<17x32xf32>
    %547 = arith.addf %545, %546 : vector<17x32xf32>
    %548 = arith.addf %506, %547 : vector<17x32xf32>
    %cst_224 = arith.constant dense<0.000000e+00> : vector<17xf32>
    %549 = vector.multi_reduction <add>, %548, %cst_224 [1] : vector<17x32xf32> to vector<17xf32>
    %550 = vector.shape_cast %549 : vector<17xf32> to vector<17x1xf32>
    %cst_225 = arith.constant 3.200000e+01 : f32
    %551 = vector.broadcast %cst_225 : f32 to vector<17x1xf32>
    %552 = arith.divf %550, %551 : vector<17x1xf32>
    %553 = vector.broadcast %552 : vector<17x1xf32> to vector<17x32xf32>
    %554 = arith.subf %548, %553 : vector<17x32xf32>
    %555 = arith.mulf %554, %554 : vector<17x32xf32>
    %cst_226 = arith.constant dense<0.000000e+00> : vector<17xf32>
    %556 = vector.multi_reduction <add>, %555, %cst_226 [1] : vector<17x32xf32> to vector<17xf32>
    %557 = vector.shape_cast %556 : vector<17xf32> to vector<17x1xf32>
    %cst_227 = arith.constant 3.200000e+01 : f32
    %558 = vector.broadcast %cst_227 : f32 to vector<17x1xf32>
    %559 = arith.divf %557, %558 : vector<17x1xf32>
    %560 = vector.broadcast %552 : vector<17x1xf32> to vector<17x32xf32>
    %561 = arith.subf %548, %560 : vector<17x32xf32>
    %cst_228 = arith.constant 9.99999974E-6 : f32
    %562 = vector.broadcast %cst_228 : f32 to vector<17x1xf32>
    %563 = arith.addf %559, %562 : vector<17x1xf32>
    %564 = math.rsqrt %563 : vector<17x1xf32>
    %565 = vector.broadcast %564 : vector<17x1xf32> to vector<17x32xf32>
    %566 = arith.mulf %561, %565 : vector<17x32xf32>
    %567 = vector.broadcast %29 : vector<1x32xf32> to vector<17x32xf32>
    %568 = arith.mulf %566, %567 : vector<17x32xf32>
    %569 = vector.broadcast %31 : vector<1x32xf32> to vector<17x32xf32>
    %570 = arith.addf %568, %569 : vector<17x32xf32>
    %cst_229 = arith.constant dense<0.000000e+00> : vector<17x96xf32>
    %571 = tpu.matmul %570, %33, %cst_229 {dimension_numbers = #tpu.dot_dimension_numbers<[1], [0], [0], [1], [0, 0, 1, 1], [], []>} : vector<17x32xf32>, vector<32x96xf32>, vector<17x96xf32> -> vector<17x96xf32>
    %cst_230 = arith.constant 0.000000e+00 : f32
    %572 = vector.broadcast %cst_230 : f32 to vector<17x32xf32>
    %573 = vector.broadcast %37 : vector<1x32xf32> to vector<17x32xf32>
    %574 = arith.addf %572, %573 : vector<17x32xf32>
    %575 = vector.extract_strided_slice %571 {offsets = [0, 0], sizes = [17, 8], strides = [1, 1]} : vector<17x96xf32> to vector<17x8xf32>
    %576 = vector.extract_strided_slice %571 {offsets = [0, 32], sizes = [17, 8], strides = [1, 1]} : vector<17x96xf32> to vector<17x8xf32>
    %577 = vector.extract_strided_slice %571 {offsets = [0, 64], sizes = [17, 8], strides = [1, 1]} : vector<17x96xf32> to vector<17x8xf32>
    %cst_231 = arith.constant dense<0.000000e+00> : vector<17x17xf32>
    %578 = tpu.matmul %575, %576, %cst_231 {dimension_numbers = #tpu.dot_dimension_numbers<[1], [1], [0], [0], [0, 0, 1, 0], [], []>} : vector<17x8xf32>, vector<17x8xf32>, vector<17x17xf32> -> vector<17x17xf32>
    %cst_232 = arith.constant 0.353553385 : f32
    %579 = vector.broadcast %cst_232 : f32 to vector<17x17xf32>
    %580 = arith.mulf %578, %579 : vector<17x17xf32>
    %cst_233 = arith.constant dense<0xFF800000> : vector<17xf32>
    %581 = vector.multi_reduction <maximumf>, %580, %cst_233 [1] : vector<17x17xf32> to vector<17xf32>
    %582 = vector.shape_cast %581 : vector<17xf32> to vector<17x1xf32>
    %583 = vector.broadcast %582 : vector<17x1xf32> to vector<17x17xf32>
    %584 = arith.subf %580, %583 : vector<17x17xf32>
    %585 = math.exp %584 : vector<17x17xf32>
    %cst_234 = arith.constant dense<0.000000e+00> : vector<17xf32>
    %586 = vector.multi_reduction <add>, %585, %cst_234 [1] : vector<17x17xf32> to vector<17xf32>
    %587 = vector.shape_cast %586 : vector<17xf32> to vector<17x1xf32>
    %588 = tpu.reciprocal %587 {approx = true} : vector<17x1xf32> -> vector<17x1xf32>
    %589 = vector.broadcast %588 : vector<17x1xf32> to vector<17x17xf32>
    %590 = arith.mulf %585, %589 : vector<17x17xf32>
    %cst_235 = arith.constant dense<0.000000e+00> : vector<17x8xf32>
    %591 = tpu.matmul %590, %577, %cst_235 {dimension_numbers = #tpu.dot_dimension_numbers<[1], [0], [0], [1], [0, 0, 1, 1], [], []>} : vector<17x17xf32>, vector<17x8xf32>, vector<17x8xf32> -> vector<17x8xf32>
    %592 = vector.extract_strided_slice %35 {offsets = [0, 0], sizes = [8, 32], strides = [1, 1]} : vector<32x32xf32> to vector<8x32xf32>
    %cst_236 = arith.constant dense<0.000000e+00> : vector<17x32xf32>
    %593 = tpu.matmul %591, %592, %cst_236 {dimension_numbers = #tpu.dot_dimension_numbers<[1], [0], [0], [1], [0, 0, 1, 1], [], []>} : vector<17x8xf32>, vector<8x32xf32>, vector<17x32xf32> -> vector<17x32xf32>
    %594 = arith.addf %574, %593 : vector<17x32xf32>
    %595 = vector.extract_strided_slice %571 {offsets = [0, 8], sizes = [17, 8], strides = [1, 1]} : vector<17x96xf32> to vector<17x8xf32>
    %596 = vector.extract_strided_slice %571 {offsets = [0, 40], sizes = [17, 8], strides = [1, 1]} : vector<17x96xf32> to vector<17x8xf32>
    %597 = vector.extract_strided_slice %571 {offsets = [0, 72], sizes = [17, 8], strides = [1, 1]} : vector<17x96xf32> to vector<17x8xf32>
    %cst_237 = arith.constant dense<0.000000e+00> : vector<17x17xf32>
    %598 = tpu.matmul %595, %596, %cst_237 {dimension_numbers = #tpu.dot_dimension_numbers<[1], [1], [0], [0], [0, 0, 1, 0], [], []>} : vector<17x8xf32>, vector<17x8xf32>, vector<17x17xf32> -> vector<17x17xf32>
    %cst_238 = arith.constant 0.353553385 : f32
    %599 = vector.broadcast %cst_238 : f32 to vector<17x17xf32>
    %600 = arith.mulf %598, %599 : vector<17x17xf32>
    %cst_239 = arith.constant dense<0xFF800000> : vector<17xf32>
    %601 = vector.multi_reduction <maximumf>, %600, %cst_239 [1] : vector<17x17xf32> to vector<17xf32>
    %602 = vector.shape_cast %601 : vector<17xf32> to vector<17x1xf32>
    %603 = vector.broadcast %602 : vector<17x1xf32> to vector<17x17xf32>
    %604 = arith.subf %600, %603 : vector<17x17xf32>
    %605 = math.exp %604 : vector<17x17xf32>
    %cst_240 = arith.constant dense<0.000000e+00> : vector<17xf32>
    %606 = vector.multi_reduction <add>, %605, %cst_240 [1] : vector<17x17xf32> to vector<17xf32>
    %607 = vector.shape_cast %606 : vector<17xf32> to vector<17x1xf32>
    %608 = tpu.reciprocal %607 {approx = true} : vector<17x1xf32> -> vector<17x1xf32>
    %609 = vector.broadcast %608 : vector<17x1xf32> to vector<17x17xf32>
    %610 = arith.mulf %605, %609 : vector<17x17xf32>
    %cst_241 = arith.constant dense<0.000000e+00> : vector<17x8xf32>
    %611 = tpu.matmul %610, %597, %cst_241 {dimension_numbers = #tpu.dot_dimension_numbers<[1], [0], [0], [1], [0, 0, 1, 1], [], []>} : vector<17x17xf32>, vector<17x8xf32>, vector<17x8xf32> -> vector<17x8xf32>
    %612 = vector.extract_strided_slice %35 {offsets = [8, 0], sizes = [8, 32], strides = [1, 1]} : vector<32x32xf32> to vector<8x32xf32>
    %cst_242 = arith.constant dense<0.000000e+00> : vector<17x32xf32>
    %613 = tpu.matmul %611, %612, %cst_242 {dimension_numbers = #tpu.dot_dimension_numbers<[1], [0], [0], [1], [0, 0, 1, 1], [], []>} : vector<17x8xf32>, vector<8x32xf32>, vector<17x32xf32> -> vector<17x32xf32>
    %614 = arith.addf %594, %613 : vector<17x32xf32>
    %615 = vector.extract_strided_slice %571 {offsets = [0, 16], sizes = [17, 8], strides = [1, 1]} : vector<17x96xf32> to vector<17x8xf32>
    %616 = vector.extract_strided_slice %571 {offsets = [0, 48], sizes = [17, 8], strides = [1, 1]} : vector<17x96xf32> to vector<17x8xf32>
    %617 = vector.extract_strided_slice %571 {offsets = [0, 80], sizes = [17, 8], strides = [1, 1]} : vector<17x96xf32> to vector<17x8xf32>
    %cst_243 = arith.constant dense<0.000000e+00> : vector<17x17xf32>
    %618 = tpu.matmul %615, %616, %cst_243 {dimension_numbers = #tpu.dot_dimension_numbers<[1], [1], [0], [0], [0, 0, 1, 0], [], []>} : vector<17x8xf32>, vector<17x8xf32>, vector<17x17xf32> -> vector<17x17xf32>
    %cst_244 = arith.constant 0.353553385 : f32
    %619 = vector.broadcast %cst_244 : f32 to vector<17x17xf32>
    %620 = arith.mulf %618, %619 : vector<17x17xf32>
    %cst_245 = arith.constant dense<0xFF800000> : vector<17xf32>
    %621 = vector.multi_reduction <maximumf>, %620, %cst_245 [1] : vector<17x17xf32> to vector<17xf32>
    %622 = vector.shape_cast %621 : vector<17xf32> to vector<17x1xf32>
    %623 = vector.broadcast %622 : vector<17x1xf32> to vector<17x17xf32>
    %624 = arith.subf %620, %623 : vector<17x17xf32>
    %625 = math.exp %624 : vector<17x17xf32>
    %cst_246 = arith.constant dense<0.000000e+00> : vector<17xf32>
    %626 = vector.multi_reduction <add>, %625, %cst_246 [1] : vector<17x17xf32> to vector<17xf32>
    %627 = vector.shape_cast %626 : vector<17xf32> to vector<17x1xf32>
    %628 = tpu.reciprocal %627 {approx = true} : vector<17x1xf32> -> vector<17x1xf32>
    %629 = vector.broadcast %628 : vector<17x1xf32> to vector<17x17xf32>
    %630 = arith.mulf %625, %629 : vector<17x17xf32>
    %cst_247 = arith.constant dense<0.000000e+00> : vector<17x8xf32>
    %631 = tpu.matmul %630, %617, %cst_247 {dimension_numbers = #tpu.dot_dimension_numbers<[1], [0], [0], [1], [0, 0, 1, 1], [], []>} : vector<17x17xf32>, vector<17x8xf32>, vector<17x8xf32> -> vector<17x8xf32>
    %632 = vector.extract_strided_slice %35 {offsets = [16, 0], sizes = [8, 32], strides = [1, 1]} : vector<32x32xf32> to vector<8x32xf32>
    %cst_248 = arith.constant dense<0.000000e+00> : vector<17x32xf32>
    %633 = tpu.matmul %631, %632, %cst_248 {dimension_numbers = #tpu.dot_dimension_numbers<[1], [0], [0], [1], [0, 0, 1, 1], [], []>} : vector<17x8xf32>, vector<8x32xf32>, vector<17x32xf32> -> vector<17x32xf32>
    %634 = arith.addf %614, %633 : vector<17x32xf32>
    %635 = vector.extract_strided_slice %571 {offsets = [0, 24], sizes = [17, 8], strides = [1, 1]} : vector<17x96xf32> to vector<17x8xf32>
    %636 = vector.extract_strided_slice %571 {offsets = [0, 56], sizes = [17, 8], strides = [1, 1]} : vector<17x96xf32> to vector<17x8xf32>
    %637 = vector.extract_strided_slice %571 {offsets = [0, 88], sizes = [17, 8], strides = [1, 1]} : vector<17x96xf32> to vector<17x8xf32>
    %cst_249 = arith.constant dense<0.000000e+00> : vector<17x17xf32>
    %638 = tpu.matmul %635, %636, %cst_249 {dimension_numbers = #tpu.dot_dimension_numbers<[1], [1], [0], [0], [0, 0, 1, 0], [], []>} : vector<17x8xf32>, vector<17x8xf32>, vector<17x17xf32> -> vector<17x17xf32>
    %cst_250 = arith.constant 0.353553385 : f32
    %639 = vector.broadcast %cst_250 : f32 to vector<17x17xf32>
    %640 = arith.mulf %638, %639 : vector<17x17xf32>
    %cst_251 = arith.constant dense<0xFF800000> : vector<17xf32>
    %641 = vector.multi_reduction <maximumf>, %640, %cst_251 [1] : vector<17x17xf32> to vector<17xf32>
    %642 = vector.shape_cast %641 : vector<17xf32> to vector<17x1xf32>
    %643 = vector.broadcast %642 : vector<17x1xf32> to vector<17x17xf32>
    %644 = arith.subf %640, %643 : vector<17x17xf32>
    %645 = math.exp %644 : vector<17x17xf32>
    %cst_252 = arith.constant dense<0.000000e+00> : vector<17xf32>
    %646 = vector.multi_reduction <add>, %645, %cst_252 [1] : vector<17x17xf32> to vector<17xf32>
    %647 = vector.shape_cast %646 : vector<17xf32> to vector<17x1xf32>
    %648 = tpu.reciprocal %647 {approx = true} : vector<17x1xf32> -> vector<17x1xf32>
    %649 = vector.broadcast %648 : vector<17x1xf32> to vector<17x17xf32>
    %650 = arith.mulf %645, %649 : vector<17x17xf32>
    %cst_253 = arith.constant dense<0.000000e+00> : vector<17x8xf32>
    %651 = tpu.matmul %650, %637, %cst_253 {dimension_numbers = #tpu.dot_dimension_numbers<[1], [0], [0], [1], [0, 0, 1, 1], [], []>} : vector<17x17xf32>, vector<17x8xf32>, vector<17x8xf32> -> vector<17x8xf32>
    %652 = vector.extract_strided_slice %35 {offsets = [24, 0], sizes = [8, 32], strides = [1, 1]} : vector<32x32xf32> to vector<8x32xf32>
    %cst_254 = arith.constant dense<0.000000e+00> : vector<17x32xf32>
    %653 = tpu.matmul %651, %652, %cst_254 {dimension_numbers = #tpu.dot_dimension_numbers<[1], [0], [0], [1], [0, 0, 1, 1], [], []>} : vector<17x8xf32>, vector<8x32xf32>, vector<17x32xf32> -> vector<17x32xf32>
    %654 = arith.addf %634, %653 : vector<17x32xf32>
    %655 = arith.addf %548, %654 : vector<17x32xf32>
    %cst_255 = arith.constant dense<0.000000e+00> : vector<17xf32>
    %656 = vector.multi_reduction <add>, %655, %cst_255 [1] : vector<17x32xf32> to vector<17xf32>
    %657 = vector.shape_cast %656 : vector<17xf32> to vector<17x1xf32>
    %cst_256 = arith.constant 3.200000e+01 : f32
    %658 = vector.broadcast %cst_256 : f32 to vector<17x1xf32>
    %659 = arith.divf %657, %658 : vector<17x1xf32>
    %660 = vector.broadcast %659 : vector<17x1xf32> to vector<17x32xf32>
    %661 = arith.subf %655, %660 : vector<17x32xf32>
    %662 = arith.mulf %661, %661 : vector<17x32xf32>
    %cst_257 = arith.constant dense<0.000000e+00> : vector<17xf32>
    %663 = vector.multi_reduction <add>, %662, %cst_257 [1] : vector<17x32xf32> to vector<17xf32>
    %664 = vector.shape_cast %663 : vector<17xf32> to vector<17x1xf32>
    %cst_258 = arith.constant 3.200000e+01 : f32
    %665 = vector.broadcast %cst_258 : f32 to vector<17x1xf32>
    %666 = arith.divf %664, %665 : vector<17x1xf32>
    %667 = vector.broadcast %659 : vector<17x1xf32> to vector<17x32xf32>
    %668 = arith.subf %655, %667 : vector<17x32xf32>
    %cst_259 = arith.constant 9.99999974E-6 : f32
    %669 = vector.broadcast %cst_259 : f32 to vector<17x1xf32>
    %670 = arith.addf %666, %669 : vector<17x1xf32>
    %671 = math.rsqrt %670 : vector<17x1xf32>
    %672 = vector.broadcast %671 : vector<17x1xf32> to vector<17x32xf32>
    %673 = arith.mulf %668, %672 : vector<17x32xf32>
    %674 = vector.broadcast %39 : vector<1x32xf32> to vector<17x32xf32>
    %675 = arith.mulf %673, %674 : vector<17x32xf32>
    %676 = vector.broadcast %41 : vector<1x32xf32> to vector<17x32xf32>
    %677 = arith.addf %675, %676 : vector<17x32xf32>
    %cst_260 = arith.constant dense<0.000000e+00> : vector<17x64xf32>
    %678 = tpu.matmul %677, %43, %cst_260 {dimension_numbers = #tpu.dot_dimension_numbers<[1], [0], [0], [1], [0, 0, 1, 1], [], []>} : vector<17x32xf32>, vector<32x64xf32>, vector<17x64xf32> -> vector<17x64xf32>
    %679 = vector.broadcast %45 : vector<1x64xf32> to vector<17x64xf32>
    %680 = arith.addf %678, %679 : vector<17x64xf32>
    %681 = arith.mulf %680, %680 : vector<17x64xf32>
    %682 = arith.mulf %680, %681 : vector<17x64xf32>
    %cst_261 = arith.constant 4.471500e-02 : f32
    %683 = vector.broadcast %cst_261 : f32 to vector<17x64xf32>
    %684 = arith.mulf %683, %682 : vector<17x64xf32>
    %685 = arith.addf %680, %684 : vector<17x64xf32>
    %cst_262 = arith.constant 0.797884583 : f32
    %686 = vector.broadcast %cst_262 : f32 to vector<17x64xf32>
    %687 = arith.mulf %686, %685 : vector<17x64xf32>
    %688 = math.tanh %687 : vector<17x64xf32>
    %cst_263 = arith.constant 1.000000e+00 : f32
    %689 = vector.broadcast %cst_263 : f32 to vector<17x64xf32>
    %690 = arith.addf %689, %688 : vector<17x64xf32>
    %cst_264 = arith.constant 5.000000e-01 : f32
    %691 = vector.broadcast %cst_264 : f32 to vector<17x64xf32>
    %692 = arith.mulf %691, %690 : vector<17x64xf32>
    %693 = arith.mulf %680, %692 : vector<17x64xf32>
    %cst_265 = arith.constant dense<0.000000e+00> : vector<17x32xf32>
    %694 = tpu.matmul %693, %47, %cst_265 {dimension_numbers = #tpu.dot_dimension_numbers<[1], [0], [0], [1], [0, 0, 1, 1], [], []>} : vector<17x64xf32>, vector<64x32xf32>, vector<17x32xf32> -> vector<17x32xf32>
    %695 = vector.broadcast %49 : vector<1x32xf32> to vector<17x32xf32>
    %696 = arith.addf %694, %695 : vector<17x32xf32>
    %697 = arith.addf %655, %696 : vector<17x32xf32>
    %698 = vector.extract_strided_slice %697 {offsets = [0, 0], sizes = [1, 32], strides = [1, 1]} : vector<17x32xf32> to vector<1x32xf32>
    %cst_266 = arith.constant dense<0.000000e+00> : vector<1xf32>
    %699 = vector.multi_reduction <add>, %698, %cst_266 [1] : vector<1x32xf32> to vector<1xf32>
    %700 = vector.shape_cast %699 : vector<1xf32> to vector<1x1xf32>
    %cst_267 = arith.constant 3.200000e+01 : f32
    %701 = vector.broadcast %cst_267 : f32 to vector<1x1xf32>
    %702 = arith.divf %700, %701 : vector<1x1xf32>
    %703 = vector.broadcast %702 : vector<1x1xf32> to vector<1x32xf32>
    %704 = arith.subf %698, %703 : vector<1x32xf32>
    %705 = arith.mulf %704, %704 : vector<1x32xf32>
    %cst_268 = arith.constant dense<0.000000e+00> : vector<1xf32>
    %706 = vector.multi_reduction <add>, %705, %cst_268 [1] : vector<1x32xf32> to vector<1xf32>
    %707 = vector.shape_cast %706 : vector<1xf32> to vector<1x1xf32>
    %cst_269 = arith.constant 3.200000e+01 : f32
    %708 = vector.broadcast %cst_269 : f32 to vector<1x1xf32>
    %709 = arith.divf %707, %708 : vector<1x1xf32>
    %710 = vector.broadcast %702 : vector<1x1xf32> to vector<1x32xf32>
    %711 = arith.subf %698, %710 : vector<1x32xf32>
    %cst_270 = arith.constant 9.99999974E-6 : f32
    %712 = vector.broadcast %cst_270 : f32 to vector<1x1xf32>
    %713 = arith.addf %709, %712 : vector<1x1xf32>
    %714 = math.rsqrt %713 : vector<1x1xf32>
    %715 = vector.broadcast %714 : vector<1x1xf32> to vector<1x32xf32>
    %716 = arith.mulf %711, %715 : vector<1x32xf32>
    %717 = arith.mulf %716, %50 : vector<1x32xf32>
    %718 = arith.addf %717, %51 : vector<1x32xf32>
    %cst_271 = arith.constant dense<0.000000e+00> : vector<1x10xf32>
    %719 = tpu.matmul %718, %52, %cst_271 {dimension_numbers = #tpu.dot_dimension_numbers<[1], [0], [0], [1], [0, 0, 1, 1], [], []>} : vector<1x32xf32>, vector<32x10xf32>, vector<1x10xf32> -> vector<1x10xf32>
    %720 = arith.addf %719, %53 : vector<1x10xf32>
    %c1_272 = arith.constant 1 : index
    %c0_273 = arith.constant 0 : index
    %721 = vector.load %arg21[%c1_272, %c0_273] : memref<2x10xf32, #tpu.memory_space<vmem>>, vector<1x10xf32>
    tpu.vector_store %arg21[%c1_272, %c0_273], %720 {strides = array<i32>} : memref<2x10xf32, #tpu.memory_space<vmem>>, vector<1x10xf32>,
    return
  }
  func.func @transform_0(%arg0: i32) -> (i32, i32, i32) {
    %c0_i32 = arith.constant 0 : i32
    %c0_i32_0 = arith.constant 0 : i32
    %c0_i32_1 = arith.constant 0 : i32
    %c0_i32_2 = arith.constant 0 : i32
    return %c0_i32, %c0_i32_0, %c0_i32_1 : i32, i32, i32
  }
  func.func @transform_1(%arg0: i32) -> (i32, i32) {
    %c0_i32 = arith.constant 0 : i32
    %c0_i32_0 = arith.constant 0 : i32
    %c0_i32_1 = arith.constant 0 : i32
    return %c0_i32, %c0_i32_0 : i32, i32
  }
  func.func @transform_2(%arg0: i32) -> (i32, i32) {
    %c0_i32 = arith.constant 0 : i32
    %c0_i32_0 = arith.constant 0 : i32
    %c0_i32_1 = arith.constant 0 : i32
    return %c0_i32, %c0_i32_0 : i32, i32
  }
  func.func @transform_3(%arg0: i32) -> (i32, i32, i32) {
    %c0_i32 = arith.constant 0 : i32
    %c0_i32_0 = arith.constant 0 : i32
    %c0_i32_1 = arith.constant 0 : i32
    %c0_i32_2 = arith.constant 0 : i32
    return %c0_i32, %c0_i32_0, %c0_i32_1 : i32, i32, i32
  }
  func.func @transform_4(%arg0: i32) -> (i32, i32, i32) {
    %c0_i32 = arith.constant 0 : i32
    %c0_i32_0 = arith.constant 0 : i32
    %c0_i32_1 = arith.constant 0 : i32
    %c0_i32_2 = arith.constant 0 : i32
    return %c0_i32, %c0_i32_0, %c0_i32_1 : i32, i32, i32
  }
  func.func @transform_5(%arg0: i32) -> (i32, i32, i32) {
    %c0_i32 = arith.constant 0 : i32
    %c0_i32_0 = arith.constant 0 : i32
    %c0_i32_1 = arith.constant 0 : i32
    %c0_i32_2 = arith.constant 0 : i32
    return %c0_i32, %c0_i32_0, %c0_i32_1 : i32, i32, i32
  }
  func.func @transform_6(%arg0: i32) -> (i32, i32, i32) {
    %c0_i32 = arith.constant 0 : i32
    %c0_i32_0 = arith.constant 0 : i32
    %c0_i32_1 = arith.constant 0 : i32
    %c0_i32_2 = arith.constant 0 : i32
    return %c0_i32, %c0_i32_0, %c0_i32_1 : i32, i32, i32
  }
  func.func @transform_7(%arg0: i32) -> (i32, i32, i32) {
    %c0_i32 = arith.constant 0 : i32
    %c0_i32_0 = arith.constant 0 : i32
    %c0_i32_1 = arith.constant 0 : i32
    %c0_i32_2 = arith.constant 0 : i32
    return %c0_i32, %c0_i32_0, %c0_i32_1 : i32, i32, i32
  }
  func.func @transform_8(%arg0: i32) -> (i32, i32, i32) {
    %c0_i32 = arith.constant 0 : i32
    %c0_i32_0 = arith.constant 0 : i32
    %c0_i32_1 = arith.constant 0 : i32
    %c0_i32_2 = arith.constant 0 : i32
    return %c0_i32, %c0_i32_0, %c0_i32_1 : i32, i32, i32
  }
  func.func @transform_9(%arg0: i32) -> (i32, i32, i32) {
    %c0_i32 = arith.constant 0 : i32
    %c0_i32_0 = arith.constant 0 : i32
    %c0_i32_1 = arith.constant 0 : i32
    %c0_i32_2 = arith.constant 0 : i32
    return %c0_i32, %c0_i32_0, %c0_i32_1 : i32, i32, i32
  }
  func.func @transform_10(%arg0: i32) -> (i32, i32, i32) {
    %c0_i32 = arith.constant 0 : i32
    %c0_i32_0 = arith.constant 0 : i32
    %c0_i32_1 = arith.constant 0 : i32
    %c0_i32_2 = arith.constant 0 : i32
    return %c0_i32, %c0_i32_0, %c0_i32_1 : i32, i32, i32
  }
  func.func @transform_11(%arg0: i32) -> (i32, i32, i32) {
    %c0_i32 = arith.constant 0 : i32
    %c0_i32_0 = arith.constant 0 : i32
    %c0_i32_1 = arith.constant 0 : i32
    %c0_i32_2 = arith.constant 0 : i32
    return %c0_i32, %c0_i32_0, %c0_i32_1 : i32, i32, i32
  }
  func.func @transform_12(%arg0: i32) -> (i32, i32, i32) {
    %c0_i32 = arith.constant 0 : i32
    %c0_i32_0 = arith.constant 0 : i32
    %c0_i32_1 = arith.constant 0 : i32
    %c0_i32_2 = arith.constant 0 : i32
    return %c0_i32, %c0_i32_0, %c0_i32_1 : i32, i32, i32
  }
  func.func @transform_13(%arg0: i32) -> (i32, i32, i32) {
    %c0_i32 = arith.constant 0 : i32
    %c0_i32_0 = arith.constant 0 : i32
    %c0_i32_1 = arith.constant 0 : i32
    %c0_i32_2 = arith.constant 0 : i32
    return %c0_i32, %c0_i32_0, %c0_i32_1 : i32, i32, i32
  }
  func.func @transform_14(%arg0: i32) -> (i32, i32, i32) {
    %c0_i32 = arith.constant 0 : i32
    %c0_i32_0 = arith.constant 0 : i32
    %c0_i32_1 = arith.constant 0 : i32
    %c0_i32_2 = arith.constant 0 : i32
    return %c0_i32, %c0_i32_0, %c0_i32_1 : i32, i32, i32
  }
  func.func @transform_15(%arg0: i32) -> (i32, i32, i32) {
    %c0_i32 = arith.constant 0 : i32
    %c0_i32_0 = arith.constant 0 : i32
    %c0_i32_1 = arith.constant 0 : i32
    %c0_i32_2 = arith.constant 0 : i32
    return %c0_i32, %c0_i32_0, %c0_i32_1 : i32, i32, i32
  }
  func.func @transform_16(%arg0: i32) -> (i32, i32) {
    %c0_i32 = arith.constant 0 : i32
    %c0_i32_0 = arith.constant 0 : i32
    %c0_i32_1 = arith.constant 0 : i32
    return %c0_i32, %c0_i32_0 : i32, i32
  }
  func.func @transform_17(%arg0: i32) -> (i32, i32) {
    %c0_i32 = arith.constant 0 : i32
    %c0_i32_0 = arith.constant 0 : i32
    %c0_i32_1 = arith.constant 0 : i32
    return %c0_i32, %c0_i32_0 : i32, i32
  }
  func.func @transform_18(%arg0: i32) -> (i32, i32) {
    %c0_i32 = arith.constant 0 : i32
    %c0_i32_0 = arith.constant 0 : i32
    %c0_i32_1 = arith.constant 0 : i32
    return %c0_i32, %c0_i32_0 : i32, i32
  }
  func.func @transform_19(%arg0: i32) -> (i32, i32) {
    %c0_i32 = arith.constant 0 : i32
    %c0_i32_0 = arith.constant 0 : i32
    %c0_i32_1 = arith.constant 0 : i32
    return %c0_i32, %c0_i32_0 : i32, i32
  }
  func.func @transform_20(%arg0: i32) -> (i32, i32) {
    %c0_i32 = arith.constant 0 : i32
    %c0_i32_0 = arith.constant 0 : i32
    %c0_i32_1 = arith.constant 0 : i32
    return %c0_i32, %c0_i32_0 : i32, i32
  }
}

</mosaic_0001>

<llo_original>
// kernel: vit_forward.1
$region0: #{vit_forward.1}
  #allocation0 [shape = 'u32[]', space=smem, size = 0x4, offset = 0x4, fixed_abs, tag = 'smem constant byte address 0x4 - core index']
  #allocation1 [shape = 'u32[72,128]{1,0:T(1,128)}', space=vmem, size = 0x9000, scoped, tag = 'internal scratch']
  %s0 = inlined_call_operand.vmem [shape: f32[2,17,48], index: 0, kind: input, shape index: {}]
  %s1 = inlined_call_operand.vmem [shape: f32[48,32], index: 1, kind: input, shape index: {}]
  %s2 = inlined_call_operand.vmem [shape: f32[1,32], index: 2, kind: input, shape index: {}]
  %s3 = inlined_call_operand.vmem [shape: f32[1,1,32], index: 3, kind: input, shape index: {}]
  %s4 = inlined_call_operand.vmem [shape: f32[1,17,32], index: 4, kind: input, shape index: {}]
  %s5 = inlined_call_operand.vmem [shape: f32[2,1,32], index: 5, kind: input, shape index: {}]
  %s6 = inlined_call_operand.vmem [shape: f32[2,1,32], index: 6, kind: input, shape index: {}]
  %s7 = inlined_call_operand.vmem [shape: f32[2,32,96], index: 7, kind: input, shape index: {}]
  %s8 = inlined_call_operand.vmem [shape: f32[2,32,32], index: 8, kind: input, shape index: {}]
  %s9 = inlined_call_operand.vmem [shape: f32[2,1,32], index: 9, kind: input, shape index: {}]
  %s10 = inlined_call_operand.vmem [shape: f32[2,1,32], index: 10, kind: input, shape index: {}]
  %s11 = inlined_call_operand.vmem [shape: f32[2,1,32], index: 11, kind: input, shape index: {}]
  %s12 = inlined_call_operand.vmem [shape: f32[2,32,64], index: 12, kind: input, shape index: {}]
  %s13 = inlined_call_operand.vmem [shape: f32[2,1,64], index: 13, kind: input, shape index: {}]
  %s14 = inlined_call_operand.vmem [shape: f32[2,64,32], index: 14, kind: input, shape index: {}]
  %s15 = inlined_call_operand.vmem [shape: f32[2,1,32], index: 15, kind: input, shape index: {}]
  %s16 = inlined_call_operand.vmem [shape: f32[1,32], index: 16, kind: input, shape index: {}]
  %s17 = inlined_call_operand.vmem [shape: f32[1,32], index: 17, kind: input, shape index: {}]
  %s18 = inlined_call_operand.vmem [shape: f32[32,10], index: 18, kind: input, shape index: {}]
  %s19 = inlined_call_operand.vmem [shape: f32[1,10], index: 19, kind: input, shape index: {}]
  %s20 = inlined_call_operand.hbm [shape: f32[2,10], index: 20, kind: output, shape index: {}]
  %s21 = sld [smem:[#allocation0]]
  $region90: #{vit_forward.1} parent=0
    _
  %s23 = ssub.s32 1, %s21
  %s24 = scalar_select 0, %s23, %s21
  $region1: #{vit_forward.1} parent=0
    #allocation2 [shape = 'u8[1024]{0}', space=vmem, size = 0x400, scoped, tag = 'output window, operand 0, single buffered']
    #allocation3 [shape = 's32[1]{0}', space=sflag, size = 0x4, scoped, tag = 'scoped memory for vit_forward.1']
    %25 = vsyncpa [#allocation3], 0
    // Predicated region
    $region2: #{vit_forward.1} parent=1 // pred_check
      _
    $region3: #{vit_forward.1} parent=1 // pred_check_branch
      %27 = sbr.rel (0) target = $region5
    $region4: #{vit_forward.1} parent=1 // pred_region
      _
    $region5: #{vit_forward.1} parent=1 // pred_fallthru
      _
    // Predicated region
    $region6: #{vit_forward.1} parent=1 // pred_check
      _
    $region7: #{vit_forward.1} parent=1 // pred_check_branch
      %29 = sbr.rel (0) target = $region9
    $region8: #{vit_forward.1} parent=1 // pred_region
      _
    $region9: #{vit_forward.1} parent=1 // pred_fallthru
      _
    // Predicated region
    $region10: #{vit_forward.1} parent=1 // pred_check
      _
    $region11: #{vit_forward.1} parent=1 // pred_check_branch
      %31 = sbr.rel (0) target = $region13
    $region12: #{vit_forward.1} parent=1 // pred_region
      _
    $region13: #{vit_forward.1} parent=1 // pred_fallthru
      _
    // Predicated region
    $region14: #{vit_forward.1} parent=1 // pred_check
      _
    $region15: #{vit_forward.1} parent=1 // pred_check_branch
      %33 = sbr.rel (0) target = $region17
    $region16: #{vit_forward.1} parent=1 // pred_region
      _
    $region17: #{vit_forward.1} parent=1 // pred_fallthru
      _
    // Predicated region
    $region18: #{vit_forward.1} parent=1 // pred_check
      _
    $region19: #{vit_forward.1} parent=1 // pred_check_branch
      %35 = sbr.rel (0) target = $region21
    $region20: #{vit_forward.1} parent=1 // pred_region
      _
    $region21: #{vit_forward.1} parent=1 // pred_fallthru
      _
    // Predicated region
    $region22: #{vit_forward.1} parent=1 // pred_check
      _
    $region23: #{vit_forward.1} parent=1 // pred_check_branch
      %37 = sbr.rel (0) target = $region25
    $region24: #{vit_forward.1} parent=1 // pred_region
      _
    $region25: #{vit_forward.1} parent=1 // pred_fallthru
      _
    // Predicated region
    $region26: #{vit_forward.1} parent=1 // pred_check
      _
    $region27: #{vit_forward.1} parent=1 // pred_check_branch
      %39 = sbr.rel (0) target = $region29
    $region28: #{vit_forward.1} parent=1 // pred_region
      _
    $region29: #{vit_forward.1} parent=1 // pred_fallthru
      _
    // Predicated region
    $region30: #{vit_forward.1} parent=1 // pred_check
      _
    $region31: #{vit_forward.1} parent=1 // pred_check_branch
      %41 = sbr.rel (0) target = $region33
    $region32: #{vit_forward.1} parent=1 // pred_region
      _
    $region33: #{vit_forward.1} parent=1 // pred_fallthru
      _
    // Predicated region
    $region34: #{vit_forward.1} parent=1 // pred_check
      _
    $region35: #{vit_forward.1} parent=1 // pred_check_branch
      %43 = sbr.rel (0) target = $region37
    $region36: #{vit_forward.1} parent=1 // pred_region
      _
    $region37: #{vit_forward.1} parent=1 // pred_fallthru
      _
    // Predicated region
    $region38: #{vit_forward.1} parent=1 // pred_check
      _
    $region39: #{vit_forward.1} parent=1 // pred_check_branch
      %45 = sbr.rel (0) target = $region41
    $region40: #{vit_forward.1} parent=1 // pred_region
      _
    $region41: #{vit_forward.1} parent=1 // pred_fallthru
      _
    // Predicated region
    $region42: #{vit_forward.1} parent=1 // pred_check
      _
    $region43: #{vit_forward.1} parent=1 // pred_check_branch
      %47 = sbr.rel (0) target = $region45
    $region44: #{vit_forward.1} parent=1 // pred_region
      _
    $region45: #{vit_forward.1} parent=1 // pred_fallthru
      _
    // Predicated region
    $region46: #{vit_forward.1} parent=1 // pred_check
      _
    $region47: #{vit_forward.1} parent=1 // pred_check_branch
      %49 = sbr.rel (0) target = $region49
    $region48: #{vit_forward.1} parent=1 // pred_region
      _
    $region49: #{vit_forward.1} parent=1 // pred_fallthru
      _
    // Predicated region
    $region50: #{vit_forward.1} parent=1 // pred_check
      _
    $region51: #{vit_forward.1} parent=1 // pred_check_branch
      %51 = sbr.rel (0) target = $region53
    $region52: #{vit_forward.1} parent=1 // pred_region
      _
    $region53: #{vit_forward.1} parent=1 // pred_fallthru
      _
    // Predicated region
    $region54: #{vit_forward.1} parent=1 // pred_check
      _
    $region55: #{vit_forward.1} parent=1 // pred_check_branch
      %53 = sbr.rel (0) target = $region57
    $region56: #{vit_forward.1} parent=1 // pred_region
      _
    $region57: #{vit_forward.1} parent=1 // pred_fallthru
      _
    // Predicated region
    $region58: #{vit_forward.1} parent=1 // pred_check
      _
    $region59: #{vit_forward.1} parent=1 // pred_check_branch
      %55 = sbr.rel (0) target = $region61
    $region60: #{vit_forward.1} parent=1 // pred_region
      _
    $region61: #{vit_forward.1} parent=1 // pred_fallthru
      _
    // Predicated region
    $region62: #{vit_forward.1} parent=1 // pred_check
      _
    $region63: #{vit_forward.1} parent=1 // pred_check_branch
      %57 = sbr.rel (0) target = $region65
    $region64: #{vit_forward.1} parent=1 // pred_region
      _
    $region65: #{vit_forward.1} parent=1 // pred_fallthru
      _
    // Predicated region
    $region66: #{vit_forward.1} parent=1 // pred_check
      _
    $region67: #{vit_forward.1} parent=1 // pred_check_branch
      %59 = sbr.rel (0) target = $region69
    $region68: #{vit_forward.1} parent=1 // pred_region
      _
    $region69: #{vit_forward.1} parent=1 // pred_fallthru
      _
    // Predicated region
    $region70: #{vit_forward.1} parent=1 // pred_check
      _
    $region71: #{vit_forward.1} parent=1 // pred_check_branch
      %61 = sbr.rel (0) target = $region73
    $region72: #{vit_forward.1} parent=1 // pred_region
      _
    $region73: #{vit_forward.1} parent=1 // pred_fallthru
      _
    // Predicated region
    $region74: #{vit_forward.1} parent=1 // pred_check
      _
    $region75: #{vit_forward.1} parent=1 // pred_check_branch
      %63 = sbr.rel (0) target = $region77
    $region76: #{vit_forward.1} parent=1 // pred_region
      _
    $region77: #{vit_forward.1} parent=1 // pred_fallthru
      _
    // Predicated region
    $region78: #{vit_forward.1} parent=1 // pred_check
      _
    $region79: #{vit_forward.1} parent=1 // pred_check_branch
      %65 = sbr.rel (0) target = $region81
    $region80: #{vit_forward.1} parent=1 // pred_region
      _
    $region81: #{vit_forward.1} parent=1 // pred_fallthru
      _
    %v66 = vld [vmem:[%s1] sm:$0xff]
    %v67 = vld [vmem:[%s1 + $0x8] sm:$0xff]
    %v68 = vld [vmem:[%s1 + $0x10] sm:$0xff]
    %v69 = vld [vmem:[%s1 + $0x18] sm:$0xff]
    %v70 = vld [vmem:[%s1 + $0x20] sm:$0xff]
    %v71 = vld [vmem:[%s1 + $0x28] sm:$0xff]
    %v72 = vld [vmem:[%s2] sm:$0x1]
    %v73 = vld [vmem:[%s3] sm:$0x1]
    %v74 = vld [vmem:[%s4] sm:$0xff]
    %v75 = vld [vmem:[%s4 + $0x8] sm:$0xff]
    %v76 = vld [vmem:[%s4 + $0x10] sm:$0x1]
    %v77 = vld [vmem:[%s5] sm:$0x1]
    %v78 = vld [vmem:[%s6] sm:$0x1]
    %v79 = vld [vmem:[%s7] sm:$0xff]
    %v80 = vld [vmem:[%s7 + $0x8] sm:$0xff]
    %v81 = vld [vmem:[%s7 + $0x10] sm:$0xff]
    %v82 = vld [vmem:[%s7 + $0x18] sm:$0xff]
    %v83 = vld [vmem:[%s8] sm:$0xff]
    %v84 = vld [vmem:[%s8 + $0x8] sm:$0xff]
    %v85 = vld [vmem:[%s8 + $0x10] sm:$0xff]
    %v86 = vld [vmem:[%s8 + $0x18] sm:$0xff]
    %v87 = vld [vmem:[%s9] sm:$0x1]
    %v88 = vld [vmem:[%s10] sm:$0x1]
    %v89 = vld [vmem:[%s11] sm:$0x1]
    %v90 = vld [vmem:[%s12] sm:$0xff]
    %v91 = vld [vmem:[%s12 + $0x8] sm:$0xff]
    %v92 = vld [vmem:[%s12 + $0x10] sm:$0xff]
    %v93 = vld [vmem:[%s12 + $0x18] sm:$0xff]
    %v94 = vld [vmem:[%s13] sm:$0x1]
    %v95 = vld [vmem:[%s14] sm:$0xff]
    %v96 = vld [vmem:[%s14 + $0x8] sm:$0xff]
    %v97 = vld [vmem:[%s14 + $0x10] sm:$0xff]
    %v98 = vld [vmem:[%s14 + $0x18] sm:$0xff]
    %v99 = vld [vmem:[%s14 + $0x20] sm:$0xff]
    %v100 = vld [vmem:[%s14 + $0x28] sm:$0xff]
    %v101 = vld [vmem:[%s14 + $0x30] sm:$0xff]
    %v102 = vld [vmem:[%s14 + $0x38] sm:$0xff]
    %v103 = vld [vmem:[%s15] sm:$0x1]
    %s104 = scalar_lea.vmem %s5, 1
    %v105 = vld [vmem:[%s104] sm:$0x1]
    %s106 = scalar_lea.vmem %s6, 1
    %v107 = vld [vmem:[%s106] sm:$0x1]
    %s108 = scalar_lea.vmem %s7, 32
    %v109 = vld [vmem:[%s108] sm:$0xff]
    %v110 = vld [vmem:[%s108 + $0x8] sm:$0xff]
    %v111 = vld [vmem:[%s108 + $0x10] sm:$0xff]
    %v112 = vld [vmem:[%s108 + $0x18] sm:$0xff]
    %s113 = scalar_lea.vmem %s8, 32
    %v114 = vld [vmem:[%s113] sm:$0xff]
    %v115 = vld [vmem:[%s113 + $0x8] sm:$0xff]
    %v116 = vld [vmem:[%s113 + $0x10] sm:$0xff]
    %v117 = vld [vmem:[%s113 + $0x18] sm:$0xff]
    %s118 = scalar_lea.vmem %s9, 1
    %v119 = vld [vmem:[%s118] sm:$0x1]
    %s120 = scalar_lea.vmem %s10, 1
    %v121 = vld [vmem:[%s120] sm:$0x1]
    %s122 = scalar_lea.vmem %s11, 1
    %v123 = vld [vmem:[%s122] sm:$0x1]
    %s124 = scalar_lea.vmem %s12, 32
    %v125 = vld [vmem:[%s124] sm:$0xff]
    %v126 = vld [vmem:[%s124 + $0x8] sm:$0xff]
    %v127 = vld [vmem:[%s124 + $0x10] sm:$0xff]
    %v128 = vld [vmem:[%s124 + $0x18] sm:$0xff]
    %s129 = scalar_lea.vmem %s13, 1
    %v130 = vld [vmem:[%s129] sm:$0x1]
    %s131 = scalar_lea.vmem %s14, 64
    %v132 = vld [vmem:[%s131] sm:$0xff]
    %v133 = vld [vmem:[%s131 + $0x8] sm:$0xff]
    %v134 = vld [vmem:[%s131 + $0x10] sm:$0xff]
    %v135 = vld [vmem:[%s131 + $0x18] sm:$0xff]
    %v136 = vld [vmem:[%s131 + $0x20] sm:$0xff]
    %v137 = vld [vmem:[%s131 + $0x28] sm:$0xff]
    %v138 = vld [vmem:[%s131 + $0x30] sm:$0xff]
    %v139 = vld [vmem:[%s131 + $0x38] sm:$0xff]
    %s140 = scalar_lea.vmem %s15, 1
    %v141 = vld [vmem:[%s140] sm:$0x1]
    %v142 = vld [vmem:[%s16] sm:$0x1]
    %v143 = vld [vmem:[%s17] sm:$0x1]
    %v144 = vld [vmem:[%s18] sm:$0xff]
    %v145 = vld [vmem:[%s18 + $0x8] sm:$0xff]
    %v146 = vld [vmem:[%s18 + $0x10] sm:$0xff]
    %v147 = vld [vmem:[%s18 + $0x18] sm:$0xff]
    %v148 = vld [vmem:[%s19] sm:$0x1]
    %v149 = vld [vmem:[%s0] sm:$0xff]
    %v150 = vld [vmem:[%s0 + $0x8] sm:$0xff]
    %v151 = vld [vmem:[%s0 + $0x10] sm:$0x1]
    %v153 = vperm.slane %v72, 0
    %vm155 = vcmask 392192
    %v157 = vsel %vm155, %v149, 0
    %v160 = vsel %vm155, %v150, 0
    %v163 = vsel %vm155, %v151, 0
    %165 = vmatpush.msra.mxu0 0.0
    %166 = vmatpush.msra.mxu0 0.0
    %167 = vmatpush.msra.mxu0 0.0
    %168 = vmatpush.msra.mxu0 0.0
    %169 = vmatpush.msra.mxu0 0.0
    %170 = vmatpush.msra.mxu0 0.0
    %171 = vmatpush.msra.mxu0 0.0
    %172 = vmatpush.msra.mxu0 0.0
    %173 = vmatpush.msra.mxu0 0.0
    %174 = vmatpush.msra.mxu0 0.0
    %175 = vmatpush.msra.mxu0 %v71
    %176 = vmatpush.msra.mxu0 %v70
    %177 = vmatpush.msra.mxu0 %v69
    %178 = vmatpush.msra.mxu0 %v68
    %179 = vmatpush.msra.mxu0 %v67
    %180 = vmatpush.msra.mxu0 %v66
    %181 = vmatmul.f32.gmra.mxu0 %v157
    %v182 = vpop.f32.mrf.mxu0
    %v183 = vadd.f32 %v153, %v182
    %184 = vmatmul.f32.gmra.mxu0 %v160
    %v185 = vpop.f32.mrf.mxu0
    %v186 = vadd.f32 %v153, %v185
    %187 = vmatmul.f32.gmra.mxu0 %v163
    %v188 = vpop.f32.mrf.mxu0
    %v189 = vadd.f32 %v153, %v188
    %190 = vdwg.mxu0
    %v191 = vlaneseq
    %v192 = vshrl.u32 %v191, 7
    %v193 = vadd.s32 %v192, 8
    %v194 = vadd.s32 %v192, 16
    %vm195 = vcmp.eq.s32.totalorder %v192, 0
    %vm196 = vcmp.eq.s32.totalorder %v193, 0
    %vm197 = vcmp.eq.s32.totalorder %v194, 0
    %v199 = vperm.slane %v73, 0
    %v201 = vsel %vm195, %v199, %v183
    %v202 = vsel %vm196, %v199, %v186
    %v203 = vsel %vm197, %v199, %v189
    %v204 = vadd.f32 %v201, %v74
    %v205 = vadd.f32 %v202, %v75
    %v206 = vadd.f32 %v203, %v76
    %vm207 = vcmask 261120
    %v208 = vsel %vm207, %v204, 0.0
    %209 = vadd.xlane.f32.xlu0 %v208
    %v210 = vpop.xlane.xlu0 %209
    %v211 = vsel %vm207, %v205, 0.0
    %212 = vadd.xlane.f32.xlu0 %v211
    %v213 = vpop.xlane.xlu0 %212
    %vm214 = vcmask 253952
    %v215 = vsel %vm214, %v206, 0.0
    %216 = vadd.xlane.f32.xlu0 %v215
    %v217 = vpop.xlane.xlu0 %216
    %v218 = vrcp.pop 32.0
    %v219 = vmul.f32 32.0, %v218
    %v220 = vsub.f32 1.0, %v219
    %v221 = vmul.f32 %v218, %v220
    %v222 = vadd.f32 %v218, %v221
    %vm223 = vweird.f32 %v218
    %v224 = vsel %vm223, %v218, %v222
    %v225 = vmul.f32 %v210, %v224
    %v226 = vmul.f32 %v213, %v224
    %v227 = vmul.f32 %v217, %v224
    %v228 = vsub.f32 %v204, %v225
    %v229 = vsub.f32 %v205, %v226
    %v230 = vsub.f32 %v206, %v227
    %v231 = vmul.f32 %v228, %v228
    %v232 = vmul.f32 %v229, %v229
    %v233 = vmul.f32 %v230, %v230
    %v234 = vsel %vm207, %v231, 0.0
    %235 = vadd.xlane.f32.xlu0 %v234
    %v236 = vpop.xlane.xlu0 %235
    %v237 = vsel %vm207, %v232, 0.0
    %238 = vadd.xlane.f32.xlu0 %v237
    %v239 = vpop.xlane.xlu0 %238
    %v240 = vsel %vm214, %v233, 0.0
    %241 = vadd.xlane.f32.xlu0 %v240
    %v242 = vpop.xlane.xlu0 %241
    %v243 = vmul.f32 %v236, %v224
    %v244 = vmul.f32 %v239, %v224
    %v245 = vmul.f32 %v242, %v224
    %v246 = vadd.f32 %v243, 1e-05
    %v247 = vadd.f32 %v244, 1e-05
    %v248 = vadd.f32 %v245, 1e-05
    %v249 = vrsqrt.pop %v246
    %v250 = vmul.f32 %v249, %v246
    %v251 = vmul.f32 %v250, %v249
    %v252 = vmul.f32 0.5, %v251
    %v253 = vsub.f32 1.5, %v252
    %v254 = vmul.f32 %v249, %v253
    %vm255 = vweird.f32 %v246
    %vm256 = vweird.f32 %v249
    %vm257 = vmor %vm255, %vm256
    %v258 = vsel %vm257, %v249, %v254
    %v259 = vrsqrt.pop %v247
    %v260 = vmul.f32 %v259, %v247
    %v261 = vmul.f32 %v260, %v259
    %v262 = vmul.f32 0.5, %v261
    %v263 = vsub.f32 1.5, %v262
    %v264 = vmul.f32 %v259, %v263
    %vm265 = vweird.f32 %v247
    %vm266 = vweird.f32 %v259
    %vm267 = vmor %vm265, %vm266
    %v268 = vsel %vm267, %v259, %v264
    %v269 = vrsqrt.pop %v248
    %v270 = vmul.f32 %v269, %v248
    %v271 = vmul.f32 %v270, %v269
    %v272 = vmul.f32 0.5, %v271
    %v273 = vsub.f32 1.5, %v272
    %v274 = vmul.f32 %v269, %v273
    %vm275 = vweird.f32 %v248
    %vm276 = vweird.f32 %v269
    %vm277 = vmor %vm275, %vm276
    %v278 = vsel %vm277, %v269, %v274
    %v279 = vmul.f32 %v228, %v258
    %v280 = vmul.f32 %v229, %v268
    %v281 = vmul.f32 %v230, %v278
    %v283 = vperm.slane %v77, 0
    %v285 = vmul.f32 %v279, %v283
    %v286 = vmul.f32 %v280, %v283
    %v287 = vmul.f32 %v281, %v283
    %v289 = vperm.slane %v78, 0
    %v291 = vadd.f32 %v285, %v289
    %v292 = vadd.f32 %v286, %v289
    %v293 = vadd.f32 %v287, %v289
    %v295 = vsel %vm207, %v291, 0
    %v298 = vsel %vm207, %v292, 0
    %v301 = vsel %vm207, %v293, 0
    %303 = vmatpush.msra.mxu0 0.0
    %304 = vmatpush.msra.mxu0 0.0
    %305 = vmatpush.msra.mxu0 0.0
    %306 = vmatpush.msra.mxu0 0.0
    %307 = vmatpush.msra.mxu0 0.0
    %308 = vmatpush.msra.mxu0 0.0
    %309 = vmatpush.msra.mxu0 0.0
    %310 = vmatpush.msra.mxu0 0.0
    %311 = vmatpush.msra.mxu0 0.0
    %312 = vmatpush.msra.mxu0 0.0
    %313 = vmatpush.msra.mxu0 0.0
    %314 = vmatpush.msra.mxu0 0.0
    %315 = vmatpush.msra.mxu0 %v82
    %316 = vmatpush.msra.mxu0 %v81
    %317 = vmatpush.msra.mxu0 %v80
    %318 = vmatpush.msra.mxu0 %v79
    %319 = vmatmul.f32.gmra.mxu0 %v295
    %v320 = vpop.f32.mrf.mxu0
    %v321 = vadd.f32 0.0, %v320
    %322 = vmatmul.f32.gmra.mxu0 %v298
    %v323 = vpop.f32.mrf.mxu0
    %v324 = vadd.f32 0.0, %v323
    %325 = vmatmul.f32.gmra.mxu0 %v301
    %v326 = vpop.f32.mrf.mxu0
    %v327 = vadd.f32 0.0, %v326
    %328 = vdwg.mxu0
    %v330 = vperm.slane %v87, 0
    %v332 = vadd.f32 %v330, 0.0
    %336 = vrot.lane.b32.xlu0 %v321, 96
    %v337 = vpop.permute.xlu0 %336
    %338 = vrot.lane.b32.xlu0 %v324, 96
    %v339 = vpop.permute.xlu0 %338
    %340 = vrot.lane.b32.xlu0 %v327, 96
    %v341 = vpop.permute.xlu0 %340
    %vm342 = vcmask 64512
    %v343 = vsel %vm342, %v321, 0
    %v345 = vsel %vm342, %v324, 0
    %v347 = vsel %vm342, %v327, 0
    %v349 = vsel %vm342, %v337, 0
    %v351 = vsel %vm342, %v339, 0
    %v353 = vsel %vm342, %v341, 0
    %355 = vmatpush.xpose.msra.mxu0 0.0
    %356 = vmatpush.xpose.msra.mxu0 0.0
    %357 = vmatpush.xpose.msra.mxu0 0.0
    %358 = vmatpush.xpose.msra.mxu0 0.0
    %359 = vmatpush.xpose.msra.mxu0 0.0
    %360 = vmatpush.xpose.msra.mxu0 0.0
    %361 = vmatpush.xpose.msra.mxu0 0.0
    %362 = vmatpush.xpose.msra.mxu0 0.0
    %363 = vmatpush.xpose.msra.mxu0 0.0
    %364 = vmatpush.xpose.msra.mxu0 0.0
    %365 = vmatpush.xpose.msra.mxu0 0.0
    %366 = vmatpush.xpose.msra.mxu0 0.0
    %367 = vmatpush.xpose.msra.mxu0 0.0
    %368 = vmatpush.xpose.msra.mxu0 %v353
    %369 = vmatpush.xpose.msra.mxu0 %v351
    %370 = vmatpush.xpose.msra.mxu0 %v349
    %371 = vmatmul.f32.gmra.mxu0 %v343
    %v372 = vpop.f32.mrf.mxu0
    %v373 = vadd.f32 0.0, %v372
    %374 = vmatmul.f32.gmra.mxu0 %v345
    %v375 = vpop.f32.mrf.mxu0
    %v376 = vadd.f32 0.0, %v375
    %377 = vmatmul.f32.gmra.mxu0 %v347
    %v378 = vpop.f32.mrf.mxu0
    %v379 = vadd.f32 0.0, %v378
    %380 = vdwg.mxu0
    %v381 = vmul.f32 %v373, 0.35355338
    %v382 = vmul.f32 %v376, 0.35355338
    %v383 = vmul.f32 %v379, 0.35355338
    %vm384 = vcmask 138240
    %v385 = vsel %vm384, %v381, -inf
    %386 = vmax.xlane.f32.xlu0 %v385
    %v387 = vpop.xlane.xlu0 %386
    %v388 = vsel %vm384, %v382, -inf
    %389 = vmax.xlane.f32.xlu0 %v388
    %v390 = vpop.xlane.xlu0 %389
    %vm391 = vcmask 131072
    %v392 = vsel %vm391, %v383, -inf
    %393 = vmax.xlane.f32.xlu0 %v392
    %v394 = vpop.xlane.xlu0 %393
    %v395 = vsub.f32 %v381, %v387
    %v396 = vsub.f32 %v382, %v390
    %v397 = vsub.f32 %v383, %v394
    %v398 = vmul.f32 %v395, 1.442695
    %v399 = vpow.pop %v398
    %v400 = vmul.f32 %v396, 1.442695
    %v401 = vpow.pop %v400
    %v402 = vmul.f32 %v397, 1.442695
    %v403 = vpow.pop %v402
    %v404 = vsel %vm384, %v399, 0.0
    %405 = vadd.xlane.f32.xlu0 %v404
    %v406 = vpop.xlane.xlu0 %405
    %v407 = vsel %vm384, %v401, 0.0
    %408 = vadd.xlane.f32.xlu0 %v407
    %v409 = vpop.xlane.xlu0 %408
    %v410 = vsel %vm391, %v403, 0.0
    %411 = vadd.xlane.f32.xlu0 %v410
    %v412 = vpop.xlane.xlu0 %411
    %v413 = vrcp.pop %v406
    %v414 = vrcp.pop %v409
    %v415 = vrcp.pop %v412
    %v416 = vmul.f32 %v399, %v413
    %v417 = vmul.f32 %v401, %v414
    %v418 = vmul.f32 %v403, %v415
    %419 = vrot.lane.b32.xlu0 %v321, 64
    %v420 = vpop.permute.xlu0 %419
    %421 = vrot.lane.b32.xlu0 %v324, 64
    %v422 = vpop.permute.xlu0 %421
    %423 = vrot.lane.b32.xlu0 %v327, 64
    %v424 = vpop.permute.xlu0 %423
    %v428 = vsel %vm384, %v416, 0
    %v431 = vsel %vm384, %v417, 0
    %v434 = vsel %vm384, %v418, 0
    %vm436 = vcmask 1040384
    %v437 = vsel %vm436, %v424, 0
    %439 = vmatpush.msra.mxu0 0.0
    %440 = vmatpush.msra.mxu0 0.0
    %441 = vmatpush.msra.mxu0 0.0
    %442 = vmatpush.msra.mxu0 0.0
    %443 = vmatpush.msra.mxu0 0.0
    %444 = vmatpush.msra.mxu0 0.0
    %445 = vmatpush.msra.mxu0 0.0
    %446 = vmatpush.msra.mxu0 0.0
    %447 = vmatpush.msra.mxu0 0.0
    %448 = vmatpush.msra.mxu0 0.0
    %449 = vmatpush.msra.mxu0 0.0
    %450 = vmatpush.msra.mxu0 0.0
    %451 = vmatpush.msra.mxu0 0.0
    %452 = vmatpush.msra.mxu0 %v437
    %453 = vmatpush.msra.mxu0 %v422
    %454 = vmatpush.msra.mxu0 %v420
    %455 = vmatmul.f32.gmra.mxu0 %v428
    %v456 = vpop.f32.mrf.mxu0
    %v457 = vadd.f32 0.0, %v456
    %458 = vmatmul.f32.gmra.mxu0 %v431
    %v459 = vpop.f32.mrf.mxu0
    %v460 = vadd.f32 0.0, %v459
    %461 = vmatmul.f32.gmra.mxu0 %v434
    %v462 = vpop.f32.mrf.mxu0
    %v463 = vadd.f32 0.0, %v462
    %464 = vdwg.mxu0
    %v466 = vsel %vm342, %v457, 0
    %v469 = vsel %vm342, %v460, 0
    %v472 = vsel %vm342, %v463, 0
    %474 = vmatpush.msra.mxu0 0.0
    %475 = vmatpush.msra.mxu0 0.0
    %476 = vmatpush.msra.mxu0 0.0
    %477 = vmatpush.msra.mxu0 0.0
    %478 = vmatpush.msra.mxu0 0.0
    %479 = vmatpush.msra.mxu0 0.0
    %480 = vmatpush.msra.mxu0 0.0
    %481 = vmatpush.msra.mxu0 0.0
    %482 = vmatpush.msra.mxu0 0.0
    %483 = vmatpush.msra.mxu0 0.0
    %484 = vmatpush.msra.mxu0 0.0
    %485 = vmatpush.msra.mxu0 0.0
    %486 = vmatpush.msra.mxu0 0.0
    %487 = vmatpush.msra.mxu0 0.0
    %488 = vmatpush.msra.mxu0 0.0
    %489 = vmatpush.msra.mxu0 %v83
    %490 = vmatmul.f32.gmra.mxu0 %v466
    %v491 = vpop.f32.mrf.mxu0
    %v492 = vadd.f32 0.0, %v491
    %493 = vmatmul.f32.gmra.mxu0 %v469
    %v494 = vpop.f32.mrf.mxu0
    %v495 = vadd.f32 0.0, %v494
    %496 = vmatmul.f32.gmra.mxu0 %v472
    %v497 = vpop.f32.mrf.mxu0
    %v498 = vadd.f32 0.0, %v497
    %499 = vdwg.mxu0
    %v500 = vadd.f32 %v332, %v492
    %v501 = vadd.f32 %v332, %v495
    %v502 = vadd.f32 %v332, %v498
    %503 = vrot.lane.b32.xlu0 %v321, 120
    %v504 = vpop.permute.xlu0 %503
    %505 = vrot.lane.b32.xlu0 %v324, 120
    %v506 = vpop.permute.xlu0 %505
    %507 = vrot.lane.b32.xlu0 %v327, 120
    %v508 = vpop.permute.xlu0 %507
    %509 = vrot.lane.b32.xlu0 %v321, 88
    %v510 = vpop.permute.xlu0 %509
    %511 = vrot.lane.b32.xlu0 %v324, 88
    %v512 = vpop.permute.xlu0 %511
    %513 = vrot.lane.b32.xlu0 %v327, 88
    %v514 = vpop.permute.xlu0 %513
    %v515 = vsel %vm342, %v504, 0
    %v517 = vsel %vm342, %v506, 0
    %v519 = vsel %vm342, %v508, 0
    %v521 = vsel %vm342, %v510, 0
    %v523 = vsel %vm342, %v512, 0
    %v525 = vsel %vm342, %v514, 0
    %527 = vmatpush.xpose.msra.mxu0 0.0
    %528 = vmatpush.xpose.msra.mxu0 0.0
    %529 = vmatpush.xpose.msra.mxu0 0.0
    %530 = vmatpush.xpose.msra.mxu0 0.0
    %531 = vmatpush.xpose.msra.mxu0 0.0
    %532 = vmatpush.xpose.msra.mxu0 0.0
    %533 = vmatpush.xpose.msra.mxu0 0.0
    %534 = vmatpush.xpose.msra.mxu0 0.0
    %535 = vmatpush.xpose.msra.mxu0 0.0
    %536 = vmatpush.xpose.msra.mxu0 0.0
    %537 = vmatpush.xpose.msra.mxu0 0.0
    %538 = vmatpush.xpose.msra.mxu0 0.0
    %539 = vmatpush.xpose.msra.mxu0 0.0
    %540 = vmatpush.xpose.msra.mxu0 %v525
    %541 = vmatpush.xpose.msra.mxu0 %v523
    %542 = vmatpush.xpose.msra.mxu0 %v521
    %543 = vmatmul.f32.gmra.mxu0 %v515
    %v544 = vpop.f32.mrf.mxu0
    %v545 = vadd.f32 0.0, %v544
    %546 = vmatmul.f32.gmra.mxu0 %v517
    %v547 = vpop.f32.mrf.mxu0
    %v548 = vadd.f32 0.0, %v547
    %549 = vmatmul.f32.gmra.mxu0 %v519
    %v550 = vpop.f32.mrf.mxu0
    %v551 = vadd.f32 0.0, %v550
    %552 = vdwg.mxu0
    %v553 = vmul.f32 %v545, 0.35355338
    %v554 = vmul.f32 %v548, 0.35355338
    %v555 = vmul.f32 %v551, 0.35355338
    %v556 = vsel %vm384, %v553, -inf
    %557 = vmax.xlane.f32.xlu0 %v556
    %v558 = vpop.xlane.xlu0 %557
    %v559 = vsel %vm384, %v554, -inf
    %560 = vmax.xlane.f32.xlu0 %v559
    %v561 = vpop.xlane.xlu0 %560
    %v562 = vsel %vm391, %v555, -inf
    %563 = vmax.xlane.f32.xlu0 %v562
    %v564 = vpop.xlane.xlu0 %563
    %v565 = vsub.f32 %v553, %v558
    %v566 = vsub.f32 %v554, %v561
    %v567 = vsub.f32 %v555, %v564
    %v568 = vmul.f32 %v565, 1.442695
    %v569 = vpow.pop %v568
    %v570 = vmul.f32 %v566, 1.442695
    %v571 = vpow.pop %v570
    %v572 = vmul.f32 %v567, 1.442695
    %v573 = vpow.pop %v572
    %v574 = vsel %vm384, %v569, 0.0
    %575 = vadd.xlane.f32.xlu0 %v574
    %v576 = vpop.xlane.xlu0 %575
    %v577 = vsel %vm384, %v571, 0.0
    %578 = vadd.xlane.f32.xlu0 %v577
    %v579 = vpop.xlane.xlu0 %578
    %v580 = vsel %vm391, %v573, 0.0
    %581 = vadd.xlane.f32.xlu0 %v580
    %v582 = vpop.xlane.xlu0 %581
    %v583 = vrcp.pop %v576
    %v584 = vrcp.pop %v579
    %v585 = vrcp.pop %v582
    %v586 = vmul.f32 %v569, %v583
    %v587 = vmul.f32 %v571, %v584
    %v588 = vmul.f32 %v573, %v585
    %589 = vrot.lane.b32.xlu0 %v321, 56
    %v590 = vpop.permute.xlu0 %589
    %591 = vrot.lane.b32.xlu0 %v324, 56
    %v592 = vpop.permute.xlu0 %591
    %593 = vrot.lane.b32.xlu0 %v327, 56
    %v594 = vpop.permute.xlu0 %593
    %v598 = vsel %vm384, %v586, 0
    %v601 = vsel %vm384, %v587, 0
    %v604 = vsel %vm384, %v588, 0
    %v606 = vsel %vm436, %v594, 0
    %608 = vmatpush.msra.mxu0 0.0
    %609 = vmatpush.msra.mxu0 0.0
    %610 = vmatpush.msra.mxu0 0.0
    %611 = vmatpush.msra.mxu0 0.0
    %612 = vmatpush.msra.mxu0 0.0
    %613 = vmatpush.msra.mxu0 0.0
    %614 = vmatpush.msra.mxu0 0.0
    %615 = vmatpush.msra.mxu0 0.0
    %616 = vmatpush.msra.mxu0 0.0
    %617 = vmatpush.msra.mxu0 0.0
    %618 = vmatpush.msra.mxu0 0.0
    %619 = vmatpush.msra.mxu0 0.0
    %620 = vmatpush.msra.mxu0 0.0
    %621 = vmatpush.msra.mxu0 %v606
    %622 = vmatpush.msra.mxu0 %v592
    %623 = vmatpush.msra.mxu0 %v590
    %624 = vmatmul.f32.gmra.mxu0 %v598
    %v625 = vpop.f32.mrf.mxu0
    %v626 = vadd.f32 0.0, %v625
    %627 = vmatmul.f32.gmra.mxu0 %v601
    %v628 = vpop.f32.mrf.mxu0
    %v629 = vadd.f32 0.0, %v628
    %630 = vmatmul.f32.gmra.mxu0 %v604
    %v631 = vpop.f32.mrf.mxu0
    %v632 = vadd.f32 0.0, %v631
    %633 = vdwg.mxu0
    %v635 = vsel %vm342, %v626, 0
    %v638 = vsel %vm342, %v629, 0
    %v641 = vsel %vm342, %v632, 0
    %643 = vmatpush.msra.mxu0 0.0
    %644 = vmatpush.msra.mxu0 0.0
    %645 = vmatpush.msra.mxu0 0.0
    %646 = vmatpush.msra.mxu0 0.0
    %647 = vmatpush.msra.mxu0 0.0
    %648 = vmatpush.msra.mxu0 0.0
    %649 = vmatpush.msra.mxu0 0.0
    %650 = vmatpush.msra.mxu0 0.0
    %651 = vmatpush.msra.mxu0 0.0
    %652 = vmatpush.msra.mxu0 0.0
    %653 = vmatpush.msra.mxu0 0.0
    %654 = vmatpush.msra.mxu0 0.0
    %655 = vmatpush.msra.mxu0 0.0
    %656 = vmatpush.msra.mxu0 0.0
    %657 = vmatpush.msra.mxu0 0.0
    %658 = vmatpush.msra.mxu0 %v84
    %659 = vmatmul.f32.gmra.mxu0 %v635
    %v660 = vpop.f32.mrf.mxu0
    %v661 = vadd.f32 0.0, %v660
    %662 = vmatmul.f32.gmra.mxu0 %v638
    %v663 = vpop.f32.mrf.mxu0
    %v664 = vadd.f32 0.0, %v663
    %665 = vmatmul.f32.gmra.mxu0 %v641
    %v666 = vpop.f32.mrf.mxu0
    %v667 = vadd.f32 0.0, %v666
    %668 = vdwg.mxu0
    %v669 = vadd.f32 %v500, %v661
    %v670 = vadd.f32 %v501, %v664
    %v671 = vadd.f32 %v502, %v667
    %672 = vrot.lane.b32.xlu0 %v321, 112
    %v673 = vpop.permute.xlu0 %672
    %674 = vrot.lane.b32.xlu0 %v324, 112
    %v675 = vpop.permute.xlu0 %674
    %676 = vrot.lane.b32.xlu0 %v327, 112
    %v677 = vpop.permute.xlu0 %676
    %678 = vrot.lane.b32.xlu0 %v321, 80
    %v679 = vpop.permute.xlu0 %678
    %680 = vrot.lane.b32.xlu0 %v324, 80
    %v681 = vpop.permute.xlu0 %680
    %682 = vrot.lane.b32.xlu0 %v327, 80
    %v683 = vpop.permute.xlu0 %682
    %v684 = vsel %vm342, %v673, 0
    %v686 = vsel %vm342, %v675, 0
    %v688 = vsel %vm342, %v677, 0
    %v690 = vsel %vm342, %v679, 0
    %v692 = vsel %vm342, %v681, 0
    %v694 = vsel %vm342, %v683, 0
    %696 = vmatpush.xpose.msra.mxu0 0.0
    %697 = vmatpush.xpose.msra.mxu0 0.0
    %698 = vmatpush.xpose.msra.mxu0 0.0
    %699 = vmatpush.xpose.msra.mxu0 0.0
    %700 = vmatpush.xpose.msra.mxu0 0.0
    %701 = vmatpush.xpose.msra.mxu0 0.0
    %702 = vmatpush.xpose.msra.mxu0 0.0
    %703 = vmatpush.xpose.msra.mxu0 0.0
    %704 = vmatpush.xpose.msra.mxu0 0.0
    %705 = vmatpush.xpose.msra.mxu0 0.0
    %706 = vmatpush.xpose.msra.mxu0 0.0
    %707 = vmatpush.xpose.msra.mxu0 0.0
    %708 = vmatpush.xpose.msra.mxu0 0.0
    %709 = vmatpush.xpose.msra.mxu0 %v694
    %710 = vmatpush.xpose.msra.mxu0 %v692
    %711 = vmatpush.xpose.msra.mxu0 %v690
    %712 = vmatmul.f32.gmra.mxu0 %v684
    %v713 = vpop.f32.mrf.mxu0
    %v714 = vadd.f32 0.0, %v713
    %715 = vmatmul.f32.gmra.mxu0 %v686
    %v716 = vpop.f32.mrf.mxu0
    %v717 = vadd.f32 0.0, %v716
    %718 = vmatmul.f32.gmra.mxu0 %v688
    %v719 = vpop.f32.mrf.mxu0
    %v720 = vadd.f32 0.0, %v719
    %721 = vdwg.mxu0
    %v722 = vmul.f32 %v714, 0.35355338
    %v723 = vmul.f32 %v717, 0.35355338
    %v724 = vmul.f32 %v720, 0.35355338
    %v725 = vsel %vm384, %v722, -inf
    %726 = vmax.xlane.f32.xlu0 %v725
    %v727 = vpop.xlane.xlu0 %726
    %v728 = vsel %vm384, %v723, -inf
    %729 = vmax.xlane.f32.xlu0 %v728
    %v730 = vpop.xlane.xlu0 %729
    %v731 = vsel %vm391, %v724, -inf
    %732 = vmax.xlane.f32.xlu0 %v731
    %v733 = vpop.xlane.xlu0 %732
    %v734 = vsub.f32 %v722, %v727
    %v735 = vsub.f32 %v723, %v730
    %v736 = vsub.f32 %v724, %v733
    %v737 = vmul.f32 %v734, 1.442695
    %v738 = vpow.pop %v737
    %v739 = vmul.f32 %v735, 1.442695
    %v740 = vpow.pop %v739
    %v741 = vmul.f32 %v736, 1.442695
    %v742 = vpow.pop %v741
    %v743 = vsel %vm384, %v738, 0.0
    %744 = vadd.xlane.f32.xlu0 %v743
    %v745 = vpop.xlane.xlu0 %744
    %v746 = vsel %vm384, %v740, 0.0
    %747 = vadd.xlane.f32.xlu0 %v746
    %v748 = vpop.xlane.xlu0 %747
    %v749 = vsel %vm391, %v742, 0.0
    %750 = vadd.xlane.f32.xlu0 %v749
    %v751 = vpop.xlane.xlu0 %750
    %v752 = vrcp.pop %v745
    %v753 = vrcp.pop %v748
    %v754 = vrcp.pop %v751
    %v755 = vmul.f32 %v738, %v752
    %v756 = vmul.f32 %v740, %v753
    %v757 = vmul.f32 %v742, %v754
    %758 = vrot.lane.b32.xlu0 %v321, 48
    %v759 = vpop.permute.xlu0 %758
    %760 = vrot.lane.b32.xlu0 %v324, 48
    %v761 = vpop.permute.xlu0 %760
    %762 = vrot.lane.b32.xlu0 %v327, 48
    %v763 = vpop.permute.xlu0 %762
    %v767 = vsel %vm384, %v755, 0
    %v770 = vsel %vm384, %v756, 0
    %v773 = vsel %vm384, %v757, 0
    %v775 = vsel %vm436, %v763, 0
    %777 = vmatpush.msra.mxu0 0.0
    %778 = vmatpush.msra.mxu0 0.0
    %779 = vmatpush.msra.mxu0 0.0
    %780 = vmatpush.msra.mxu0 0.0
    %781 = vmatpush.msra.mxu0 0.0
    %782 = vmatpush.msra.mxu0 0.0
    %783 = vmatpush.msra.mxu0 0.0
    %784 = vmatpush.msra.mxu0 0.0
    %785 = vmatpush.msra.mxu0 0.0
    %786 = vmatpush.msra.mxu0 0.0
    %787 = vmatpush.msra.mxu0 0.0
    %788 = vmatpush.msra.mxu0 0.0
    %789 = vmatpush.msra.mxu0 0.0
    %790 = vmatpush.msra.mxu0 %v775
    %791 = vmatpush.msra.mxu0 %v761
    %792 = vmatpush.msra.mxu0 %v759
    %793 = vmatmul.f32.gmra.mxu0 %v767
    %v794 = vpop.f32.mrf.mxu0
    %v795 = vadd.f32 0.0, %v794
    %796 = vmatmul.f32.gmra.mxu0 %v770
    %v797 = vpop.f32.mrf.mxu0
    %v798 = vadd.f32 0.0, %v797
    %799 = vmatmul.f32.gmra.mxu0 %v773
    %v800 = vpop.f32.mrf.mxu0
    %v801 = vadd.f32 0.0, %v800
    %802 = vdwg.mxu0
    %v804 = vsel %vm342, %v795, 0
    %v807 = vsel %vm342, %v798, 0
    %v810 = vsel %vm342, %v801, 0
    %812 = vmatpush.msra.mxu0 0.0
    %813 = vmatpush.msra.mxu0 0.0
    %814 = vmatpush.msra.mxu0 0.0
    %815 = vmatpush.msra.mxu0 0.0
    %816 = vmatpush.msra.mxu0 0.0
    %817 = vmatpush.msra.mxu0 0.0
    %818 = vmatpush.msra.mxu0 0.0
    %819 = vmatpush.msra.mxu0 0.0
    %820 = vmatpush.msra.mxu0 0.0
    %821 = vmatpush.msra.mxu0 0.0
    %822 = vmatpush.msra.mxu0 0.0
    %823 = vmatpush.msra.mxu0 0.0
    %824 = vmatpush.msra.mxu0 0.0
    %825 = vmatpush.msra.mxu0 0.0
    %826 = vmatpush.msra.mxu0 0.0
    %827 = vmatpush.msra.mxu0 %v85
    %828 = vmatmul.f32.gmra.mxu0 %v804
    %v829 = vpop.f32.mrf.mxu0
    %v830 = vadd.f32 0.0, %v829
    %831 = vmatmul.f32.gmra.mxu0 %v807
    %v832 = vpop.f32.mrf.mxu0
    %v833 = vadd.f32 0.0, %v832
    %834 = vmatmul.f32.gmra.mxu0 %v810
    %v835 = vpop.f32.mrf.mxu0
    %v836 = vadd.f32 0.0, %v835
    %837 = vdwg.mxu0
    %v838 = vadd.f32 %v669, %v830
    %v839 = vadd.f32 %v670, %v833
    %v840 = vadd.f32 %v671, %v836
    %841 = vrot.lane.b32.xlu0 %v321, 104
    %v842 = vpop.permute.xlu0 %841
    %843 = vrot.lane.b32.xlu0 %v324, 104
    %v844 = vpop.permute.xlu0 %843
    %845 = vrot.lane.b32.xlu0 %v327, 104
    %v846 = vpop.permute.xlu0 %845
    %847 = vrot.lane.b32.xlu0 %v321, 72
    %v848 = vpop.permute.xlu0 %847
    %849 = vrot.lane.b32.xlu0 %v324, 72
    %v850 = vpop.permute.xlu0 %849
    %851 = vrot.lane.b32.xlu0 %v327, 72
    %v852 = vpop.permute.xlu0 %851
    %v853 = vsel %vm342, %v842, 0
    %v855 = vsel %vm342, %v844, 0
    %v857 = vsel %vm342, %v846, 0
    %v859 = vsel %vm342, %v848, 0
    %v861 = vsel %vm342, %v850, 0
    %v863 = vsel %vm342, %v852, 0
    %865 = vmatpush.xpose.msra.mxu0 0.0
    %866 = vmatpush.xpose.msra.mxu0 0.0
    %867 = vmatpush.xpose.msra.mxu0 0.0
    %868 = vmatpush.xpose.msra.mxu0 0.0
    %869 = vmatpush.xpose.msra.mxu0 0.0
    %870 = vmatpush.xpose.msra.mxu0 0.0
    %871 = vmatpush.xpose.msra.mxu0 0.0
    %872 = vmatpush.xpose.msra.mxu0 0.0
    %873 = vmatpush.xpose.msra.mxu0 0.0
    %874 = vmatpush.xpose.msra.mxu0 0.0
    %875 = vmatpush.xpose.msra.mxu0 0.0
    %876 = vmatpush.xpose.msra.mxu0 0.0
    %877 = vmatpush.xpose.msra.mxu0 0.0
    %878 = vmatpush.xpose.msra.mxu0 %v863
    %879 = vmatpush.xpose.msra.mxu0 %v861
    %880 = vmatpush.xpose.msra.mxu0 %v859
    %881 = vmatmul.f32.gmra.mxu0 %v853
    %v882 = vpop.f32.mrf.mxu0
    %v883 = vadd.f32 0.0, %v882
    %884 = vmatmul.f32.gmra.mxu0 %v855
    %v885 = vpop.f32.mrf.mxu0
    %v886 = vadd.f32 0.0, %v885
    %887 = vmatmul.f32.gmra.mxu0 %v857
    %v888 = vpop.f32.mrf.mxu0
    %v889 = vadd.f32 0.0, %v888
    %890 = vdwg.mxu0
    %v891 = vmul.f32 %v883, 0.35355338
    %v892 = vmul.f32 %v886, 0.35355338
    %v893 = vmul.f32 %v889, 0.35355338
    %v894 = vsel %vm384, %v891, -inf
    %895 = vmax.xlane.f32.xlu0 %v894
    %v896 = vpop.xlane.xlu0 %895
    %v897 = vsel %vm384, %v892, -inf
    %898 = vmax.xlane.f32.xlu0 %v897
    %v899 = vpop.xlane.xlu0 %898
    %v900 = vsel %vm391, %v893, -inf
    %901 = vmax.xlane.f32.xlu0 %v900
    %v902 = vpop.xlane.xlu0 %901
    %v903 = vsub.f32 %v891, %v896
    %v904 = vsub.f32 %v892, %v899
    %v905 = vsub.f32 %v893, %v902
    %v906 = vmul.f32 %v903, 1.442695
    %v907 = vpow.pop %v906
    %v908 = vmul.f32 %v904, 1.442695
    %v909 = vpow.pop %v908
    %v910 = vmul.f32 %v905, 1.442695
    %v911 = vpow.pop %v910
    %v912 = vsel %vm384, %v907, 0.0
    %913 = vadd.xlane.f32.xlu0 %v912
    %v914 = vpop.xlane.xlu0 %913
    %v915 = vsel %vm384, %v909, 0.0
    %916 = vadd.xlane.f32.xlu0 %v915
    %v917 = vpop.xlane.xlu0 %916
    %v918 = vsel %vm391, %v911, 0.0
    %919 = vadd.xlane.f32.xlu0 %v918
    %v920 = vpop.xlane.xlu0 %919
    %v921 = vrcp.pop %v914
    %v922 = vrcp.pop %v917
    %v923 = vrcp.pop %v920
    %v924 = vmul.f32 %v907, %v921
    %v925 = vmul.f32 %v909, %v922
    %v926 = vmul.f32 %v911, %v923
    %927 = vrot.lane.b32.xlu0 %v321, 40
    %v928 = vpop.permute.xlu0 %927
    %929 = vrot.lane.b32.xlu0 %v324, 40
    %v930 = vpop.permute.xlu0 %929
    %931 = vrot.lane.b32.xlu0 %v327, 40
    %v932 = vpop.permute.xlu0 %931
    %v936 = vsel %vm384, %v924, 0
    %v939 = vsel %vm384, %v925, 0
    %v942 = vsel %vm384, %v926, 0
    %v944 = vsel %vm436, %v932, 0
    %946 = vmatpush.msra.mxu0 0.0
    %947 = vmatpush.msra.mxu0 0.0
    %948 = vmatpush.msra.mxu0 0.0
    %949 = vmatpush.msra.mxu0 0.0
    %950 = vmatpush.msra.mxu0 0.0
    %951 = vmatpush.msra.mxu0 0.0
    %952 = vmatpush.msra.mxu0 0.0
    %953 = vmatpush.msra.mxu0 0.0
    %954 = vmatpush.msra.mxu0 0.0
    %955 = vmatpush.msra.mxu0 0.0
    %956 = vmatpush.msra.mxu0 0.0
    %957 = vmatpush.msra.mxu0 0.0
    %958 = vmatpush.msra.mxu0 0.0
    %959 = vmatpush.msra.mxu0 %v944
    %960 = vmatpush.msra.mxu0 %v930
    %961 = vmatpush.msra.mxu0 %v928
    %962 = vmatmul.f32.gmra.mxu0 %v936
    %v963 = vpop.f32.mrf.mxu0
    %v964 = vadd.f32 0.0, %v963
    %965 = vmatmul.f32.gmra.mxu0 %v939
    %v966 = vpop.f32.mrf.mxu0
    %v967 = vadd.f32 0.0, %v966
    %968 = vmatmul.f32.gmra.mxu0 %v942
    %v969 = vpop.f32.mrf.mxu0
    %v970 = vadd.f32 0.0, %v969
    %971 = vdwg.mxu0
    %v973 = vsel %vm342, %v964, 0
    %v976 = vsel %vm342, %v967, 0
    %v979 = vsel %vm342, %v970, 0
    %981 = vmatpush.msra.mxu0 0.0
    %982 = vmatpush.msra.mxu0 0.0
    %983 = vmatpush.msra.mxu0 0.0
    %984 = vmatpush.msra.mxu0 0.0
    %985 = vmatpush.msra.mxu0 0.0
    %986 = vmatpush.msra.mxu0 0.0
    %987 = vmatpush.msra.mxu0 0.0
    %988 = vmatpush.msra.mxu0 0.0
    %989 = vmatpush.msra.mxu0 0.0
    %990 = vmatpush.msra.mxu0 0.0
    %991 = vmatpush.msra.mxu0 0.0
    %992 = vmatpush.msra.mxu0 0.0
    %993 = vmatpush.msra.mxu0 0.0
    %994 = vmatpush.msra.mxu0 0.0
    %995 = vmatpush.msra.mxu0 0.0
    %996 = vmatpush.msra.mxu0 %v86
    %997 = vmatmul.f32.gmra.mxu0 %v973
    %v998 = vpop.f32.mrf.mxu0
    %v999 = vadd.f32 0.0, %v998
    %1000 = vmatmul.f32.gmra.mxu0 %v976
    %v1001 = vpop.f32.mrf.mxu0
    %v1002 = vadd.f32 0.0, %v1001
    %1003 = vmatmul.f32.gmra.mxu0 %v979
    %v1004 = vpop.f32.mrf.mxu0
    %v1005 = vadd.f32 0.0, %v1004
    %1006 = vdwg.mxu0
    %v1007 = vadd.f32 %v838, %v999
    %v1008 = vadd.f32 %v839, %v1002
    %v1009 = vadd.f32 %v840, %v1005
    %v1010 = vadd.f32 %v204, %v1007
    %v1011 = vadd.f32 %v205, %v1008
    %v1012 = vadd.f32 %v206, %v1009
    %v1013 = vsel %vm207, %v1010, 0.0
    %1014 = vadd.xlane.f32.xlu0 %v1013
    %v1015 = vpop.xlane.xlu0 %1014
    %v1016 = vsel %vm207, %v1011, 0.0
    %1017 = vadd.xlane.f32.xlu0 %v1016
    %v1018 = vpop.xlane.xlu0 %1017
    %v1019 = vsel %vm214, %v1012, 0.0
    %1020 = vadd.xlane.f32.xlu0 %v1019
    %v1021 = vpop.xlane.xlu0 %1020
    %v1022 = vmul.f32 %v1015, %v224
    %v1023 = vmul.f32 %v1018, %v224
    %v1024 = vmul.f32 %v1021, %v224
    %v1025 = vsub.f32 %v1010, %v1022
    %v1026 = vsub.f32 %v1011, %v1023
    %v1027 = vsub.f32 %v1012, %v1024
    %v1028 = vmul.f32 %v1025, %v1025
    %v1029 = vmul.f32 %v1026, %v1026
    %v1030 = vmul.f32 %v1027, %v1027
    %v1031 = vsel %vm207, %v1028, 0.0
    %1032 = vadd.xlane.f32.xlu0 %v1031
    %v1033 = vpop.xlane.xlu0 %1032
    %v1034 = vsel %vm207, %v1029, 0.0
    %1035 = vadd.xlane.f32.xlu0 %v1034
    %v1036 = vpop.xlane.xlu0 %1035
    %v1037 = vsel %vm214, %v1030, 0.0
    %1038 = vadd.xlane.f32.xlu0 %v1037
    %v1039 = vpop.xlane.xlu0 %1038
    %v1040 = vmul.f32 %v1033, %v224
    %v1041 = vmul.f32 %v1036, %v224
    %v1042 = vmul.f32 %v1039, %v224
    %v1043 = vadd.f32 %v1040, 1e-05
    %v1044 = vadd.f32 %v1041, 1e-05
    %v1045 = vadd.f32 %v1042, 1e-05
    %v1046 = vrsqrt.pop %v1043
    %v1047 = vmul.f32 %v1046, %v1043
    %v1048 = vmul.f32 %v1047, %v1046
    %v1049 = vmul.f32 0.5, %v1048
    %v1050 = vsub.f32 1.5, %v1049
    %v1051 = vmul.f32 %v1046, %v1050
    %vm1052 = vweird.f32 %v1043
    %vm1053 = vweird.f32 %v1046
    %vm1054 = vmor %vm1052, %vm1053
    %v1055 = vsel %vm1054, %v1046, %v1051
    %v1056 = vrsqrt.pop %v1044
    %v1057 = vmul.f32 %v1056, %v1044
    %v1058 = vmul.f32 %v1057, %v1056
    %v1059 = vmul.f32 0.5, %v1058
    %v1060 = vsub.f32 1.5, %v1059
    %v1061 = vmul.f32 %v1056, %v1060
    %vm1062 = vweird.f32 %v1044
    %vm1063 = vweird.f32 %v1056
    %vm1064 = vmor %vm1062, %vm1063
    %v1065 = vsel %vm1064, %v1056, %v1061
    %v1066 = vrsqrt.pop %v1045
    %v1067 = vmul.f32 %v1066, %v1045
    %v1068 = vmul.f32 %v1067, %v1066
    %v1069 = vmul.f32 0.5, %v1068
    %v1070 = vsub.f32 1.5, %v1069
    %v1071 = vmul.f32 %v1066, %v1070
    %vm1072 = vweird.f32 %v1045
    %vm1073 = vweird.f32 %v1066
    %vm1074 = vmor %vm1072, %vm1073
    %v1075 = vsel %vm1074, %v1066, %v1071
    %v1076 = vmul.f32 %v1025, %v1055
    %v1077 = vmul.f32 %v1026, %v1065
    %v1078 = vmul.f32 %v1027, %v1075
    %v1080 = vperm.slane %v88, 0
    %v1082 = vmul.f32 %v1076, %v1080
    %v1083 = vmul.f32 %v1077, %v1080
    %v1084 = vmul.f32 %v1078, %v1080
    %v1086 = vperm.slane %v89, 0
    %v1088 = vadd.f32 %v1082, %v1086
    %v1089 = vadd.f32 %v1083, %v1086
    %v1090 = vadd.f32 %v1084, %v1086
    %v1092 = vperm.slane %v94, 0
    %v1095 = vsel %vm207, %v1088, 0
    %v1098 = vsel %vm207, %v1089, 0
    %v1101 = vsel %vm207, %v1090, 0
    %1103 = vmatpush.msra.mxu0 0.0
    %1104 = vmatpush.msra.mxu0 0.0
    %1105 = vmatpush.msra.mxu0 0.0
    %1106 = vmatpush.msra.mxu0 0.0
    %1107 = vmatpush.msra.mxu0 0.0
    %1108 = vmatpush.msra.mxu0 0.0
    %1109 = vmatpush.msra.mxu0 0.0
    %1110 = vmatpush.msra.mxu0 0.0
    %1111 = vmatpush.msra.mxu0 0.0
    %1112 = vmatpush.msra.mxu0 0.0
    %1113 = vmatpush.msra.mxu0 0.0
    %1114 = vmatpush.msra.mxu0 0.0
    %1115 = vmatpush.msra.mxu0 %v93
    %1116 = vmatpush.msra.mxu0 %v92
    %1117 = vmatpush.msra.mxu0 %v91
    %1118 = vmatpush.msra.mxu0 %v90
    %1119 = vmatmul.f32.gmra.mxu0 %v1095
    %v1120 = vpop.f32.mrf.mxu0
    %v1121 = vadd.f32 %v1092, %v1120
    %1122 = vmatmul.f32.gmra.mxu0 %v1098
    %v1123 = vpop.f32.mrf.mxu0
    %v1124 = vadd.f32 %v1092, %v1123
    %1125 = vmatmul.f32.gmra.mxu0 %v1101
    %v1126 = vpop.f32.mrf.mxu0
    %v1127 = vadd.f32 %v1092, %v1126
    %1128 = vdwg.mxu0
    %v1129 = vmul.f32 %v1121, %v1121
    %v1130 = vmul.f32 %v1124, %v1124
    %v1131 = vmul.f32 %v1127, %v1127
    %v1132 = vmul.f32 %v1121, %v1129
    %v1133 = vmul.f32 %v1124, %v1130
    %v1134 = vmul.f32 %v1127, %v1131
    %v1135 = vmul.f32 %v1132, 0.044715
    %v1136 = vmul.f32 %v1133, 0.044715
    %v1137 = vmul.f32 %v1134, 0.044715
    %v1138 = vadd.f32 %v1121, %v1135
    %v1139 = vadd.f32 %v1124, %v1136
    %v1140 = vadd.f32 %v1127, %v1137
    %v1141 = vmul.f32 %v1138, 0.7978846
    %v1142 = vmul.f32 %v1139, 0.7978846
    %v1143 = vmul.f32 %v1140, 0.7978846
    %v1144 = vtanh.pop %v1141
    %v1145 = vtanh.pop %v1142
    %v1146 = vtanh.pop %v1143
    %v1147 = vadd.f32 %v1144, 1.0
    %v1148 = vadd.f32 %v1145, 1.0
    %v1149 = vadd.f32 %v1146, 1.0
    %v1150 = vmul.f32 %v1147, 0.5
    %v1151 = vmul.f32 %v1148, 0.5
    %v1152 = vmul.f32 %v1149, 0.5
    %v1153 = vmul.f32 %v1121, %v1150
    %v1154 = vmul.f32 %v1124, %v1151
    %v1155 = vmul.f32 %v1127, %v1152
    %v1157 = vperm.slane %v103, 0
    %vm1159 = vcmask 523264
    %v1161 = vsel %vm1159, %v1153, 0
    %v1164 = vsel %vm1159, %v1154, 0
    %v1167 = vsel %vm1159, %v1155, 0
    %1169 = vmatpush.msra.mxu0 0.0
    %1170 = vmatpush.msra.mxu0 0.0
    %1171 = vmatpush.msra.mxu0 0.0
    %1172 = vmatpush.msra.mxu0 0.0
    %1173 = vmatpush.msra.mxu0 0.0
    %1174 = vmatpush.msra.mxu0 0.0
    %1175 = vmatpush.msra.mxu0 0.0
    %1176 = vmatpush.msra.mxu0 0.0
    %1177 = vmatpush.msra.mxu0 %v102
    %1178 = vmatpush.msra.mxu0 %v101
    %1179 = vmatpush.msra.mxu0 %v100
    %1180 = vmatpush.msra.mxu0 %v99
    %1181 = vmatpush.msra.mxu0 %v98
    %1182 = vmatpush.msra.mxu0 %v97
    %1183 = vmatpush.msra.mxu0 %v96
    %1184 = vmatpush.msra.mxu0 %v95
    %1185 = vmatmul.f32.gmra.mxu0 %v1161
    %v1186 = vpop.f32.mrf.mxu0
    %v1187 = vadd.f32 %v1157, %v1186
    %1188 = vmatmul.f32.gmra.mxu0 %v1164
    %v1189 = vpop.f32.mrf.mxu0
    %v1190 = vadd.f32 %v1157, %v1189
    %1191 = vmatmul.f32.gmra.mxu0 %v1167
    %v1192 = vpop.f32.mrf.mxu0
    %v1193 = vadd.f32 %v1157, %v1192
    %1194 = vdwg.mxu0
    %v1195 = vadd.f32 %v1010, %v1187
    %v1196 = vadd.f32 %v1011, %v1190
    %v1197 = vadd.f32 %v1012, %v1193
    %v1198 = vsel %vm207, %v1195, 0.0
    %1199 = vadd.xlane.f32.xlu0 %v1198
    %v1200 = vpop.xlane.xlu0 %1199
    %v1201 = vsel %vm207, %v1196, 0.0
    %1202 = vadd.xlane.f32.xlu0 %v1201
    %v1203 = vpop.xlane.xlu0 %1202
    %v1204 = vsel %vm214, %v1197, 0.0
    %1205 = vadd.xlane.f32.xlu0 %v1204
    %v1206 = vpop.xlane.xlu0 %1205
    %v1207 = vmul.f32 %v1200, %v224
    %v1208 = vmul.f32 %v1203, %v224
    %v1209 = vmul.f32 %v1206, %v224
    %v1210 = vsub.f32 %v1195, %v1207
    %v1211 = vsub.f32 %v1196, %v1208
    %v1212 = vsub.f32 %v1197, %v1209
    %v1213 = vmul.f32 %v1210, %v1210
    %v1214 = vmul.f32 %v1211, %v1211
    %v1215 = vmul.f32 %v1212, %v1212
    %v1216 = vsel %vm207, %v1213, 0.0
    %1217 = vadd.xlane.f32.xlu0 %v1216
    %v1218 = vpop.xlane.xlu0 %1217
    %v1219 = vsel %vm207, %v1214, 0.0
    %1220 = vadd.xlane.f32.xlu0 %v1219
    %v1221 = vpop.xlane.xlu0 %1220
    %v1222 = vsel %vm214, %v1215, 0.0
    %1223 = vadd.xlane.f32.xlu0 %v1222
    %v1224 = vpop.xlane.xlu0 %1223
    %v1225 = vmul.f32 %v1218, %v224
    %v1226 = vmul.f32 %v1221, %v224
    %v1227 = vmul.f32 %v1224, %v224
    %v1228 = vadd.f32 %v1225, 1e-05
    %v1229 = vadd.f32 %v1226, 1e-05
    %v1230 = vadd.f32 %v1227, 1e-05
    %v1231 = vrsqrt.pop %v1228
    %v1232 = vmul.f32 %v1231, %v1228
    %v1233 = vmul.f32 %v1232, %v1231
    %v1234 = vmul.f32 0.5, %v1233
    %v1235 = vsub.f32 1.5, %v1234
    %v1236 = vmul.f32 %v1231, %v1235
    %vm1237 = vweird.f32 %v1228
    %vm1238 = vweird.f32 %v1231
    %vm1239 = vmor %vm1237, %vm1238
    %v1240 = vsel %vm1239, %v1231, %v1236
    %v1241 = vrsqrt.pop %v1229
    %v1242 = vmul.f32 %v1241, %v1229
    %v1243 = vmul.f32 %v1242, %v1241
    %v1244 = vmul.f32 0.5, %v1243
    %v1245 = vsub.f32 1.5, %v1244
    %v1246 = vmul.f32 %v1241, %v1245
    %vm1247 = vweird.f32 %v1229
    %vm1248 = vweird.f32 %v1241
    %vm1249 = vmor %vm1247, %vm1248
    %v1250 = vsel %vm1249, %v1241, %v1246
    %v1251 = vrsqrt.pop %v1230
    %v1252 = vmul.f32 %v1251, %v1230
    %v1253 = vmul.f32 %v1252, %v1251
    %v1254 = vmul.f32 0.5, %v1253
    %v1255 = vsub.f32 1.5, %v1254
    %v1256 = vmul.f32 %v1251, %v1255
    %vm1257 = vweird.f32 %v1230
    %vm1258 = vweird.f32 %v1251
    %vm1259 = vmor %vm1257, %vm1258
    %v1260 = vsel %vm1259, %v1251, %v1256
    %v1261 = vmul.f32 %v1210, %v1240
    %v1262 = vmul.f32 %v1211, %v1250
    %v1263 = vmul.f32 %v1212, %v1260
    %v1265 = vperm.slane %v105, 0
    %v1267 = vmul.f32 %v1261, %v1265
    %v1268 = vmul.f32 %v1262, %v1265
    %v1269 = vmul.f32 %v1263, %v1265
    %v1271 = vperm.slane %v107, 0
    %v1273 = vadd.f32 %v1267, %v1271
    %v1274 = vadd.f32 %v1268, %v1271
    %v1275 = vadd.f32 %v1269, %v1271
    %v1277 = vsel %vm207, %v1273, 0
    %v1280 = vsel %vm207, %v1274, 0
    %v1283 = vsel %vm207, %v1275, 0
    %1285 = vmatpush.msra.mxu0 0.0
    %1286 = vmatpush.msra.mxu0 0.0
    %1287 = vmatpush.msra.mxu0 0.0
    %1288 = vmatpush.msra.mxu0 0.0
    %1289 = vmatpush.msra.mxu0 0.0
    %1290 = vmatpush.msra.mxu0 0.0
    %1291 = vmatpush.msra.mxu0 0.0
    %1292 = vmatpush.msra.mxu0 0.0
    %1293 = vmatpush.msra.mxu0 0.0
    %1294 = vmatpush.msra.mxu0 0.0
    %1295 = vmatpush.msra.mxu0 0.0
    %1296 = vmatpush.msra.mxu0 0.0
    %1297 = vmatpush.msra.mxu0 %v112
    %1298 = vmatpush.msra.mxu0 %v111
    %1299 = vmatpush.msra.mxu0 %v110
    %1300 = vmatpush.msra.mxu0 %v109
    %1301 = vmatmul.f32.gmra.mxu0 %v1277
    %v1302 = vpop.f32.mrf.mxu0
    %v1303 = vadd.f32 0.0, %v1302
    %1304 = vmatmul.f32.gmra.mxu0 %v1280
    %v1305 = vpop.f32.mrf.mxu0
    %v1306 = vadd.f32 0.0, %v1305
    %1307 = vmatmul.f32.gmra.mxu0 %v1283
    %v1308 = vpop.f32.mrf.mxu0
    %v1309 = vadd.f32 0.0, %v1308
    %1310 = vdwg.mxu0
    %v1312 = vperm.slane %v119, 0
    %v1314 = vadd.f32 %v1312, 0.0
    %1318 = vrot.lane.b32.xlu0 %v1303, 96
    %v1319 = vpop.permute.xlu0 %1318
    %1320 = vrot.lane.b32.xlu0 %v1306, 96
    %v1321 = vpop.permute.xlu0 %1320
    %1322 = vrot.lane.b32.xlu0 %v1309, 96
    %v1323 = vpop.permute.xlu0 %1322
    %v1324 = vsel %vm342, %v1303, 0
    %v1326 = vsel %vm342, %v1306, 0
    %v1328 = vsel %vm342, %v1309, 0
    %v1330 = vsel %vm342, %v1319, 0
    %v1332 = vsel %vm342, %v1321, 0
    %v1334 = vsel %vm342, %v1323, 0
    %1336 = vmatpush.xpose.msra.mxu0 0.0
    %1337 = vmatpush.xpose.msra.mxu0 0.0
    %1338 = vmatpush.xpose.msra.mxu0 0.0
    %1339 = vmatpush.xpose.msra.mxu0 0.0
    %1340 = vmatpush.xpose.msra.mxu0 0.0
    %1341 = vmatpush.xpose.msra.mxu0 0.0
    %1342 = vmatpush.xpose.msra.mxu0 0.0
    %1343 = vmatpush.xpose.msra.mxu0 0.0
    %1344 = vmatpush.xpose.msra.mxu0 0.0
    %1345 = vmatpush.xpose.msra.mxu0 0.0
    %1346 = vmatpush.xpose.msra.mxu0 0.0
    %1347 = vmatpush.xpose.msra.mxu0 0.0
    %1348 = vmatpush.xpose.msra.mxu0 0.0
    %1349 = vmatpush.xpose.msra.mxu0 %v1334
    %1350 = vmatpush.xpose.msra.mxu0 %v1332
    %1351 = vmatpush.xpose.msra.mxu0 %v1330
    %1352 = vmatmul.f32.gmra.mxu0 %v1324
    %v1353 = vpop.f32.mrf.mxu0
    %v1354 = vadd.f32 0.0, %v1353
    %1355 = vmatmul.f32.gmra.mxu0 %v1326
    %v1356 = vpop.f32.mrf.mxu0
    %v1357 = vadd.f32 0.0, %v1356
    %1358 = vmatmul.f32.gmra.mxu0 %v1328
    %v1359 = vpop.f32.mrf.mxu0
    %v1360 = vadd.f32 0.0, %v1359
    %1361 = vdwg.mxu0
    %v1362 = vmul.f32 %v1354, 0.35355338
    %v1363 = vmul.f32 %v1357, 0.35355338
    %v1364 = vmul.f32 %v1360, 0.35355338
    %v1365 = vsel %vm384, %v1362, -inf
    %1366 = vmax.xlane.f32.xlu0 %v1365
    %v1367 = vpop.xlane.xlu0 %1366
    %v1368 = vsel %vm384, %v1363, -inf
    %1369 = vmax.xlane.f32.xlu0 %v1368
    %v1370 = vpop.xlane.xlu0 %1369
    %v1371 = vsel %vm391, %v1364, -inf
    %1372 = vmax.xlane.f32.xlu0 %v1371
    %v1373 = vpop.xlane.xlu0 %1372
    %v1374 = vsub.f32 %v1362, %v1367
    %v1375 = vsub.f32 %v1363, %v1370
    %v1376 = vsub.f32 %v1364, %v1373
    %v1377 = vmul.f32 %v1374, 1.442695
    %v1378 = vpow.pop %v1377
    %v1379 = vmul.f32 %v1375, 1.442695
    %v1380 = vpow.pop %v1379
    %v1381 = vmul.f32 %v1376, 1.442695
    %v1382 = vpow.pop %v1381
    %v1383 = vsel %vm384, %v1378, 0.0
    %1384 = vadd.xlane.f32.xlu0 %v1383
    %v1385 = vpop.xlane.xlu0 %1384
    %v1386 = vsel %vm384, %v1380, 0.0
    %1387 = vadd.xlane.f32.xlu0 %v1386
    %v1388 = vpop.xlane.xlu0 %1387
    %v1389 = vsel %vm391, %v1382, 0.0
    %1390 = vadd.xlane.f32.xlu0 %v1389
    %v1391 = vpop.xlane.xlu0 %1390
    %v1392 = vrcp.pop %v1385
    %v1393 = vrcp.pop %v1388
    %v1394 = vrcp.pop %v1391
    %v1395 = vmul.f32 %v1378, %v1392
    %v1396 = vmul.f32 %v1380, %v1393
    %v1397 = vmul.f32 %v1382, %v1394
    %1398 = vrot.lane.b32.xlu0 %v1303, 64
    %v1399 = vpop.permute.xlu0 %1398
    %1400 = vrot.lane.b32.xlu0 %v1306, 64
    %v1401 = vpop.permute.xlu0 %1400
    %1402 = vrot.lane.b32.xlu0 %v1309, 64
    %v1403 = vpop.permute.xlu0 %1402
    %v1407 = vsel %vm384, %v1395, 0
    %v1410 = vsel %vm384, %v1396, 0
    %v1413 = vsel %vm384, %v1397, 0
    %v1415 = vsel %vm436, %v1403, 0
    %1417 = vmatpush.msra.mxu0 0.0
    %1418 = vmatpush.msra.mxu0 0.0
    %1419 = vmatpush.msra.mxu0 0.0
    %1420 = vmatpush.msra.mxu0 0.0
    %1421 = vmatpush.msra.mxu0 0.0
    %1422 = vmatpush.msra.mxu0 0.0
    %1423 = vmatpush.msra.mxu0 0.0
    %1424 = vmatpush.msra.mxu0 0.0
    %1425 = vmatpush.msra.mxu0 0.0
    %1426 = vmatpush.msra.mxu0 0.0
    %1427 = vmatpush.msra.mxu0 0.0
    %1428 = vmatpush.msra.mxu0 0.0
    %1429 = vmatpush.msra.mxu0 0.0
    %1430 = vmatpush.msra.mxu0 %v1415
    %1431 = vmatpush.msra.mxu0 %v1401
    %1432 = vmatpush.msra.mxu0 %v1399
    %1433 = vmatmul.f32.gmra.mxu0 %v1407
    %v1434 = vpop.f32.mrf.mxu0
    %v1435 = vadd.f32 0.0, %v1434
    %1436 = vmatmul.f32.gmra.mxu0 %v1410
    %v1437 = vpop.f32.mrf.mxu0
    %v1438 = vadd.f32 0.0, %v1437
    %1439 = vmatmul.f32.gmra.mxu0 %v1413
    %v1440 = vpop.f32.mrf.mxu0
    %v1441 = vadd.f32 0.0, %v1440
    %1442 = vdwg.mxu0
    %v1444 = vsel %vm342, %v1435, 0
    %v1447 = vsel %vm342, %v1438, 0
    %v1450 = vsel %vm342, %v1441, 0
    %1452 = vmatpush.msra.mxu0 0.0
    %1453 = vmatpush.msra.mxu0 0.0
    %1454 = vmatpush.msra.mxu0 0.0
    %1455 = vmatpush.msra.mxu0 0.0
    %1456 = vmatpush.msra.mxu0 0.0
    %1457 = vmatpush.msra.mxu0 0.0
    %1458 = vmatpush.msra.mxu0 0.0
    %1459 = vmatpush.msra.mxu0 0.0
    %1460 = vmatpush.msra.mxu0 0.0
    %1461 = vmatpush.msra.mxu0 0.0
    %1462 = vmatpush.msra.mxu0 0.0
    %1463 = vmatpush.msra.mxu0 0.0
    %1464 = vmatpush.msra.mxu0 0.0
    %1465 = vmatpush.msra.mxu0 0.0
    %1466 = vmatpush.msra.mxu0 0.0
    %1467 = vmatpush.msra.mxu0 %v114
    %1468 = vmatmul.f32.gmra.mxu0 %v1444
    %v1469 = vpop.f32.mrf.mxu0
    %v1470 = vadd.f32 0.0, %v1469
    %1471 = vmatmul.f32.gmra.mxu0 %v1447
    %v1472 = vpop.f32.mrf.mxu0
    %v1473 = vadd.f32 0.0, %v1472
    %1474 = vmatmul.f32.gmra.mxu0 %v1450
    %v1475 = vpop.f32.mrf.mxu0
    %v1476 = vadd.f32 0.0, %v1475
    %1477 = vdwg.mxu0
    %v1478 = vadd.f32 %v1314, %v1470
    %v1479 = vadd.f32 %v1314, %v1473
    %v1480 = vadd.f32 %v1314, %v1476
    %1481 = vrot.lane.b32.xlu0 %v1303, 120
    %v1482 = vpop.permute.xlu0 %1481
    %1483 = vrot.lane.b32.xlu0 %v1306, 120
    %v1484 = vpop.permute.xlu0 %1483
    %1485 = vrot.lane.b32.xlu0 %v1309, 120
    %v1486 = vpop.permute.xlu0 %1485
    %1487 = vrot.lane.b32.xlu0 %v1303, 88
    %v1488 = vpop.permute.xlu0 %1487
    %1489 = vrot.lane.b32.xlu0 %v1306, 88
    %v1490 = vpop.permute.xlu0 %1489
    %1491 = vrot.lane.b32.xlu0 %v1309, 88
    %v1492 = vpop.permute.xlu0 %1491
    %v1493 = vsel %vm342, %v1482, 0
    %v1495 = vsel %vm342, %v1484, 0
    %v1497 = vsel %vm342, %v1486, 0
    %v1499 = vsel %vm342, %v1488, 0
    %v1501 = vsel %vm342, %v1490, 0
    %v1503 = vsel %vm342, %v1492, 0
    %1505 = vmatpush.xpose.msra.mxu0 0.0
    %1506 = vmatpush.xpose.msra.mxu0 0.0
    %1507 = vmatpush.xpose.msra.mxu0 0.0
    %1508 = vmatpush.xpose.msra.mxu0 0.0
    %1509 = vmatpush.xpose.msra.mxu0 0.0
    %1510 = vmatpush.xpose.msra.mxu0 0.0
    %1511 = vmatpush.xpose.msra.mxu0 0.0
    %1512 = vmatpush.xpose.msra.mxu0 0.0
    %1513 = vmatpush.xpose.msra.mxu0 0.0
    %1514 = vmatpush.xpose.msra.mxu0 0.0
    %1515 = vmatpush.xpose.msra.mxu0 0.0
    %1516 = vmatpush.xpose.msra.mxu0 0.0
    %1517 = vmatpush.xpose.msra.mxu0 0.0
    %1518 = vmatpush.xpose.msra.mxu0 %v1503
    %1519 = vmatpush.xpose.msra.mxu0 %v1501
    %1520 = vmatpush.xpose.msra.mxu0 %v1499
    %1521 = vmatmul.f32.gmra.mxu0 %v1493
    %v1522 = vpop.f32.mrf.mxu0
    %v1523 = vadd.f32 0.0, %v1522
    %1524 = vmatmul.f32.gmra.mxu0 %v1495
    %v1525 = vpop.f32.mrf.mxu0
    %v1526 = vadd.f32 0.0, %v1525
    %1527 = vmatmul.f32.gmra.mxu0 %v1497
    %v1528 = vpop.f32.mrf.mxu0
    %v1529 = vadd.f32 0.0, %v1528
    %1530 = vdwg.mxu0
    %v1531 = vmul.f32 %v1523, 0.35355338
    %v1532 = vmul.f32 %v1526, 0.35355338
    %v1533 = vmul.f32 %v1529, 0.35355338
    %v1534 = vsel %vm384, %v1531, -inf
    %1535 = vmax.xlane.f32.xlu0 %v1534
    %v1536 = vpop.xlane.xlu0 %1535
    %v1537 = vsel %vm384, %v1532, -inf
    %1538 = vmax.xlane.f32.xlu0 %v1537
    %v1539 = vpop.xlane.xlu0 %1538
    %v1540 = vsel %vm391, %v1533, -inf
    %1541 = vmax.xlane.f32.xlu0 %v1540
    %v1542 = vpop.xlane.xlu0 %1541
    %v1543 = vsub.f32 %v1531, %v1536
    %v1544 = vsub.f32 %v1532, %v1539
    %v1545 = vsub.f32 %v1533, %v1542
    %v1546 = vmul.f32 %v1543, 1.442695
    %v1547 = vpow.pop %v1546
    %v1548 = vmul.f32 %v1544, 1.442695
    %v1549 = vpow.pop %v1548
    %v1550 = vmul.f32 %v1545, 1.442695
    %v1551 = vpow.pop %v1550
    %v1552 = vsel %vm384, %v1547, 0.0
    %1553 = vadd.xlane.f32.xlu0 %v1552
    %v1554 = vpop.xlane.xlu0 %1553
    %v1555 = vsel %vm384, %v1549, 0.0
    %1556 = vadd.xlane.f32.xlu0 %v1555
    %v1557 = vpop.xlane.xlu0 %1556
    %v1558 = vsel %vm391, %v1551, 0.0
    %1559 = vadd.xlane.f32.xlu0 %v1558
    %v1560 = vpop.xlane.xlu0 %1559
    %v1561 = vrcp.pop %v1554
    %v1562 = vrcp.pop %v1557
    %v1563 = vrcp.pop %v1560
    %v1564 = vmul.f32 %v1547, %v1561
    %v1565 = vmul.f32 %v1549, %v1562
    %v1566 = vmul.f32 %v1551, %v1563
    %1567 = vrot.lane.b32.xlu0 %v1303, 56
    %v1568 = vpop.permute.xlu0 %1567
    %1569 = vrot.lane.b32.xlu0 %v1306, 56
    %v1570 = vpop.permute.xlu0 %1569
    %1571 = vrot.lane.b32.xlu0 %v1309, 56
    %v1572 = vpop.permute.xlu0 %1571
    %v1576 = vsel %vm384, %v1564, 0
    %v1579 = vsel %vm384, %v1565, 0
    %v1582 = vsel %vm384, %v1566, 0
    %v1584 = vsel %vm436, %v1572, 0
    %1586 = vmatpush.msra.mxu0 0.0
    %1587 = vmatpush.msra.mxu0 0.0
    %1588 = vmatpush.msra.mxu0 0.0
    %1589 = vmatpush.msra.mxu0 0.0
    %1590 = vmatpush.msra.mxu0 0.0
    %1591 = vmatpush.msra.mxu0 0.0
    %1592 = vmatpush.msra.mxu0 0.0
    %1593 = vmatpush.msra.mxu0 0.0
    %1594 = vmatpush.msra.mxu0 0.0
    %1595 = vmatpush.msra.mxu0 0.0
    %1596 = vmatpush.msra.mxu0 0.0
    %1597 = vmatpush.msra.mxu0 0.0
    %1598 = vmatpush.msra.mxu0 0.0
    %1599 = vmatpush.msra.mxu0 %v1584
    %1600 = vmatpush.msra.mxu0 %v1570
    %1601 = vmatpush.msra.mxu0 %v1568
    %1602 = vmatmul.f32.gmra.mxu0 %v1576
    %v1603 = vpop.f32.mrf.mxu0
    %v1604 = vadd.f32 0.0, %v1603
    %1605 = vmatmul.f32.gmra.mxu0 %v1579
    %v1606 = vpop.f32.mrf.mxu0
    %v1607 = vadd.f32 0.0, %v1606
    %1608 = vmatmul.f32.gmra.mxu0 %v1582
    %v1609 = vpop.f32.mrf.mxu0
    %v1610 = vadd.f32 0.0, %v1609
    %1611 = vdwg.mxu0
    %v1613 = vsel %vm342, %v1604, 0
    %v1616 = vsel %vm342, %v1607, 0
    %v1619 = vsel %vm342, %v1610, 0
    %1621 = vmatpush.msra.mxu0 0.0
    %1622 = vmatpush.msra.mxu0 0.0
    %1623 = vmatpush.msra.mxu0 0.0
    %1624 = vmatpush.msra.mxu0 0.0
    %1625 = vmatpush.msra.mxu0 0.0
    %1626 = vmatpush.msra.mxu0 0.0
    %1627 = vmatpush.msra.mxu0 0.0
    %1628 = vmatpush.msra.mxu0 0.0
    %1629 = vmatpush.msra.mxu0 0.0
    %1630 = vmatpush.msra.mxu0 0.0
    %1631 = vmatpush.msra.mxu0 0.0
    %1632 = vmatpush.msra.mxu0 0.0
    %1633 = vmatpush.msra.mxu0 0.0
    %1634 = vmatpush.msra.mxu0 0.0
    %1635 = vmatpush.msra.mxu0 0.0
    %1636 = vmatpush.msra.mxu0 %v115
    %1637 = vmatmul.f32.gmra.mxu0 %v1613
    %v1638 = vpop.f32.mrf.mxu0
    %v1639 = vadd.f32 0.0, %v1638
    %1640 = vmatmul.f32.gmra.mxu0 %v1616
    %v1641 = vpop.f32.mrf.mxu0
    %v1642 = vadd.f32 0.0, %v1641
    %1643 = vmatmul.f32.gmra.mxu0 %v1619
    %v1644 = vpop.f32.mrf.mxu0
    %v1645 = vadd.f32 0.0, %v1644
    %1646 = vdwg.mxu0
    %v1647 = vadd.f32 %v1478, %v1639
    %v1648 = vadd.f32 %v1479, %v1642
    %v1649 = vadd.f32 %v1480, %v1645
    %1650 = vrot.lane.b32.xlu0 %v1303, 112
    %v1651 = vpop.permute.xlu0 %1650
    %1652 = vrot.lane.b32.xlu0 %v1306, 112
    %v1653 = vpop.permute.xlu0 %1652
    %1654 = vrot.lane.b32.xlu0 %v1309, 112
    %v1655 = vpop.permute.xlu0 %1654
    %1656 = vrot.lane.b32.xlu0 %v1303, 80
    %v1657 = vpop.permute.xlu0 %1656
    %1658 = vrot.lane.b32.xlu0 %v1306, 80
    %v1659 = vpop.permute.xlu0 %1658
    %1660 = vrot.lane.b32.xlu0 %v1309, 80
    %v1661 = vpop.permute.xlu0 %1660
    %v1662 = vsel %vm342, %v1651, 0
    %v1664 = vsel %vm342, %v1653, 0
    %v1666 = vsel %vm342, %v1655, 0
    %v1668 = vsel %vm342, %v1657, 0
    %v1670 = vsel %vm342, %v1659, 0
    %v1672 = vsel %vm342, %v1661, 0
    %1674 = vmatpush.xpose.msra.mxu0 0.0
    %1675 = vmatpush.xpose.msra.mxu0 0.0
    %1676 = vmatpush.xpose.msra.mxu0 0.0
    %1677 = vmatpush.xpose.msra.mxu0 0.0
    %1678 = vmatpush.xpose.msra.mxu0 0.0
    %1679 = vmatpush.xpose.msra.mxu0 0.0
    %1680 = vmatpush.xpose.msra.mxu0 0.0
    %1681 = vmatpush.xpose.msra.mxu0 0.0
    %1682 = vmatpush.xpose.msra.mxu0 0.0
    %1683 = vmatpush.xpose.msra.mxu0 0.0
    %1684 = vmatpush.xpose.msra.mxu0 0.0
    %1685 = vmatpush.xpose.msra.mxu0 0.0
    %1686 = vmatpush.xpose.msra.mxu0 0.0
    %1687 = vmatpush.xpose.msra.mxu0 %v1672
    %1688 = vmatpush.xpose.msra.mxu0 %v1670
    %1689 = vmatpush.xpose.msra.mxu0 %v1668
    %1690 = vmatmul.f32.gmra.mxu0 %v1662
    %v1691 = vpop.f32.mrf.mxu0
    %v1692 = vadd.f32 0.0, %v1691
    %1693 = vmatmul.f32.gmra.mxu0 %v1664
    %v1694 = vpop.f32.mrf.mxu0
    %v1695 = vadd.f32 0.0, %v1694
    %1696 = vmatmul.f32.gmra.mxu0 %v1666
    %v1697 = vpop.f32.mrf.mxu0
    %v1698 = vadd.f32 0.0, %v1697
    %1699 = vdwg.mxu0
    %v1700 = vmul.f32 %v1692, 0.35355338
    %v1701 = vmul.f32 %v1695, 0.35355338
    %v1702 = vmul.f32 %v1698, 0.35355338
    %v1703 = vsel %vm384, %v1700, -inf
    %1704 = vmax.xlane.f32.xlu0 %v1703
    %v1705 = vpop.xlane.xlu0 %1704
    %v1706 = vsel %vm384, %v1701, -inf
    %1707 = vmax.xlane.f32.xlu0 %v1706
    %v1708 = vpop.xlane.xlu0 %1707
    %v1709 = vsel %vm391, %v1702, -inf
    %1710 = vmax.xlane.f32.xlu0 %v1709
    %v1711 = vpop.xlane.xlu0 %1710
    %v1712 = vsub.f32 %v1700, %v1705
    %v1713 = vsub.f32 %v1701, %v1708
    %v1714 = vsub.f32 %v1702, %v1711
    %v1715 = vmul.f32 %v1712, 1.442695
    %v1716 = vpow.pop %v1715
    %v1717 = vmul.f32 %v1713, 1.442695
    %v1718 = vpow.pop %v1717
    %v1719 = vmul.f32 %v1714, 1.442695
    %v1720 = vpow.pop %v1719
    %v1721 = vsel %vm384, %v1716, 0.0
    %1722 = vadd.xlane.f32.xlu0 %v1721
    %v1723 = vpop.xlane.xlu0 %1722
    %v1724 = vsel %vm384, %v1718, 0.0
    %1725 = vadd.xlane.f32.xlu0 %v1724
    %v1726 = vpop.xlane.xlu0 %1725
    %v1727 = vsel %vm391, %v1720, 0.0
    %1728 = vadd.xlane.f32.xlu0 %v1727
    %v1729 = vpop.xlane.xlu0 %1728
    %v1730 = vrcp.pop %v1723
    %v1731 = vrcp.pop %v1726
    %v1732 = vrcp.pop %v1729
    %v1733 = vmul.f32 %v1716, %v1730
    %v1734 = vmul.f32 %v1718, %v1731
    %v1735 = vmul.f32 %v1720, %v1732
    %1736 = vrot.lane.b32.xlu0 %v1303, 48
    %v1737 = vpop.permute.xlu0 %1736
    %1738 = vrot.lane.b32.xlu0 %v1306, 48
    %v1739 = vpop.permute.xlu0 %1738
    %1740 = vrot.lane.b32.xlu0 %v1309, 48
    %v1741 = vpop.permute.xlu0 %1740
    %v1745 = vsel %vm384, %v1733, 0
    %v1748 = vsel %vm384, %v1734, 0
    %v1751 = vsel %vm384, %v1735, 0
    %v1753 = vsel %vm436, %v1741, 0
    %1755 = vmatpush.msra.mxu0 0.0
    %1756 = vmatpush.msra.mxu0 0.0
    %1757 = vmatpush.msra.mxu0 0.0
    %1758 = vmatpush.msra.mxu0 0.0
    %1759 = vmatpush.msra.mxu0 0.0
    %1760 = vmatpush.msra.mxu0 0.0
    %1761 = vmatpush.msra.mxu0 0.0
    %1762 = vmatpush.msra.mxu0 0.0
    %1763 = vmatpush.msra.mxu0 0.0
    %1764 = vmatpush.msra.mxu0 0.0
    %1765 = vmatpush.msra.mxu0 0.0
    %1766 = vmatpush.msra.mxu0 0.0
    %1767 = vmatpush.msra.mxu0 0.0
    %1768 = vmatpush.msra.mxu0 %v1753
    %1769 = vmatpush.msra.mxu0 %v1739
    %1770 = vmatpush.msra.mxu0 %v1737
    %1771 = vmatmul.f32.gmra.mxu0 %v1745
    %v1772 = vpop.f32.mrf.mxu0
    %v1773 = vadd.f32 0.0, %v1772
    %1774 = vmatmul.f32.gmra.mxu0 %v1748
    %v1775 = vpop.f32.mrf.mxu0
    %v1776 = vadd.f32 0.0, %v1775
    %1777 = vmatmul.f32.gmra.mxu0 %v1751
    %v1778 = vpop.f32.mrf.mxu0
    %v1779 = vadd.f32 0.0, %v1778
    %1780 = vdwg.mxu0
    %v1782 = vsel %vm342, %v1773, 0
    %v1785 = vsel %vm342, %v1776, 0
    %v1788 = vsel %vm342, %v1779, 0
    %1790 = vmatpush.msra.mxu0 0.0
    %1791 = vmatpush.msra.mxu0 0.0
    %1792 = vmatpush.msra.mxu0 0.0
    %1793 = vmatpush.msra.mxu0 0.0
    %1794 = vmatpush.msra.mxu0 0.0
    %1795 = vmatpush.msra.mxu0 0.0
    %1796 = vmatpush.msra.mxu0 0.0
    %1797 = vmatpush.msra.mxu0 0.0
    %1798 = vmatpush.msra.mxu0 0.0
    %1799 = vmatpush.msra.mxu0 0.0
    %1800 = vmatpush.msra.mxu0 0.0
    %1801 = vmatpush.msra.mxu0 0.0
    %1802 = vmatpush.msra.mxu0 0.0
    %1803 = vmatpush.msra.mxu0 0.0
    %1804 = vmatpush.msra.mxu0 0.0
    %1805 = vmatpush.msra.mxu0 %v116
    %1806 = vmatmul.f32.gmra.mxu0 %v1782
    %v1807 = vpop.f32.mrf.mxu0
    %v1808 = vadd.f32 0.0, %v1807
    %1809 = vmatmul.f32.gmra.mxu0 %v1785
    %v1810 = vpop.f32.mrf.mxu0
    %v1811 = vadd.f32 0.0, %v1810
    %1812 = vmatmul.f32.gmra.mxu0 %v1788
    %v1813 = vpop.f32.mrf.mxu0
    %v1814 = vadd.f32 0.0, %v1813
    %1815 = vdwg.mxu0
    %v1816 = vadd.f32 %v1647, %v1808
    %v1817 = vadd.f32 %v1648, %v1811
    %v1818 = vadd.f32 %v1649, %v1814
    %1819 = vrot.lane.b32.xlu0 %v1303, 104
    %v1820 = vpop.permute.xlu0 %1819
    %1821 = vrot.lane.b32.xlu0 %v1306, 104
    %v1822 = vpop.permute.xlu0 %1821
    %1823 = vrot.lane.b32.xlu0 %v1309, 104
    %v1824 = vpop.permute.xlu0 %1823
    %1825 = vrot.lane.b32.xlu0 %v1303, 72
    %v1826 = vpop.permute.xlu0 %1825
    %1827 = vrot.lane.b32.xlu0 %v1306, 72
    %v1828 = vpop.permute.xlu0 %1827
    %1829 = vrot.lane.b32.xlu0 %v1309, 72
    %v1830 = vpop.permute.xlu0 %1829
    %v1831 = vsel %vm342, %v1820, 0
    %v1833 = vsel %vm342, %v1822, 0
    %v1835 = vsel %vm342, %v1824, 0
    %v1837 = vsel %vm342, %v1826, 0
    %v1839 = vsel %vm342, %v1828, 0
    %v1841 = vsel %vm342, %v1830, 0
    %1843 = vmatpush.xpose.msra.mxu0 0.0
    %1844 = vmatpush.xpose.msra.mxu0 0.0
    %1845 = vmatpush.xpose.msra.mxu0 0.0
    %1846 = vmatpush.xpose.msra.mxu0 0.0
    %1847 = vmatpush.xpose.msra.mxu0 0.0
    %1848 = vmatpush.xpose.msra.mxu0 0.0
    %1849 = vmatpush.xpose.msra.mxu0 0.0
    %1850 = vmatpush.xpose.msra.mxu0 0.0
    %1851 = vmatpush.xpose.msra.mxu0 0.0
    %1852 = vmatpush.xpose.msra.mxu0 0.0
    %1853 = vmatpush.xpose.msra.mxu0 0.0
    %1854 = vmatpush.xpose.msra.mxu0 0.0
    %1855 = vmatpush.xpose.msra.mxu0 0.0
    %1856 = vmatpush.xpose.msra.mxu0 %v1841
    %1857 = vmatpush.xpose.msra.mxu0 %v1839
    %1858 = vmatpush.xpose.msra.mxu0 %v1837
    %1859 = vmatmul.f32.gmra.mxu0 %v1831
    %v1860 = vpop.f32.mrf.mxu0
    %v1861 = vadd.f32 0.0, %v1860
    %1862 = vmatmul.f32.gmra.mxu0 %v1833
    %v1863 = vpop.f32.mrf.mxu0
    %v1864 = vadd.f32 0.0, %v1863
    %1865 = vmatmul.f32.gmra.mxu0 %v1835
    %v1866 = vpop.f32.mrf.mxu0
    %v1867 = vadd.f32 0.0, %v1866
    %1868 = vdwg.mxu0
    %v1869 = vmul.f32 %v1861, 0.35355338
    %v1870 = vmul.f32 %v1864, 0.35355338
    %v1871 = vmul.f32 %v1867, 0.35355338
    %v1872 = vsel %vm384, %v1869, -inf
    %1873 = vmax.xlane.f32.xlu0 %v1872
    %v1874 = vpop.xlane.xlu0 %1873
    %v1875 = vsel %vm384, %v1870, -inf
    %1876 = vmax.xlane.f32.xlu0 %v1875
    %v1877 = vpop.xlane.xlu0 %1876
    %v1878 = vsel %vm391, %v1871, -inf
    %1879 = vmax.xlane.f32.xlu0 %v1878
    %v1880 = vpop.xlane.xlu0 %1879
    %v1881 = vsub.f32 %v1869, %v1874
    %v1882 = vsub.f32 %v1870, %v1877
    %v1883 = vsub.f32 %v1871, %v1880
    %v1884 = vmul.f32 %v1881, 1.442695
    %v1885 = vpow.pop %v1884
    %v1886 = vmul.f32 %v1882, 1.442695
    %v1887 = vpow.pop %v1886
    %v1888 = vmul.f32 %v1883, 1.442695
    %v1889 = vpow.pop %v1888
    %v1890 = vsel %vm384, %v1885, 0.0
    %1891 = vadd.xlane.f32.xlu0 %v1890
    %v1892 = vpop.xlane.xlu0 %1891
    %v1893 = vsel %vm384, %v1887, 0.0
    %1894 = vadd.xlane.f32.xlu0 %v1893
    %v1895 = vpop.xlane.xlu0 %1894
    %v1896 = vsel %vm391, %v1889, 0.0
    %1897 = vadd.xlane.f32.xlu0 %v1896
    %v1898 = vpop.xlane.xlu0 %1897
    %v1899 = vrcp.pop %v1892
    %v1900 = vrcp.pop %v1895
    %v1901 = vrcp.pop %v1898
    %v1902 = vmul.f32 %v1885, %v1899
    %v1903 = vmul.f32 %v1887, %v1900
    %v1904 = vmul.f32 %v1889, %v1901
    %1905 = vrot.lane.b32.xlu0 %v1303, 40
    %v1906 = vpop.permute.xlu0 %1905
    %1907 = vrot.lane.b32.xlu0 %v1306, 40
    %v1908 = vpop.permute.xlu0 %1907
    %1909 = vrot.lane.b32.xlu0 %v1309, 40
    %v1910 = vpop.permute.xlu0 %1909
    %v1914 = vsel %vm384, %v1902, 0
    %v1917 = vsel %vm384, %v1903, 0
    %v1920 = vsel %vm384, %v1904, 0
    %v1922 = vsel %vm436, %v1910, 0
    %1924 = vmatpush.msra.mxu0 0.0
    %1925 = vmatpush.msra.mxu0 0.0
    %1926 = vmatpush.msra.mxu0 0.0
    %1927 = vmatpush.msra.mxu0 0.0
    %1928 = vmatpush.msra.mxu0 0.0
    %1929 = vmatpush.msra.mxu0 0.0
    %1930 = vmatpush.msra.mxu0 0.0
    %1931 = vmatpush.msra.mxu0 0.0
    %1932 = vmatpush.msra.mxu0 0.0
    %1933 = vmatpush.msra.mxu0 0.0
    %1934 = vmatpush.msra.mxu0 0.0
    %1935 = vmatpush.msra.mxu0 0.0
    %1936 = vmatpush.msra.mxu0 0.0
    %1937 = vmatpush.msra.mxu0 %v1922
    %1938 = vmatpush.msra.mxu0 %v1908
    %1939 = vmatpush.msra.mxu0 %v1906
    %1940 = vmatmul.f32.gmra.mxu0 %v1914
    %v1941 = vpop.f32.mrf.mxu0
    %v1942 = vadd.f32 0.0, %v1941
    %1943 = vmatmul.f32.gmra.mxu0 %v1917
    %v1944 = vpop.f32.mrf.mxu0
    %v1945 = vadd.f32 0.0, %v1944
    %1946 = vmatmul.f32.gmra.mxu0 %v1920
    %v1947 = vpop.f32.mrf.mxu0
    %v1948 = vadd.f32 0.0, %v1947
    %1949 = vdwg.mxu0
    %v1951 = vsel %vm342, %v1942, 0
    %v1954 = vsel %vm342, %v1945, 0
    %v1957 = vsel %vm342, %v1948, 0
    %1959 = vmatpush.msra.mxu0 0.0
    %1960 = vmatpush.msra.mxu0 0.0
    %1961 = vmatpush.msra.mxu0 0.0
    %1962 = vmatpush.msra.mxu0 0.0
    %1963 = vmatpush.msra.mxu0 0.0
    %1964 = vmatpush.msra.mxu0 0.0
    %1965 = vmatpush.msra.mxu0 0.0
    %1966 = vmatpush.msra.mxu0 0.0
    %1967 = vmatpush.msra.mxu0 0.0
    %1968 = vmatpush.msra.mxu0 0.0
    %1969 = vmatpush.msra.mxu0 0.0
    %1970 = vmatpush.msra.mxu0 0.0
    %1971 = vmatpush.msra.mxu0 0.0
    %1972 = vmatpush.msra.mxu0 0.0
    %1973 = vmatpush.msra.mxu0 0.0
    %1974 = vmatpush.msra.mxu0 %v117
    %1975 = vmatmul.f32.gmra.mxu0 %v1951
    %v1976 = vpop.f32.mrf.mxu0
    %v1977 = vadd.f32 0.0, %v1976
    %1978 = vmatmul.f32.gmra.mxu0 %v1954
    %v1979 = vpop.f32.mrf.mxu0
    %v1980 = vadd.f32 0.0, %v1979
    %1981 = vmatmul.f32.gmra.mxu0 %v1957
    %v1982 = vpop.f32.mrf.mxu0
    %v1983 = vadd.f32 0.0, %v1982
    %1984 = vdwg.mxu0
    %v1985 = vadd.f32 %v1816, %v1977
    %v1986 = vadd.f32 %v1817, %v1980
    %v1987 = vadd.f32 %v1818, %v1983
    %v1988 = vadd.f32 %v1195, %v1985
    %v1989 = vadd.f32 %v1196, %v1986
    %v1990 = vadd.f32 %v1197, %v1987
    %v1991 = vsel %vm207, %v1988, 0.0
    %1992 = vadd.xlane.f32.xlu0 %v1991
    %v1993 = vpop.xlane.xlu0 %1992
    %v1994 = vsel %vm207, %v1989, 0.0
    %1995 = vadd.xlane.f32.xlu0 %v1994
    %v1996 = vpop.xlane.xlu0 %1995
    %v1997 = vsel %vm214, %v1990, 0.0
    %1998 = vadd.xlane.f32.xlu0 %v1997
    %v1999 = vpop.xlane.xlu0 %1998
    %v2000 = vmul.f32 %v1993, %v224
    %v2001 = vmul.f32 %v1996, %v224
    %v2002 = vmul.f32 %v1999, %v224
    %v2003 = vsub.f32 %v1988, %v2000
    %v2004 = vsub.f32 %v1989, %v2001
    %v2005 = vsub.f32 %v1990, %v2002
    %v2006 = vmul.f32 %v2003, %v2003
    %v2007 = vmul.f32 %v2004, %v2004
    %v2008 = vmul.f32 %v2005, %v2005
    %v2009 = vsel %vm207, %v2006, 0.0
    %2010 = vadd.xlane.f32.xlu0 %v2009
    %v2011 = vpop.xlane.xlu0 %2010
    %v2012 = vsel %vm207, %v2007, 0.0
    %2013 = vadd.xlane.f32.xlu0 %v2012
    %v2014 = vpop.xlane.xlu0 %2013
    %v2015 = vsel %vm214, %v2008, 0.0
    %2016 = vadd.xlane.f32.xlu0 %v2015
    %v2017 = vpop.xlane.xlu0 %2016
    %v2018 = vmul.f32 %v2011, %v224
    %v2019 = vmul.f32 %v2014, %v224
    %v2020 = vmul.f32 %v2017, %v224
    %v2021 = vadd.f32 %v2018, 1e-05
    %v2022 = vadd.f32 %v2019, 1e-05
    %v2023 = vadd.f32 %v2020, 1e-05
    %v2024 = vrsqrt.pop %v2021
    %v2025 = vmul.f32 %v2024, %v2021
    %v2026 = vmul.f32 %v2025, %v2024
    %v2027 = vmul.f32 0.5, %v2026
    %v2028 = vsub.f32 1.5, %v2027
    %v2029 = vmul.f32 %v2024, %v2028
    %vm2030 = vweird.f32 %v2021
    %vm2031 = vweird.f32 %v2024
    %vm2032 = vmor %vm2030, %vm2031
    %v2033 = vsel %vm2032, %v2024, %v2029
    %v2034 = vrsqrt.pop %v2022
    %v2035 = vmul.f32 %v2034, %v2022
    %v2036 = vmul.f32 %v2035, %v2034
    %v2037 = vmul.f32 0.5, %v2036
    %v2038 = vsub.f32 1.5, %v2037
    %v2039 = vmul.f32 %v2034, %v2038
    %vm2040 = vweird.f32 %v2022
    %vm2041 = vweird.f32 %v2034
    %vm2042 = vmor %vm2040, %vm2041
    %v2043 = vsel %vm2042, %v2034, %v2039
    %v2044 = vrsqrt.pop %v2023
    %v2045 = vmul.f32 %v2044, %v2023
    %v2046 = vmul.f32 %v2045, %v2044
    %v2047 = vmul.f32 0.5, %v2046
    %v2048 = vsub.f32 1.5, %v2047
    %v2049 = vmul.f32 %v2044, %v2048
    %vm2050 = vweird.f32 %v2023
    %vm2051 = vweird.f32 %v2044
    %vm2052 = vmor %vm2050, %vm2051
    %v2053 = vsel %vm2052, %v2044, %v2049
    %v2054 = vmul.f32 %v2003, %v2033
    %v2055 = vmul.f32 %v2004, %v2043
    %v2056 = vmul.f32 %v2005, %v2053
    %v2058 = vperm.slane %v121, 0
    %v2060 = vmul.f32 %v2054, %v2058
    %v2061 = vmul.f32 %v2055, %v2058
    %v2062 = vmul.f32 %v2056, %v2058
    %v2064 = vperm.slane %v123, 0
    %v2066 = vadd.f32 %v2060, %v2064
    %v2067 = vadd.f32 %v2061, %v2064
    %v2068 = vadd.f32 %v2062, %v2064
    %v2070 = vperm.slane %v130, 0
    %v2073 = vsel %vm207, %v2066, 0
    %v2076 = vsel %vm207, %v2067, 0
    %v2079 = vsel %vm207, %v2068, 0
    %2081 = vmatpush.msra.mxu0 0.0
    %2082 = vmatpush.msra.mxu0 0.0
    %2083 = vmatpush.msra.mxu0 0.0
    %2084 = vmatpush.msra.mxu0 0.0
    %2085 = vmatpush.msra.mxu0 0.0
    %2086 = vmatpush.msra.mxu0 0.0
    %2087 = vmatpush.msra.mxu0 0.0
    %2088 = vmatpush.msra.mxu0 0.0
    %2089 = vmatpush.msra.mxu0 0.0
    %2090 = vmatpush.msra.mxu0 0.0
    %2091 = vmatpush.msra.mxu0 0.0
    %2092 = vmatpush.msra.mxu0 0.0
    %2093 = vmatpush.msra.mxu0 %v128
    %2094 = vmatpush.msra.mxu0 %v127
    %2095 = vmatpush.msra.mxu0 %v126
    %2096 = vmatpush.msra.mxu0 %v125
    %2097 = vmatmul.f32.gmra.mxu0 %v2073
    %v2098 = vpop.f32.mrf.mxu0
    %v2099 = vadd.f32 %v2070, %v2098
    %2100 = vmatmul.f32.gmra.mxu0 %v2076
    %v2101 = vpop.f32.mrf.mxu0
    %v2102 = vadd.f32 %v2070, %v2101
    %2103 = vmatmul.f32.gmra.mxu0 %v2079
    %v2104 = vpop.f32.mrf.mxu0
    %v2105 = vadd.f32 %v2070, %v2104
    %2106 = vdwg.mxu0
    %v2107 = vmul.f32 %v2099, %v2099
    %v2108 = vmul.f32 %v2102, %v2102
    %v2109 = vmul.f32 %v2105, %v2105
    %v2110 = vmul.f32 %v2099, %v2107
    %v2111 = vmul.f32 %v2102, %v2108
    %v2112 = vmul.f32 %v2105, %v2109
    %v2113 = vmul.f32 %v2110, 0.044715
    %v2114 = vmul.f32 %v2111, 0.044715
    %v2115 = vmul.f32 %v2112, 0.044715
    %v2116 = vadd.f32 %v2099, %v2113
    %v2117 = vadd.f32 %v2102, %v2114
    %v2118 = vadd.f32 %v2105, %v2115
    %v2119 = vmul.f32 %v2116, 0.7978846
    %v2120 = vmul.f32 %v2117, 0.7978846
    %v2121 = vmul.f32 %v2118, 0.7978846
    %v2122 = vtanh.pop %v2119
    %v2123 = vtanh.pop %v2120
    %v2124 = vtanh.pop %v2121
    %v2125 = vadd.f32 %v2122, 1.0
    %v2126 = vadd.f32 %v2123, 1.0
    %v2127 = vadd.f32 %v2124, 1.0
    %v2128 = vmul.f32 %v2125, 0.5
    %v2129 = vmul.f32 %v2126, 0.5
    %v2130 = vmul.f32 %v2127, 0.5
    %v2131 = vmul.f32 %v2099, %v2128
    %v2132 = vmul.f32 %v2102, %v2129
    %v2133 = vmul.f32 %v2105, %v2130
    %v2135 = vperm.slane %v141, 0
    %v2138 = vsel %vm1159, %v2131, 0
    %v2141 = vsel %vm1159, %v2132, 0
    %v2144 = vsel %vm1159, %v2133, 0
    %2146 = vmatpush.msra.mxu0 0.0
    %2147 = vmatpush.msra.mxu0 0.0
    %2148 = vmatpush.msra.mxu0 0.0
    %2149 = vmatpush.msra.mxu0 0.0
    %2150 = vmatpush.msra.mxu0 0.0
    %2151 = vmatpush.msra.mxu0 0.0
    %2152 = vmatpush.msra.mxu0 0.0
    %2153 = vmatpush.msra.mxu0 0.0
    %2154 = vmatpush.msra.mxu0 %v139
    %2155 = vmatpush.msra.mxu0 %v138
    %2156 = vmatpush.msra.mxu0 %v137
    %2157 = vmatpush.msra.mxu0 %v136
    %2158 = vmatpush.msra.mxu0 %v135
    %2159 = vmatpush.msra.mxu0 %v134
    %2160 = vmatpush.msra.mxu0 %v133
    %2161 = vmatpush.msra.mxu0 %v132
    %2162 = vmatmul.f32.gmra.mxu0 %v2138
    %v2163 = vpop.f32.mrf.mxu0
    %v2164 = vadd.f32 %v2135, %v2163
    %2165 = vmatmul.f32.gmra.mxu0 %v2141
    %v2166 = vpop.f32.mrf.mxu0
    %2167 = vmatmul.f32.gmra.mxu0 %v2144
    %v2168 = vpop.f32.mrf.mxu0
    %2169 = vdwg.mxu0
    %v2170 = vadd.f32 %v1988, %v2164
    %v2171 = vsel %vm214, %v2170, 0.0
    %2172 = vadd.xlane.f32.xlu0 %v2171
    %v2173 = vpop.xlane.xlu0 %2172
    %v2174 = vmul.f32 %v2173, %v224
    %v2175 = vsub.f32 %v2170, %v2174
    %v2176 = vmul.f32 %v2175, %v2175
    %v2177 = vsel %vm214, %v2176, 0.0
    %2178 = vadd.xlane.f32.xlu0 %v2177
    %v2179 = vpop.xlane.xlu0 %2178
    %v2180 = vmul.f32 %v2179, %v224
    %v2181 = vadd.f32 %v2180, 1e-05
    %v2182 = vrsqrt.pop %v2181
    %v2183 = vmul.f32 %v2182, %v2181
    %v2184 = vmul.f32 %v2183, %v2182
    %v2185 = vmul.f32 0.5, %v2184
    %v2186 = vsub.f32 1.5, %v2185
    %v2187 = vmul.f32 %v2182, %v2186
    %vm2188 = vweird.f32 %v2181
    %vm2189 = vweird.f32 %v2182
    %vm2190 = vmor %vm2188, %vm2189
    %v2191 = vsel %vm2190, %v2182, %v2187
    %v2192 = vmul.f32 %v2175, %v2191
    %v2193 = vmul.f32 %v2192, %v142
    %v2194 = vadd.f32 %v2193, %v143
    %v2196 = vsel %vm207, %v2194, 0
    %2198 = vmatpush.msra.mxu0 0.0
    %2199 = vmatpush.msra.mxu0 0.0
    %2200 = vmatpush.msra.mxu0 0.0
    %2201 = vmatpush.msra.mxu0 0.0
    %2202 = vmatpush.msra.mxu0 0.0
    %2203 = vmatpush.msra.mxu0 0.0
    %2204 = vmatpush.msra.mxu0 0.0
    %2205 = vmatpush.msra.mxu0 0.0
    %2206 = vmatpush.msra.mxu0 0.0
    %2207 = vmatpush.msra.mxu0 0.0
    %2208 = vmatpush.msra.mxu0 0.0
    %2209 = vmatpush.msra.mxu0 0.0
    %2210 = vmatpush.msra.mxu0 %v147
    %2211 = vmatpush.msra.mxu0 %v146
    %2212 = vmatpush.msra.mxu0 %v145
    %2213 = vmatpush.msra.mxu0 %v144
    %2214 = vmatmul.f32.gmra.mxu0 %v2196
    %v2215 = vpop.f32.mrf.mxu0
    %v2216 = vadd.f32 %v148, %v2215
    %2217 = vdwg.mxu0
    %vm2218 = vcmask 73728
    %2219 = vst.msk [vmem:[#allocation2] sm:$0x1] %vm2218, %v2216
    %s2220 = scalar_lea.vmem %s0, 24
    %v2221 = vld [vmem:[%s2220] sm:$0xff]
    %v2222 = vld [vmem:[%s2220 + $0x8] sm:$0xff]
    %v2223 = vld [vmem:[%s2220 + $0x10] sm:$0x1]
    %v2225 = vsel %vm155, %v2221, 0
    %v2228 = vsel %vm155, %v2222, 0
    %v2231 = vsel %vm155, %v2223, 0
    %2233 = vmatpush.msra.mxu0 0.0
    %2234 = vmatpush.msra.mxu0 0.0
    %2235 = vmatpush.msra.mxu0 0.0
    %2236 = vmatpush.msra.mxu0 0.0
    %2237 = vmatpush.msra.mxu0 0.0
    %2238 = vmatpush.msra.mxu0 0.0
    %2239 = vmatpush.msra.mxu0 0.0
    %2240 = vmatpush.msra.mxu0 0.0
    %2241 = vmatpush.msra.mxu0 0.0
    %2242 = vmatpush.msra.mxu0 0.0
    %2243 = vmatpush.msra.mxu0 %v71
    %2244 = vmatpush.msra.mxu0 %v70
    %2245 = vmatpush.msra.mxu0 %v69
    %2246 = vmatpush.msra.mxu0 %v68
    %2247 = vmatpush.msra.mxu0 %v67
    %2248 = vmatpush.msra.mxu0 %v66
    %2249 = vmatmul.f32.gmra.mxu0 %v2225
    %v2250 = vpop.f32.mrf.mxu0
    %v2251 = vadd.f32 %v153, %v2250
    %2252 = vmatmul.f32.gmra.mxu0 %v2228
    %v2253 = vpop.f32.mrf.mxu0
    %v2254 = vadd.f32 %v153, %v2253
    %2255 = vmatmul.f32.gmra.mxu0 %v2231
    %v2256 = vpop.f32.mrf.mxu0
    %v2257 = vadd.f32 %v153, %v2256
    %2258 = vdwg.mxu0
    %v2259 = vsel %vm195, %v199, %v2251
    %v2260 = vsel %vm196, %v199, %v2254
    %v2261 = vsel %vm197, %v199, %v2257
    %v2262 = vadd.f32 %v2259, %v74
    %v2263 = vadd.f32 %v2260, %v75
    %v2264 = vadd.f32 %v2261, %v76
    %v2265 = vsel %vm207, %v2262, 0.0
    %2266 = vadd.xlane.f32.xlu0 %v2265
    %v2267 = vpop.xlane.xlu0 %2266
    %v2268 = vsel %vm207, %v2263, 0.0
    %2269 = vadd.xlane.f32.xlu0 %v2268
    %v2270 = vpop.xlane.xlu0 %2269
    %v2271 = vsel %vm214, %v2264, 0.0
    %2272 = vadd.xlane.f32.xlu0 %v2271
    %v2273 = vpop.xlane.xlu0 %2272
    %v2274 = vmul.f32 %v2267, %v224
    %v2275 = vmul.f32 %v2270, %v224
    %v2276 = vmul.f32 %v2273, %v224
    %v2277 = vsub.f32 %v2262, %v2274
    %v2278 = vsub.f32 %v2263, %v2275
    %v2279 = vsub.f32 %v2264, %v2276
    %v2280 = vmul.f32 %v2277, %v2277
    %v2281 = vmul.f32 %v2278, %v2278
    %v2282 = vmul.f32 %v2279, %v2279
    %v2283 = vsel %vm207, %v2280, 0.0
    %2284 = vadd.xlane.f32.xlu0 %v2283
    %v2285 = vpop.xlane.xlu0 %2284
    %v2286 = vsel %vm207, %v2281, 0.0
    %2287 = vadd.xlane.f32.xlu0 %v2286
    %v2288 = vpop.xlane.xlu0 %2287
    %v2289 = vsel %vm214, %v2282, 0.0
    %2290 = vadd.xlane.f32.xlu0 %v2289
    %v2291 = vpop.xlane.xlu0 %2290
    %v2292 = vmul.f32 %v2285, %v224
    %v2293 = vmul.f32 %v2288, %v224
    %v2294 = vmul.f32 %v2291, %v224
    %v2295 = vadd.f32 %v2292, 1e-05
    %v2296 = vadd.f32 %v2293, 1e-05
    %v2297 = vadd.f32 %v2294, 1e-05
    %v2298 = vrsqrt.pop %v2295
    %v2299 = vmul.f32 %v2298, %v2295
    %v2300 = vmul.f32 %v2299, %v2298
    %v2301 = vmul.f32 0.5, %v2300
    %v2302 = vsub.f32 1.5, %v2301
    %v2303 = vmul.f32 %v2298, %v2302
    %vm2304 = vweird.f32 %v2295
    %vm2305 = vweird.f32 %v2298
    %vm2306 = vmor %vm2304, %vm2305
    %v2307 = vsel %vm2306, %v2298, %v2303
    %v2308 = vrsqrt.pop %v2296
    %v2309 = vmul.f32 %v2308, %v2296
    %v2310 = vmul.f32 %v2309, %v2308
    %v2311 = vmul.f32 0.5, %v2310
    %v2312 = vsub.f32 1.5, %v2311
    %v2313 = vmul.f32 %v2308, %v2312
    %vm2314 = vweird.f32 %v2296
    %vm2315 = vweird.f32 %v2308
    %vm2316 = vmor %vm2314, %vm2315
    %v2317 = vsel %vm2316, %v2308, %v2313
    %v2318 = vrsqrt.pop %v2297
    %v2319 = vmul.f32 %v2318, %v2297
    %v2320 = vmul.f32 %v2319, %v2318
    %v2321 = vmul.f32 0.5, %v2320
    %v2322 = vsub.f32 1.5, %v2321
    %v2323 = vmul.f32 %v2318, %v2322
    %vm2324 = vweird.f32 %v2297
    %vm2325 = vweird.f32 %v2318
    %vm2326 = vmor %vm2324, %vm2325
    %v2327 = vsel %vm2326, %v2318, %v2323
    %v2328 = vmul.f32 %v2277, %v2307
    %v2329 = vmul.f32 %v2278, %v2317
    %v2330 = vmul.f32 %v2279, %v2327
    %v2331 = vmul.f32 %v2328, %v283
    %v2332 = vmul.f32 %v2329, %v283
    %v2333 = vmul.f32 %v2330, %v283
    %v2334 = vadd.f32 %v2331, %v289
    %v2335 = vadd.f32 %v2332, %v289
    %v2336 = vadd.f32 %v2333, %v289
    %v2338 = vsel %vm207, %v2334, 0
    %v2341 = vsel %vm207, %v2335, 0
    %v2344 = vsel %vm207, %v2336, 0
    %2346 = vmatpush.msra.mxu0 0.0
    %2347 = vmatpush.msra.mxu0 0.0
    %2348 = vmatpush.msra.mxu0 0.0
    %2349 = vmatpush.msra.mxu0 0.0
    %2350 = vmatpush.msra.mxu0 0.0
    %2351 = vmatpush.msra.mxu0 0.0
    %2352 = vmatpush.msra.mxu0 0.0
    %2353 = vmatpush.msra.mxu0 0.0
    %2354 = vmatpush.msra.mxu0 0.0
    %2355 = vmatpush.msra.mxu0 0.0
    %2356 = vmatpush.msra.mxu0 0.0
    %2357 = vmatpush.msra.mxu0 0.0
    %2358 = vmatpush.msra.mxu0 %v82
    %2359 = vmatpush.msra.mxu0 %v81
    %2360 = vmatpush.msra.mxu0 %v80
    %2361 = vmatpush.msra.mxu0 %v79
    %2362 = vmatmul.f32.gmra.mxu0 %v2338
    %v2363 = vpop.f32.mrf.mxu0
    %v2364 = vadd.f32 0.0, %v2363
    %2365 = vmatmul.f32.gmra.mxu0 %v2341
    %v2366 = vpop.f32.mrf.mxu0
    %v2367 = vadd.f32 0.0, %v2366
    %2368 = vmatmul.f32.gmra.mxu0 %v2344
    %v2369 = vpop.f32.mrf.mxu0
    %v2370 = vadd.f32 0.0, %v2369
    %2371 = vdwg.mxu0
    %2375 = vrot.lane.b32.xlu0 %v2364, 96
    %v2376 = vpop.permute.xlu0 %2375
    %2377 = vrot.lane.b32.xlu0 %v2367, 96
    %v2378 = vpop.permute.xlu0 %2377
    %2379 = vrot.lane.b32.xlu0 %v2370, 96
    %v2380 = vpop.permute.xlu0 %2379
    %v2381 = vsel %vm342, %v2364, 0
    %v2383 = vsel %vm342, %v2367, 0
    %v2385 = vsel %vm342, %v2370, 0
    %v2387 = vsel %vm342, %v2376, 0
    %v2389 = vsel %vm342, %v2378, 0
    %v2391 = vsel %vm342, %v2380, 0
    %2393 = vmatpush.xpose.msra.mxu0 0.0
    %2394 = vmatpush.xpose.msra.mxu0 0.0
    %2395 = vmatpush.xpose.msra.mxu0 0.0
    %2396 = vmatpush.xpose.msra.mxu0 0.0
    %2397 = vmatpush.xpose.msra.mxu0 0.0
    %2398 = vmatpush.xpose.msra.mxu0 0.0
    %2399 = vmatpush.xpose.msra.mxu0 0.0
    %2400 = vmatpush.xpose.msra.mxu0 0.0
    %2401 = vmatpush.xpose.msra.mxu0 0.0
    %2402 = vmatpush.xpose.msra.mxu0 0.0
    %2403 = vmatpush.xpose.msra.mxu0 0.0
    %2404 = vmatpush.xpose.msra.mxu0 0.0
    %2405 = vmatpush.xpose.msra.mxu0 0.0
    %2406 = vmatpush.xpose.msra.mxu0 %v2391
    %2407 = vmatpush.xpose.msra.mxu0 %v2389
    %2408 = vmatpush.xpose.msra.mxu0 %v2387
    %2409 = vmatmul.f32.gmra.mxu0 %v2381
    %v2410 = vpop.f32.mrf.mxu0
    %v2411 = vadd.f32 0.0, %v2410
    %2412 = vmatmul.f32.gmra.mxu0 %v2383
    %v2413 = vpop.f32.mrf.mxu0
    %v2414 = vadd.f32 0.0, %v2413
    %2415 = vmatmul.f32.gmra.mxu0 %v2385
    %v2416 = vpop.f32.mrf.mxu0
    %v2417 = vadd.f32 0.0, %v2416
    %2418 = vdwg.mxu0
    %v2419 = vmul.f32 %v2411, 0.35355338
    %v2420 = vmul.f32 %v2414, 0.35355338
    %v2421 = vmul.f32 %v2417, 0.35355338
    %v2422 = vsel %vm384, %v2419, -inf
    %2423 = vmax.xlane.f32.xlu0 %v2422
    %v2424 = vpop.xlane.xlu0 %2423
    %v2425 = vsel %vm384, %v2420, -inf
    %2426 = vmax.xlane.f32.xlu0 %v2425
    %v2427 = vpop.xlane.xlu0 %2426
    %v2428 = vsel %vm391, %v2421, -inf
    %2429 = vmax.xlane.f32.xlu0 %v2428
    %v2430 = vpop.xlane.xlu0 %2429
    %v2431 = vsub.f32 %v2419, %v2424
    %v2432 = vsub.f32 %v2420, %v2427
    %v2433 = vsub.f32 %v2421, %v2430
    %v2434 = vmul.f32 %v2431, 1.442695
    %v2435 = vpow.pop %v2434
    %v2436 = vmul.f32 %v2432, 1.442695
    %v2437 = vpow.pop %v2436
    %v2438 = vmul.f32 %v2433, 1.442695
    %v2439 = vpow.pop %v2438
    %v2440 = vsel %vm384, %v2435, 0.0
    %2441 = vadd.xlane.f32.xlu0 %v2440
    %v2442 = vpop.xlane.xlu0 %2441
    %v2443 = vsel %vm384, %v2437, 0.0
    %2444 = vadd.xlane.f32.xlu0 %v2443
    %v2445 = vpop.xlane.xlu0 %2444
    %v2446 = vsel %vm391, %v2439, 0.0
    %2447 = vadd.xlane.f32.xlu0 %v2446
    %v2448 = vpop.xlane.xlu0 %2447
    %v2449 = vrcp.pop %v2442
    %v2450 = vrcp.pop %v2445
    %v2451 = vrcp.pop %v2448
    %v2452 = vmul.f32 %v2435, %v2449
    %v2453 = vmul.f32 %v2437, %v2450
    %v2454 = vmul.f32 %v2439, %v2451
    %2455 = vrot.lane.b32.xlu0 %v2364, 64
    %v2456 = vpop.permute.xlu0 %2455
    %2457 = vrot.lane.b32.xlu0 %v2367, 64
    %v2458 = vpop.permute.xlu0 %2457
    %2459 = vrot.lane.b32.xlu0 %v2370, 64
    %v2460 = vpop.permute.xlu0 %2459
    %v2464 = vsel %vm384, %v2452, 0
    %v2467 = vsel %vm384, %v2453, 0
    %v2470 = vsel %vm384, %v2454, 0
    %v2472 = vsel %vm436, %v2460, 0
    %2474 = vmatpush.msra.mxu0 0.0
    %2475 = vmatpush.msra.mxu0 0.0
    %2476 = vmatpush.msra.mxu0 0.0
    %2477 = vmatpush.msra.mxu0 0.0
    %2478 = vmatpush.msra.mxu0 0.0
    %2479 = vmatpush.msra.mxu0 0.0
    %2480 = vmatpush.msra.mxu0 0.0
    %2481 = vmatpush.msra.mxu0 0.0
    %2482 = vmatpush.msra.mxu0 0.0
    %2483 = vmatpush.msra.mxu0 0.0
    %2484 = vmatpush.msra.mxu0 0.0
    %2485 = vmatpush.msra.mxu0 0.0
    %2486 = vmatpush.msra.mxu0 0.0
    %2487 = vmatpush.msra.mxu0 %v2472
    %2488 = vmatpush.msra.mxu0 %v2458
    %2489 = vmatpush.msra.mxu0 %v2456
    %2490 = vmatmul.f32.gmra.mxu0 %v2464
    %v2491 = vpop.f32.mrf.mxu0
    %v2492 = vadd.f32 0.0, %v2491
    %2493 = vmatmul.f32.gmra.mxu0 %v2467
    %v2494 = vpop.f32.mrf.mxu0
    %v2495 = vadd.f32 0.0, %v2494
    %2496 = vmatmul.f32.gmra.mxu0 %v2470
    %v2497 = vpop.f32.mrf.mxu0
    %v2498 = vadd.f32 0.0, %v2497
    %2499 = vdwg.mxu0
    %v2501 = vsel %vm342, %v2492, 0
    %v2504 = vsel %vm342, %v2495, 0
    %v2507 = vsel %vm342, %v2498, 0
    %2509 = vmatpush.msra.mxu0 0.0
    %2510 = vmatpush.msra.mxu0 0.0
    %2511 = vmatpush.msra.mxu0 0.0
    %2512 = vmatpush.msra.mxu0 0.0
    %2513 = vmatpush.msra.mxu0 0.0
    %2514 = vmatpush.msra.mxu0 0.0
    %2515 = vmatpush.msra.mxu0 0.0
    %2516 = vmatpush.msra.mxu0 0.0
    %2517 = vmatpush.msra.mxu0 0.0
    %2518 = vmatpush.msra.mxu0 0.0
    %2519 = vmatpush.msra.mxu0 0.0
    %2520 = vmatpush.msra.mxu0 0.0
    %2521 = vmatpush.msra.mxu0 0.0
    %2522 = vmatpush.msra.mxu0 0.0
    %2523 = vmatpush.msra.mxu0 0.0
    %2524 = vmatpush.msra.mxu0 %v83
    %2525 = vmatmul.f32.gmra.mxu0 %v2501
    %v2526 = vpop.f32.mrf.mxu0
    %v2527 = vadd.f32 0.0, %v2526
    %2528 = vmatmul.f32.gmra.mxu0 %v2504
    %v2529 = vpop.f32.mrf.mxu0
    %v2530 = vadd.f32 0.0, %v2529
    %2531 = vmatmul.f32.gmra.mxu0 %v2507
    %v2532 = vpop.f32.mrf.mxu0
    %v2533 = vadd.f32 0.0, %v2532
    %2534 = vdwg.mxu0
    %v2535 = vadd.f32 %v332, %v2527
    %v2536 = vadd.f32 %v332, %v2530
    %v2537 = vadd.f32 %v332, %v2533
    %2538 = vrot.lane.b32.xlu0 %v2364, 120
    %v2539 = vpop.permute.xlu0 %2538
    %2540 = vrot.lane.b32.xlu0 %v2367, 120
    %v2541 = vpop.permute.xlu0 %2540
    %2542 = vrot.lane.b32.xlu0 %v2370, 120
    %v2543 = vpop.permute.xlu0 %2542
    %2544 = vrot.lane.b32.xlu0 %v2364, 88
    %v2545 = vpop.permute.xlu0 %2544
    %2546 = vrot.lane.b32.xlu0 %v2367, 88
    %v2547 = vpop.permute.xlu0 %2546
    %2548 = vrot.lane.b32.xlu0 %v2370, 88
    %v2549 = vpop.permute.xlu0 %2548
    %v2550 = vsel %vm342, %v2539, 0
    %v2552 = vsel %vm342, %v2541, 0
    %v2554 = vsel %vm342, %v2543, 0
    %v2556 = vsel %vm342, %v2545, 0
    %v2558 = vsel %vm342, %v2547, 0
    %v2560 = vsel %vm342, %v2549, 0
    %2562 = vmatpush.xpose.msra.mxu0 0.0
    %2563 = vmatpush.xpose.msra.mxu0 0.0
    %2564 = vmatpush.xpose.msra.mxu0 0.0
    %2565 = vmatpush.xpose.msra.mxu0 0.0
    %2566 = vmatpush.xpose.msra.mxu0 0.0
    %2567 = vmatpush.xpose.msra.mxu0 0.0
    %2568 = vmatpush.xpose.msra.mxu0 0.0
    %2569 = vmatpush.xpose.msra.mxu0 0.0
    %2570 = vmatpush.xpose.msra.mxu0 0.0
    %2571 = vmatpush.xpose.msra.mxu0 0.0
    %2572 = vmatpush.xpose.msra.mxu0 0.0
    %2573 = vmatpush.xpose.msra.mxu0 0.0
    %2574 = vmatpush.xpose.msra.mxu0 0.0
    %2575 = vmatpush.xpose.msra.mxu0 %v2560
    %2576 = vmatpush.xpose.msra.mxu0 %v2558
    %2577 = vmatpush.xpose.msra.mxu0 %v2556
    %2578 = vmatmul.f32.gmra.mxu0 %v2550
    %v2579 = vpop.f32.mrf.mxu0
    %v2580 = vadd.f32 0.0, %v2579
    %2581 = vmatmul.f32.gmra.mxu0 %v2552
    %v2582 = vpop.f32.mrf.mxu0
    %v2583 = vadd.f32 0.0, %v2582
    %2584 = vmatmul.f32.gmra.mxu0 %v2554
    %v2585 = vpop.f32.mrf.mxu0
    %v2586 = vadd.f32 0.0, %v2585
    %2587 = vdwg.mxu0
    %v2588 = vmul.f32 %v2580, 0.35355338
    %v2589 = vmul.f32 %v2583, 0.35355338
    %v2590 = vmul.f32 %v2586, 0.35355338
    %v2591 = vsel %vm384, %v2588, -inf
    %2592 = vmax.xlane.f32.xlu0 %v2591
    %v2593 = vpop.xlane.xlu0 %2592
    %v2594 = vsel %vm384, %v2589, -inf
    %2595 = vmax.xlane.f32.xlu0 %v2594
    %v2596 = vpop.xlane.xlu0 %2595
    %v2597 = vsel %vm391, %v2590, -inf
    %2598 = vmax.xlane.f32.xlu0 %v2597
    %v2599 = vpop.xlane.xlu0 %2598
    %v2600 = vsub.f32 %v2588, %v2593
    %v2601 = vsub.f32 %v2589, %v2596
    %v2602 = vsub.f32 %v2590, %v2599
    %v2603 = vmul.f32 %v2600, 1.442695
    %v2604 = vpow.pop %v2603
    %v2605 = vmul.f32 %v2601, 1.442695
    %v2606 = vpow.pop %v2605
    %v2607 = vmul.f32 %v2602, 1.442695
    %v2608 = vpow.pop %v2607
    %v2609 = vsel %vm384, %v2604, 0.0
    %2610 = vadd.xlane.f32.xlu0 %v2609
    %v2611 = vpop.xlane.xlu0 %2610
    %v2612 = vsel %vm384, %v2606, 0.0
    %2613 = vadd.xlane.f32.xlu0 %v2612
    %v2614 = vpop.xlane.xlu0 %2613
    %v2615 = vsel %vm391, %v2608, 0.0
    %2616 = vadd.xlane.f32.xlu0 %v2615
    %v2617 = vpop.xlane.xlu0 %2616
    %v2618 = vrcp.pop %v2611
    %v2619 = vrcp.pop %v2614
    %v2620 = vrcp.pop %v2617
    %v2621 = vmul.f32 %v2604, %v2618
    %v2622 = vmul.f32 %v2606, %v2619
    %v2623 = vmul.f32 %v2608, %v2620
    %2624 = vrot.lane.b32.xlu0 %v2364, 56
    %v2625 = vpop.permute.xlu0 %2624
    %2626 = vrot.lane.b32.xlu0 %v2367, 56
    %v2627 = vpop.permute.xlu0 %2626
    %2628 = vrot.lane.b32.xlu0 %v2370, 56
    %v2629 = vpop.permute.xlu0 %2628
    %v2633 = vsel %vm384, %v2621, 0
    %v2636 = vsel %vm384, %v2622, 0
    %v2639 = vsel %vm384, %v2623, 0
    %v2641 = vsel %vm436, %v2629, 0
    %2643 = vmatpush.msra.mxu0 0.0
    %2644 = vmatpush.msra.mxu0 0.0
    %2645 = vmatpush.msra.mxu0 0.0
    %2646 = vmatpush.msra.mxu0 0.0
    %2647 = vmatpush.msra.mxu0 0.0
    %2648 = vmatpush.msra.mxu0 0.0
    %2649 = vmatpush.msra.mxu0 0.0
    %2650 = vmatpush.msra.mxu0 0.0
    %2651 = vmatpush.msra.mxu0 0.0
    %2652 = vmatpush.msra.mxu0 0.0
    %2653 = vmatpush.msra.mxu0 0.0
    %2654 = vmatpush.msra.mxu0 0.0
    %2655 = vmatpush.msra.mxu0 0.0
    %2656 = vmatpush.msra.mxu0 %v2641
    %2657 = vmatpush.msra.mxu0 %v2627
    %2658 = vmatpush.msra.mxu0 %v2625
    %2659 = vmatmul.f32.gmra.mxu0 %v2633
    %v2660 = vpop.f32.mrf.mxu0
    %v2661 = vadd.f32 0.0, %v2660
    %2662 = vmatmul.f32.gmra.mxu0 %v2636
    %v2663 = vpop.f32.mrf.mxu0
    %v2664 = vadd.f32 0.0, %v2663
    %2665 = vmatmul.f32.gmra.mxu0 %v2639
    %v2666 = vpop.f32.mrf.mxu0
    %v2667 = vadd.f32 0.0, %v2666
    %2668 = vdwg.mxu0
    %v2670 = vsel %vm342, %v2661, 0
    %v2673 = vsel %vm342, %v2664, 0
    %v2676 = vsel %vm342, %v2667, 0
    %2678 = vmatpush.msra.mxu0 0.0
    %2679 = vmatpush.msra.mxu0 0.0
    %2680 = vmatpush.msra.mxu0 0.0
    %2681 = vmatpush.msra.mxu0 0.0
    %2682 = vmatpush.msra.mxu0 0.0
    %2683 = vmatpush.msra.mxu0 0.0
    %2684 = vmatpush.msra.mxu0 0.0
    %2685 = vmatpush.msra.mxu0 0.0
    %2686 = vmatpush.msra.mxu0 0.0
    %2687 = vmatpush.msra.mxu0 0.0
    %2688 = vmatpush.msra.mxu0 0.0
    %2689 = vmatpush.msra.mxu0 0.0
    %2690 = vmatpush.msra.mxu0 0.0
    %2691 = vmatpush.msra.mxu0 0.0
    %2692 = vmatpush.msra.mxu0 0.0
    %2693 = vmatpush.msra.mxu0 %v84
    %2694 = vmatmul.f32.gmra.mxu0 %v2670
    %v2695 = vpop.f32.mrf.mxu0
    %v2696 = vadd.f32 0.0, %v2695
    %2697 = vmatmul.f32.gmra.mxu0 %v2673
    %v2698 = vpop.f32.mrf.mxu0
    %v2699 = vadd.f32 0.0, %v2698
    %2700 = vmatmul.f32.gmra.mxu0 %v2676
    %v2701 = vpop.f32.mrf.mxu0
    %v2702 = vadd.f32 0.0, %v2701
    %2703 = vdwg.mxu0
    %v2704 = vadd.f32 %v2535, %v2696
    %v2705 = vadd.f32 %v2536, %v2699
    %v2706 = vadd.f32 %v2537, %v2702
    %2707 = vrot.lane.b32.xlu0 %v2364, 112
    %v2708 = vpop.permute.xlu0 %2707
    %2709 = vrot.lane.b32.xlu0 %v2367, 112
    %v2710 = vpop.permute.xlu0 %2709
    %2711 = vrot.lane.b32.xlu0 %v2370, 112
    %v2712 = vpop.permute.xlu0 %2711
    %2713 = vrot.lane.b32.xlu0 %v2364, 80
    %v2714 = vpop.permute.xlu0 %2713
    %2715 = vrot.lane.b32.xlu0 %v2367, 80
    %v2716 = vpop.permute.xlu0 %2715
    %2717 = vrot.lane.b32.xlu0 %v2370, 80
    %v2718 = vpop.permute.xlu0 %2717
    %v2719 = vsel %vm342, %v2708, 0
    %v2721 = vsel %vm342, %v2710, 0
    %v2723 = vsel %vm342, %v2712, 0
    %v2725 = vsel %vm342, %v2714, 0
    %v2727 = vsel %vm342, %v2716, 0
    %v2729 = vsel %vm342, %v2718, 0
    %2731 = vmatpush.xpose.msra.mxu0 0.0
    %2732 = vmatpush.xpose.msra.mxu0 0.0
    %2733 = vmatpush.xpose.msra.mxu0 0.0
    %2734 = vmatpush.xpose.msra.mxu0 0.0
    %2735 = vmatpush.xpose.msra.mxu0 0.0
    %2736 = vmatpush.xpose.msra.mxu0 0.0
    %2737 = vmatpush.xpose.msra.mxu0 0.0
    %2738 = vmatpush.xpose.msra.mxu0 0.0
    %2739 = vmatpush.xpose.msra.mxu0 0.0
    %2740 = vmatpush.xpose.msra.mxu0 0.0
    %2741 = vmatpush.xpose.msra.mxu0 0.0
    %2742 = vmatpush.xpose.msra.mxu0 0.0
    %2743 = vmatpush.xpose.msra.mxu0 0.0
    %2744 = vmatpush.xpose.msra.mxu0 %v2729
    %2745 = vmatpush.xpose.msra.mxu0 %v2727
    %2746 = vmatpush.xpose.msra.mxu0 %v2725
    %2747 = vmatmul.f32.gmra.mxu0 %v2719
    %v2748 = vpop.f32.mrf.mxu0
    %v2749 = vadd.f32 0.0, %v2748
    %2750 = vmatmul.f32.gmra.mxu0 %v2721
    %v2751 = vpop.f32.mrf.mxu0
    %v2752 = vadd.f32 0.0, %v2751
    %2753 = vmatmul.f32.gmra.mxu0 %v2723
    %v2754 = vpop.f32.mrf.mxu0
    %v2755 = vadd.f32 0.0, %v2754
    %2756 = vdwg.mxu0
    %v2757 = vmul.f32 %v2749, 0.35355338
    %v2758 = vmul.f32 %v2752, 0.35355338
    %v2759 = vmul.f32 %v2755, 0.35355338
    %v2760 = vsel %vm384, %v2757, -inf
    %2761 = vmax.xlane.f32.xlu0 %v2760
    %v2762 = vpop.xlane.xlu0 %2761
    %v2763 = vsel %vm384, %v2758, -inf
    %2764 = vmax.xlane.f32.xlu0 %v2763
    %v2765 = vpop.xlane.xlu0 %2764
    %v2766 = vsel %vm391, %v2759, -inf
    %2767 = vmax.xlane.f32.xlu0 %v2766
    %v2768 = vpop.xlane.xlu0 %2767
    %v2769 = vsub.f32 %v2757, %v2762
    %v2770 = vsub.f32 %v2758, %v2765
    %v2771 = vsub.f32 %v2759, %v2768
    %v2772 = vmul.f32 %v2769, 1.442695
    %v2773 = vpow.pop %v2772
    %v2774 = vmul.f32 %v2770, 1.442695
    %v2775 = vpow.pop %v2774
    %v2776 = vmul.f32 %v2771, 1.442695
    %v2777 = vpow.pop %v2776
    %v2778 = vsel %vm384, %v2773, 0.0
    %2779 = vadd.xlane.f32.xlu0 %v2778
    %v2780 = vpop.xlane.xlu0 %2779
    %v2781 = vsel %vm384, %v2775, 0.0
    %2782 = vadd.xlane.f32.xlu0 %v2781
    %v2783 = vpop.xlane.xlu0 %2782
    %v2784 = vsel %vm391, %v2777, 0.0
    %2785 = vadd.xlane.f32.xlu0 %v2784
    %v2786 = vpop.xlane.xlu0 %2785
    %v2787 = vrcp.pop %v2780
    %v2788 = vrcp.pop %v2783
    %v2789 = vrcp.pop %v2786
    %v2790 = vmul.f32 %v2773, %v2787
    %v2791 = vmul.f32 %v2775, %v2788
    %v2792 = vmul.f32 %v2777, %v2789
    %2793 = vrot.lane.b32.xlu0 %v2364, 48
    %v2794 = vpop.permute.xlu0 %2793
    %2795 = vrot.lane.b32.xlu0 %v2367, 48
    %v2796 = vpop.permute.xlu0 %2795
    %2797 = vrot.lane.b32.xlu0 %v2370, 48
    %v2798 = vpop.permute.xlu0 %2797
    %v2802 = vsel %vm384, %v2790, 0
    %v2805 = vsel %vm384, %v2791, 0
    %v2808 = vsel %vm384, %v2792, 0
    %v2810 = vsel %vm436, %v2798, 0
    %2812 = vmatpush.msra.mxu0 0.0
    %2813 = vmatpush.msra.mxu0 0.0
    %2814 = vmatpush.msra.mxu0 0.0
    %2815 = vmatpush.msra.mxu0 0.0
    %2816 = vmatpush.msra.mxu0 0.0
    %2817 = vmatpush.msra.mxu0 0.0
    %2818 = vmatpush.msra.mxu0 0.0
    %2819 = vmatpush.msra.mxu0 0.0
    %2820 = vmatpush.msra.mxu0 0.0
    %2821 = vmatpush.msra.mxu0 0.0
    %2822 = vmatpush.msra.mxu0 0.0
    %2823 = vmatpush.msra.mxu0 0.0
    %2824 = vmatpush.msra.mxu0 0.0
    %2825 = vmatpush.msra.mxu0 %v2810
    %2826 = vmatpush.msra.mxu0 %v2796
    %2827 = vmatpush.msra.mxu0 %v2794
    %2828 = vmatmul.f32.gmra.mxu0 %v2802
    %v2829 = vpop.f32.mrf.mxu0
    %v2830 = vadd.f32 0.0, %v2829
    %2831 = vmatmul.f32.gmra.mxu0 %v2805
    %v2832 = vpop.f32.mrf.mxu0
    %v2833 = vadd.f32 0.0, %v2832
    %2834 = vmatmul.f32.gmra.mxu0 %v2808
    %v2835 = vpop.f32.mrf.mxu0
    %v2836 = vadd.f32 0.0, %v2835
    %2837 = vdwg.mxu0
    %v2839 = vsel %vm342, %v2830, 0
    %v2842 = vsel %vm342, %v2833, 0
    %v2845 = vsel %vm342, %v2836, 0
    %2847 = vmatpush.msra.mxu0 0.0
    %2848 = vmatpush.msra.mxu0 0.0
    %2849 = vmatpush.msra.mxu0 0.0
    %2850 = vmatpush.msra.mxu0 0.0
    %2851 = vmatpush.msra.mxu0 0.0
    %2852 = vmatpush.msra.mxu0 0.0
    %2853 = vmatpush.msra.mxu0 0.0
    %2854 = vmatpush.msra.mxu0 0.0
    %2855 = vmatpush.msra.mxu0 0.0
    %2856 = vmatpush.msra.mxu0 0.0
    %2857 = vmatpush.msra.mxu0 0.0
    %2858 = vmatpush.msra.mxu0 0.0
    %2859 = vmatpush.msra.mxu0 0.0
    %2860 = vmatpush.msra.mxu0 0.0
    %2861 = vmatpush.msra.mxu0 0.0
    %2862 = vmatpush.msra.mxu0 %v85
    %2863 = vmatmul.f32.gmra.mxu0 %v2839
    %v2864 = vpop.f32.mrf.mxu0
    %v2865 = vadd.f32 0.0, %v2864
    %2866 = vmatmul.f32.gmra.mxu0 %v2842
    %v2867 = vpop.f32.mrf.mxu0
    %v2868 = vadd.f32 0.0, %v2867
    %2869 = vmatmul.f32.gmra.mxu0 %v2845
    %v2870 = vpop.f32.mrf.mxu0
    %v2871 = vadd.f32 0.0, %v2870
    %2872 = vdwg.mxu0
    %v2873 = vadd.f32 %v2704, %v2865
    %v2874 = vadd.f32 %v2705, %v2868
    %v2875 = vadd.f32 %v2706, %v2871
    %2876 = vrot.lane.b32.xlu0 %v2364, 104
    %v2877 = vpop.permute.xlu0 %2876
    %2878 = vrot.lane.b32.xlu0 %v2367, 104
    %v2879 = vpop.permute.xlu0 %2878
    %2880 = vrot.lane.b32.xlu0 %v2370, 104
    %v2881 = vpop.permute.xlu0 %2880
    %2882 = vrot.lane.b32.xlu0 %v2364, 72
    %v2883 = vpop.permute.xlu0 %2882
    %2884 = vrot.lane.b32.xlu0 %v2367, 72
    %v2885 = vpop.permute.xlu0 %2884
    %2886 = vrot.lane.b32.xlu0 %v2370, 72
    %v2887 = vpop.permute.xlu0 %2886
    %v2888 = vsel %vm342, %v2877, 0
    %v2890 = vsel %vm342, %v2879, 0
    %v2892 = vsel %vm342, %v2881, 0
    %v2894 = vsel %vm342, %v2883, 0
    %v2896 = vsel %vm342, %v2885, 0
    %v2898 = vsel %vm342, %v2887, 0
    %2900 = vmatpush.xpose.msra.mxu0 0.0
    %2901 = vmatpush.xpose.msra.mxu0 0.0
    %2902 = vmatpush.xpose.msra.mxu0 0.0
    %2903 = vmatpush.xpose.msra.mxu0 0.0
    %2904 = vmatpush.xpose.msra.mxu0 0.0
    %2905 = vmatpush.xpose.msra.mxu0 0.0
    %2906 = vmatpush.xpose.msra.mxu0 0.0
    %2907 = vmatpush.xpose.msra.mxu0 0.0
    %2908 = vmatpush.xpose.msra.mxu0 0.0
    %2909 = vmatpush.xpose.msra.mxu0 0.0
    %2910 = vmatpush.xpose.msra.mxu0 0.0
    %2911 = vmatpush.xpose.msra.mxu0 0.0
    %2912 = vmatpush.xpose.msra.mxu0 0.0
    %2913 = vmatpush.xpose.msra.mxu0 %v2898
    %2914 = vmatpush.xpose.msra.mxu0 %v2896
    %2915 = vmatpush.xpose.msra.mxu0 %v2894
    %2916 = vmatmul.f32.gmra.mxu0 %v2888
    %v2917 = vpop.f32.mrf.mxu0
    %v2918 = vadd.f32 0.0, %v2917
    %2919 = vmatmul.f32.gmra.mxu0 %v2890
    %v2920 = vpop.f32.mrf.mxu0
    %v2921 = vadd.f32 0.0, %v2920
    %2922 = vmatmul.f32.gmra.mxu0 %v2892
    %v2923 = vpop.f32.mrf.mxu0
    %v2924 = vadd.f32 0.0, %v2923
    %2925 = vdwg.mxu0
    %v2926 = vmul.f32 %v2918, 0.35355338
    %v2927 = vmul.f32 %v2921, 0.35355338
    %v2928 = vmul.f32 %v2924, 0.35355338
    %v2929 = vsel %vm384, %v2926, -inf
    %2930 = vmax.xlane.f32.xlu0 %v2929
    %v2931 = vpop.xlane.xlu0 %2930
    %v2932 = vsel %vm384, %v2927, -inf
    %2933 = vmax.xlane.f32.xlu0 %v2932
    %v2934 = vpop.xlane.xlu0 %2933
    %v2935 = vsel %vm391, %v2928, -inf
    %2936 = vmax.xlane.f32.xlu0 %v2935
    %v2937 = vpop.xlane.xlu0 %2936
    %v2938 = vsub.f32 %v2926, %v2931
    %v2939 = vsub.f32 %v2927, %v2934
    %v2940 = vsub.f32 %v2928, %v2937
    %v2941 = vmul.f32 %v2938, 1.442695
    %v2942 = vpow.pop %v2941
    %v2943 = vmul.f32 %v2939, 1.442695
    %v2944 = vpow.pop %v2943
    %v2945 = vmul.f32 %v2940, 1.442695
    %v2946 = vpow.pop %v2945
    %v2947 = vsel %vm384, %v2942, 0.0
    %2948 = vadd.xlane.f32.xlu0 %v2947
    %v2949 = vpop.xlane.xlu0 %2948
    %v2950 = vsel %vm384, %v2944, 0.0
    %2951 = vadd.xlane.f32.xlu0 %v2950
    %v2952 = vpop.xlane.xlu0 %2951
    %v2953 = vsel %vm391, %v2946, 0.0
    %2954 = vadd.xlane.f32.xlu0 %v2953
    %v2955 = vpop.xlane.xlu0 %2954
    %v2956 = vrcp.pop %v2949
    %v2957 = vrcp.pop %v2952
    %v2958 = vrcp.pop %v2955
    %v2959 = vmul.f32 %v2942, %v2956
    %v2960 = vmul.f32 %v2944, %v2957
    %v2961 = vmul.f32 %v2946, %v2958
    %2962 = vrot.lane.b32.xlu0 %v2364, 40
    %v2963 = vpop.permute.xlu0 %2962
    %2964 = vrot.lane.b32.xlu0 %v2367, 40
    %v2965 = vpop.permute.xlu0 %2964
    %2966 = vrot.lane.b32.xlu0 %v2370, 40
    %v2967 = vpop.permute.xlu0 %2966
    %v2971 = vsel %vm384, %v2959, 0
    %v2974 = vsel %vm384, %v2960, 0
    %v2977 = vsel %vm384, %v2961, 0
    %v2979 = vsel %vm436, %v2967, 0
    %2981 = vmatpush.msra.mxu0 0.0
    %2982 = vmatpush.msra.mxu0 0.0
    %2983 = vmatpush.msra.mxu0 0.0
    %2984 = vmatpush.msra.mxu0 0.0
    %2985 = vmatpush.msra.mxu0 0.0
    %2986 = vmatpush.msra.mxu0 0.0
    %2987 = vmatpush.msra.mxu0 0.0
    %2988 = vmatpush.msra.mxu0 0.0
    %2989 = vmatpush.msra.mxu0 0.0
    %2990 = vmatpush.msra.mxu0 0.0
    %2991 = vmatpush.msra.mxu0 0.0
    %2992 = vmatpush.msra.mxu0 0.0
    %2993 = vmatpush.msra.mxu0 0.0
    %2994 = vmatpush.msra.mxu0 %v2979
    %2995 = vmatpush.msra.mxu0 %v2965
    %2996 = vmatpush.msra.mxu0 %v2963
    %2997 = vmatmul.f32.gmra.mxu0 %v2971
    %v2998 = vpop.f32.mrf.mxu0
    %v2999 = vadd.f32 0.0, %v2998
    %3000 = vmatmul.f32.gmra.mxu0 %v2974
    %v3001 = vpop.f32.mrf.mxu0
    %v3002 = vadd.f32 0.0, %v3001
    %3003 = vmatmul.f32.gmra.mxu0 %v2977
    %v3004 = vpop.f32.mrf.mxu0
    %v3005 = vadd.f32 0.0, %v3004
    %3006 = vdwg.mxu0
    %v3008 = vsel %vm342, %v2999, 0
    %v3011 = vsel %vm342, %v3002, 0
    %v3014 = vsel %vm342, %v3005, 0
    %3016 = vmatpush.msra.mxu0 0.0
    %3017 = vmatpush.msra.mxu0 0.0
    %3018 = vmatpush.msra.mxu0 0.0
    %3019 = vmatpush.msra.mxu0 0.0
    %3020 = vmatpush.msra.mxu0 0.0
    %3021 = vmatpush.msra.mxu0 0.0
    %3022 = vmatpush.msra.mxu0 0.0
    %3023 = vmatpush.msra.mxu0 0.0
    %3024 = vmatpush.msra.mxu0 0.0
    %3025 = vmatpush.msra.mxu0 0.0
    %3026 = vmatpush.msra.mxu0 0.0
    %3027 = vmatpush.msra.mxu0 0.0
    %3028 = vmatpush.msra.mxu0 0.0
    %3029 = vmatpush.msra.mxu0 0.0
    %3030 = vmatpush.msra.mxu0 0.0
    %3031 = vmatpush.msra.mxu0 %v86
    %3032 = vmatmul.f32.gmra.mxu0 %v3008
    %v3033 = vpop.f32.mrf.mxu0
    %v3034 = vadd.f32 0.0, %v3033
    %3035 = vmatmul.f32.gmra.mxu0 %v3011
    %v3036 = vpop.f32.mrf.mxu0
    %v3037 = vadd.f32 0.0, %v3036
    %3038 = vmatmul.f32.gmra.mxu0 %v3014
    %v3039 = vpop.f32.mrf.mxu0
    %v3040 = vadd.f32 0.0, %v3039
    %3041 = vdwg.mxu0
    %v3042 = vadd.f32 %v2873, %v3034
    %v3043 = vadd.f32 %v2874, %v3037
    %v3044 = vadd.f32 %v2875, %v3040
    %v3045 = vadd.f32 %v2262, %v3042
    %v3046 = vadd.f32 %v2263, %v3043
    %v3047 = vadd.f32 %v2264, %v3044
    %v3048 = vsel %vm207, %v3045, 0.0
    %3049 = vadd.xlane.f32.xlu0 %v3048
    %v3050 = vpop.xlane.xlu0 %3049
    %v3051 = vsel %vm207, %v3046, 0.0
    %3052 = vadd.xlane.f32.xlu0 %v3051
    %v3053 = vpop.xlane.xlu0 %3052
    %v3054 = vsel %vm214, %v3047, 0.0
    %3055 = vadd.xlane.f32.xlu0 %v3054
    %v3056 = vpop.xlane.xlu0 %3055
    %v3057 = vmul.f32 %v3050, %v224
    %v3058 = vmul.f32 %v3053, %v224
    %v3059 = vmul.f32 %v3056, %v224
    %v3060 = vsub.f32 %v3045, %v3057
    %v3061 = vsub.f32 %v3046, %v3058
    %v3062 = vsub.f32 %v3047, %v3059
    %v3063 = vmul.f32 %v3060, %v3060
    %v3064 = vmul.f32 %v3061, %v3061
    %v3065 = vmul.f32 %v3062, %v3062
    %v3066 = vsel %vm207, %v3063, 0.0
    %3067 = vadd.xlane.f32.xlu0 %v3066
    %v3068 = vpop.xlane.xlu0 %3067
    %v3069 = vsel %vm207, %v3064, 0.0
    %3070 = vadd.xlane.f32.xlu0 %v3069
    %v3071 = vpop.xlane.xlu0 %3070
    %v3072 = vsel %vm214, %v3065, 0.0
    %3073 = vadd.xlane.f32.xlu0 %v3072
    %v3074 = vpop.xlane.xlu0 %3073
    %v3075 = vmul.f32 %v3068, %v224
    %v3076 = vmul.f32 %v3071, %v224
    %v3077 = vmul.f32 %v3074, %v224
    %v3078 = vadd.f32 %v3075, 1e-05
    %v3079 = vadd.f32 %v3076, 1e-05
    %v3080 = vadd.f32 %v3077, 1e-05
    %v3081 = vrsqrt.pop %v3078
    %v3082 = vmul.f32 %v3081, %v3078
    %v3083 = vmul.f32 %v3082, %v3081
    %v3084 = vmul.f32 0.5, %v3083
    %v3085 = vsub.f32 1.5, %v3084
    %v3086 = vmul.f32 %v3081, %v3085
    %vm3087 = vweird.f32 %v3078
    %vm3088 = vweird.f32 %v3081
    %vm3089 = vmor %vm3087, %vm3088
    %v3090 = vsel %vm3089, %v3081, %v3086
    %v3091 = vrsqrt.pop %v3079
    %v3092 = vmul.f32 %v3091, %v3079
    %v3093 = vmul.f32 %v3092, %v3091
    %v3094 = vmul.f32 0.5, %v3093
    %v3095 = vsub.f32 1.5, %v3094
    %v3096 = vmul.f32 %v3091, %v3095
    %vm3097 = vweird.f32 %v3079
    %vm3098 = vweird.f32 %v3091
    %vm3099 = vmor %vm3097, %vm3098
    %v3100 = vsel %vm3099, %v3091, %v3096
    %v3101 = vrsqrt.pop %v3080
    %v3102 = vmul.f32 %v3101, %v3080
    %v3103 = vmul.f32 %v3102, %v3101
    %v3104 = vmul.f32 0.5, %v3103
    %v3105 = vsub.f32 1.5, %v3104
    %v3106 = vmul.f32 %v3101, %v3105
    %vm3107 = vweird.f32 %v3080
    %vm3108 = vweird.f32 %v3101
    %vm3109 = vmor %vm3107, %vm3108
    %v3110 = vsel %vm3109, %v3101, %v3106
    %v3111 = vmul.f32 %v3060, %v3090
    %v3112 = vmul.f32 %v3061, %v3100
    %v3113 = vmul.f32 %v3062, %v3110
    %v3114 = vmul.f32 %v3111, %v1080
    %v3115 = vmul.f32 %v3112, %v1080
    %v3116 = vmul.f32 %v3113, %v1080
    %v3117 = vadd.f32 %v3114, %v1086
    %v3118 = vadd.f32 %v3115, %v1086
    %v3119 = vadd.f32 %v3116, %v1086
    %v3121 = vsel %vm207, %v3117, 0
    %v3124 = vsel %vm207, %v3118, 0
    %v3127 = vsel %vm207, %v3119, 0
    %3129 = vmatpush.msra.mxu0 0.0
    %3130 = vmatpush.msra.mxu0 0.0
    %3131 = vmatpush.msra.mxu0 0.0
    %3132 = vmatpush.msra.mxu0 0.0
    %3133 = vmatpush.msra.mxu0 0.0
    %3134 = vmatpush.msra.mxu0 0.0
    %3135 = vmatpush.msra.mxu0 0.0
    %3136 = vmatpush.msra.mxu0 0.0
    %3137 = vmatpush.msra.mxu0 0.0
    %3138 = vmatpush.msra.mxu0 0.0
    %3139 = vmatpush.msra.mxu0 0.0
    %3140 = vmatpush.msra.mxu0 0.0
    %3141 = vmatpush.msra.mxu0 %v93
    %3142 = vmatpush.msra.mxu0 %v92
    %3143 = vmatpush.msra.mxu0 %v91
    %3144 = vmatpush.msra.mxu0 %v90
    %3145 = vmatmul.f32.gmra.mxu0 %v3121
    %v3146 = vpop.f32.mrf.mxu0
    %v3147 = vadd.f32 %v1092, %v3146
    %3148 = vmatmul.f32.gmra.mxu0 %v3124
    %v3149 = vpop.f32.mrf.mxu0
    %v3150 = vadd.f32 %v1092, %v3149
    %3151 = vmatmul.f32.gmra.mxu0 %v3127
    %v3152 = vpop.f32.mrf.mxu0
    %v3153 = vadd.f32 %v1092, %v3152
    %3154 = vdwg.mxu0
    %v3155 = vmul.f32 %v3147, %v3147
    %v3156 = vmul.f32 %v3150, %v3150
    %v3157 = vmul.f32 %v3153, %v3153
    %v3158 = vmul.f32 %v3147, %v3155
    %v3159 = vmul.f32 %v3150, %v3156
    %v3160 = vmul.f32 %v3153, %v3157
    %v3161 = vmul.f32 %v3158, 0.044715
    %v3162 = vmul.f32 %v3159, 0.044715
    %v3163 = vmul.f32 %v3160, 0.044715
    %v3164 = vadd.f32 %v3147, %v3161
    %v3165 = vadd.f32 %v3150, %v3162
    %v3166 = vadd.f32 %v3153, %v3163
    %v3167 = vmul.f32 %v3164, 0.7978846
    %v3168 = vmul.f32 %v3165, 0.7978846
    %v3169 = vmul.f32 %v3166, 0.7978846
    %v3170 = vtanh.pop %v3167
    %v3171 = vtanh.pop %v3168
    %v3172 = vtanh.pop %v3169
    %v3173 = vadd.f32 %v3170, 1.0
    %v3174 = vadd.f32 %v3171, 1.0
    %v3175 = vadd.f32 %v3172, 1.0
    %v3176 = vmul.f32 %v3173, 0.5
    %v3177 = vmul.f32 %v3174, 0.5
    %v3178 = vmul.f32 %v3175, 0.5
    %v3179 = vmul.f32 %v3147, %v3176
    %v3180 = vmul.f32 %v3150, %v3177
    %v3181 = vmul.f32 %v3153, %v3178
    %v3183 = vsel %vm1159, %v3179, 0
    %v3186 = vsel %vm1159, %v3180, 0
    %v3189 = vsel %vm1159, %v3181, 0
    %3191 = vmatpush.msra.mxu0 0.0
    %3192 = vmatpush.msra.mxu0 0.0
    %3193 = vmatpush.msra.mxu0 0.0
    %3194 = vmatpush.msra.mxu0 0.0
    %3195 = vmatpush.msra.mxu0 0.0
    %3196 = vmatpush.msra.mxu0 0.0
    %3197 = vmatpush.msra.mxu0 0.0
    %3198 = vmatpush.msra.mxu0 0.0
    %3199 = vmatpush.msra.mxu0 %v102
    %3200 = vmatpush.msra.mxu0 %v101
    %3201 = vmatpush.msra.mxu0 %v100
    %3202 = vmatpush.msra.mxu0 %v99
    %3203 = vmatpush.msra.mxu0 %v98
    %3204 = vmatpush.msra.mxu0 %v97
    %3205 = vmatpush.msra.mxu0 %v96
    %3206 = vmatpush.msra.mxu0 %v95
    %3207 = vmatmul.f32.gmra.mxu0 %v3183
    %v3208 = vpop.f32.mrf.mxu0
    %v3209 = vadd.f32 %v1157, %v3208
    %3210 = vmatmul.f32.gmra.mxu0 %v3186
    %v3211 = vpop.f32.mrf.mxu0
    %v3212 = vadd.f32 %v1157, %v3211
    %3213 = vmatmul.f32.gmra.mxu0 %v3189
    %v3214 = vpop.f32.mrf.mxu0
    %v3215 = vadd.f32 %v1157, %v3214
    %3216 = vdwg.mxu0
    %v3217 = vadd.f32 %v3045, %v3209
    %v3218 = vadd.f32 %v3046, %v3212
    %v3219 = vadd.f32 %v3047, %v3215
    %v3220 = vsel %vm207, %v3217, 0.0
    %3221 = vadd.xlane.f32.xlu0 %v3220
    %v3222 = vpop.xlane.xlu0 %3221
    %v3223 = vsel %vm207, %v3218, 0.0
    %3224 = vadd.xlane.f32.xlu0 %v3223
    %v3225 = vpop.xlane.xlu0 %3224
    %v3226 = vsel %vm214, %v3219, 0.0
    %3227 = vadd.xlane.f32.xlu0 %v3226
    %v3228 = vpop.xlane.xlu0 %3227
    %v3229 = vmul.f32 %v3222, %v224
    %v3230 = vmul.f32 %v3225, %v224
    %v3231 = vmul.f32 %v3228, %v224
    %v3232 = vsub.f32 %v3217, %v3229
    %v3233 = vsub.f32 %v3218, %v3230
    %v3234 = vsub.f32 %v3219, %v3231
    %v3235 = vmul.f32 %v3232, %v3232
    %v3236 = vmul.f32 %v3233, %v3233
    %v3237 = vmul.f32 %v3234, %v3234
    %v3238 = vsel %vm207, %v3235, 0.0
    %3239 = vadd.xlane.f32.xlu0 %v3238
    %v3240 = vpop.xlane.xlu0 %3239
    %v3241 = vsel %vm207, %v3236, 0.0
    %3242 = vadd.xlane.f32.xlu0 %v3241
    %v3243 = vpop.xlane.xlu0 %3242
    %v3244 = vsel %vm214, %v3237, 0.0
    %3245 = vadd.xlane.f32.xlu0 %v3244
    %v3246 = vpop.xlane.xlu0 %3245
    %v3247 = vmul.f32 %v3240, %v224
    %v3248 = vmul.f32 %v3243, %v224
    %v3249 = vmul.f32 %v3246, %v224
    %v3250 = vadd.f32 %v3247, 1e-05
    %v3251 = vadd.f32 %v3248, 1e-05
    %v3252 = vadd.f32 %v3249, 1e-05
    %v3253 = vrsqrt.pop %v3250
    %v3254 = vmul.f32 %v3253, %v3250
    %v3255 = vmul.f32 %v3254, %v3253
    %v3256 = vmul.f32 0.5, %v3255
    %v3257 = vsub.f32 1.5, %v3256
    %v3258 = vmul.f32 %v3253, %v3257
    %vm3259 = vweird.f32 %v3250
    %vm3260 = vweird.f32 %v3253
    %vm3261 = vmor %vm3259, %vm3260
    %v3262 = vsel %vm3261, %v3253, %v3258
    %v3263 = vrsqrt.pop %v3251
    %v3264 = vmul.f32 %v3263, %v3251
    %v3265 = vmul.f32 %v3264, %v3263
    %v3266 = vmul.f32 0.5, %v3265
    %v3267 = vsub.f32 1.5, %v3266
    %v3268 = vmul.f32 %v3263, %v3267
    %vm3269 = vweird.f32 %v3251
    %vm3270 = vweird.f32 %v3263
    %vm3271 = vmor %vm3269, %vm3270
    %v3272 = vsel %vm3271, %v3263, %v3268
    %v3273 = vrsqrt.pop %v3252
    %v3274 = vmul.f32 %v3273, %v3252
    %v3275 = vmul.f32 %v3274, %v3273
    %v3276 = vmul.f32 0.5, %v3275
    %v3277 = vsub.f32 1.5, %v3276
    %v3278 = vmul.f32 %v3273, %v3277
    %vm3279 = vweird.f32 %v3252
    %vm3280 = vweird.f32 %v3273
    %vm3281 = vmor %vm3279, %vm3280
    %v3282 = vsel %vm3281, %v3273, %v3278
    %v3283 = vmul.f32 %v3232, %v3262
    %v3284 = vmul.f32 %v3233, %v3272
    %v3285 = vmul.f32 %v3234, %v3282
    %v3286 = vmul.f32 %v3283, %v1265
    %v3287 = vmul.f32 %v3284, %v1265
    %v3288 = vmul.f32 %v3285, %v1265
    %v3289 = vadd.f32 %v3286, %v1271
    %v3290 = vadd.f32 %v3287, %v1271
    %v3291 = vadd.f32 %v3288, %v1271
    %v3293 = vsel %vm207, %v3289, 0
    %v3296 = vsel %vm207, %v3290, 0
    %v3299 = vsel %vm207, %v3291, 0
    %3301 = vmatpush.msra.mxu0 0.0
    %3302 = vmatpush.msra.mxu0 0.0
    %3303 = vmatpush.msra.mxu0 0.0
    %3304 = vmatpush.msra.mxu0 0.0
    %3305 = vmatpush.msra.mxu0 0.0
    %3306 = vmatpush.msra.mxu0 0.0
    %3307 = vmatpush.msra.mxu0 0.0
    %3308 = vmatpush.msra.mxu0 0.0
    %3309 = vmatpush.msra.mxu0 0.0
    %3310 = vmatpush.msra.mxu0 0.0
    %3311 = vmatpush.msra.mxu0 0.0
    %3312 = vmatpush.msra.mxu0 0.0
    %3313 = vmatpush.msra.mxu0 %v112
    %3314 = vmatpush.msra.mxu0 %v111
    %3315 = vmatpush.msra.mxu0 %v110
    %3316 = vmatpush.msra.mxu0 %v109
    %3317 = vmatmul.f32.gmra.mxu0 %v3293
    %v3318 = vpop.f32.mrf.mxu0
    %v3319 = vadd.f32 0.0, %v3318
    %3320 = vmatmul.f32.gmra.mxu0 %v3296
    %v3321 = vpop.f32.mrf.mxu0
    %v3322 = vadd.f32 0.0, %v3321
    %3323 = vmatmul.f32.gmra.mxu0 %v3299
    %v3324 = vpop.f32.mrf.mxu0
    %v3325 = vadd.f32 0.0, %v3324
    %3326 = vdwg.mxu0
    %3330 = vrot.lane.b32.xlu0 %v3319, 96
    %v3331 = vpop.permute.xlu0 %3330
    %3332 = vrot.lane.b32.xlu0 %v3322, 96
    %v3333 = vpop.permute.xlu0 %3332
    %3334 = vrot.lane.b32.xlu0 %v3325, 96
    %v3335 = vpop.permute.xlu0 %3334
    %v3336 = vsel %vm342, %v3319, 0
    %v3338 = vsel %vm342, %v3322, 0
    %v3340 = vsel %vm342, %v3325, 0
    %v3342 = vsel %vm342, %v3331, 0
    %v3344 = vsel %vm342, %v3333, 0
    %v3346 = vsel %vm342, %v3335, 0
    %3348 = vmatpush.xpose.msra.mxu0 0.0
    %3349 = vmatpush.xpose.msra.mxu0 0.0
    %3350 = vmatpush.xpose.msra.mxu0 0.0
    %3351 = vmatpush.xpose.msra.mxu0 0.0
    %3352 = vmatpush.xpose.msra.mxu0 0.0
    %3353 = vmatpush.xpose.msra.mxu0 0.0
    %3354 = vmatpush.xpose.msra.mxu0 0.0
    %3355 = vmatpush.xpose.msra.mxu0 0.0
    %3356 = vmatpush.xpose.msra.mxu0 0.0
    %3357 = vmatpush.xpose.msra.mxu0 0.0
    %3358 = vmatpush.xpose.msra.mxu0 0.0
    %3359 = vmatpush.xpose.msra.mxu0 0.0
    %3360 = vmatpush.xpose.msra.mxu0 0.0
    %3361 = vmatpush.xpose.msra.mxu0 %v3346
    %3362 = vmatpush.xpose.msra.mxu0 %v3344
    %3363 = vmatpush.xpose.msra.mxu0 %v3342
    %3364 = vmatmul.f32.gmra.mxu0 %v3336
    %v3365 = vpop.f32.mrf.mxu0
    %v3366 = vadd.f32 0.0, %v3365
    %3367 = vmatmul.f32.gmra.mxu0 %v3338
    %v3368 = vpop.f32.mrf.mxu0
    %v3369 = vadd.f32 0.0, %v3368
    %3370 = vmatmul.f32.gmra.mxu0 %v3340
    %v3371 = vpop.f32.mrf.mxu0
    %v3372 = vadd.f32 0.0, %v3371
    %3373 = vdwg.mxu0
    %v3374 = vmul.f32 %v3366, 0.35355338
    %v3375 = vmul.f32 %v3369, 0.35355338
    %v3376 = vmul.f32 %v3372, 0.35355338
    %v3377 = vsel %vm384, %v3374, -inf
    %3378 = vmax.xlane.f32.xlu0 %v3377
    %v3379 = vpop.xlane.xlu0 %3378
    %v3380 = vsel %vm384, %v3375, -inf
    %3381 = vmax.xlane.f32.xlu0 %v3380
    %v3382 = vpop.xlane.xlu0 %3381
    %v3383 = vsel %vm391, %v3376, -inf
    %3384 = vmax.xlane.f32.xlu0 %v3383
    %v3385 = vpop.xlane.xlu0 %3384
    %v3386 = vsub.f32 %v3374, %v3379
    %v3387 = vsub.f32 %v3375, %v3382
    %v3388 = vsub.f32 %v3376, %v3385
    %v3389 = vmul.f32 %v3386, 1.442695
    %v3390 = vpow.pop %v3389
    %v3391 = vmul.f32 %v3387, 1.442695
    %v3392 = vpow.pop %v3391
    %v3393 = vmul.f32 %v3388, 1.442695
    %v3394 = vpow.pop %v3393
    %v3395 = vsel %vm384, %v3390, 0.0
    %3396 = vadd.xlane.f32.xlu0 %v3395
    %v3397 = vpop.xlane.xlu0 %3396
    %v3398 = vsel %vm384, %v3392, 0.0
    %3399 = vadd.xlane.f32.xlu0 %v3398
    %v3400 = vpop.xlane.xlu0 %3399
    %v3401 = vsel %vm391, %v3394, 0.0
    %3402 = vadd.xlane.f32.xlu0 %v3401
    %v3403 = vpop.xlane.xlu0 %3402
    %v3404 = vrcp.pop %v3397
    %v3405 = vrcp.pop %v3400
    %v3406 = vrcp.pop %v3403
    %v3407 = vmul.f32 %v3390, %v3404
    %v3408 = vmul.f32 %v3392, %v3405
    %v3409 = vmul.f32 %v3394, %v3406
    %3410 = vrot.lane.b32.xlu0 %v3319, 64
    %v3411 = vpop.permute.xlu0 %3410
    %3412 = vrot.lane.b32.xlu0 %v3322, 64
    %v3413 = vpop.permute.xlu0 %3412
    %3414 = vrot.lane.b32.xlu0 %v3325, 64
    %v3415 = vpop.permute.xlu0 %3414
    %v3419 = vsel %vm384, %v3407, 0
    %v3422 = vsel %vm384, %v3408, 0
    %v3425 = vsel %vm384, %v3409, 0
    %v3427 = vsel %vm436, %v3415, 0
    %3429 = vmatpush.msra.mxu0 0.0
    %3430 = vmatpush.msra.mxu0 0.0
    %3431 = vmatpush.msra.mxu0 0.0
    %3432 = vmatpush.msra.mxu0 0.0
    %3433 = vmatpush.msra.mxu0 0.0
    %3434 = vmatpush.msra.mxu0 0.0
    %3435 = vmatpush.msra.mxu0 0.0
    %3436 = vmatpush.msra.mxu0 0.0
    %3437 = vmatpush.msra.mxu0 0.0
    %3438 = vmatpush.msra.mxu0 0.0
    %3439 = vmatpush.msra.mxu0 0.0
    %3440 = vmatpush.msra.mxu0 0.0
    %3441 = vmatpush.msra.mxu0 0.0
    %3442 = vmatpush.msra.mxu0 %v3427
    %3443 = vmatpush.msra.mxu0 %v3413
    %3444 = vmatpush.msra.mxu0 %v3411
    %3445 = vmatmul.f32.gmra.mxu0 %v3419
    %v3446 = vpop.f32.mrf.mxu0
    %v3447 = vadd.f32 0.0, %v3446
    %3448 = vmatmul.f32.gmra.mxu0 %v3422
    %v3449 = vpop.f32.mrf.mxu0
    %v3450 = vadd.f32 0.0, %v3449
    %3451 = vmatmul.f32.gmra.mxu0 %v3425
    %v3452 = vpop.f32.mrf.mxu0
    %v3453 = vadd.f32 0.0, %v3452
    %3454 = vdwg.mxu0
    %v3456 = vsel %vm342, %v3447, 0
    %v3459 = vsel %vm342, %v3450, 0
    %v3462 = vsel %vm342, %v3453, 0
    %3464 = vmatpush.msra.mxu0 0.0
    %3465 = vmatpush.msra.mxu0 0.0
    %3466 = vmatpush.msra.mxu0 0.0
    %3467 = vmatpush.msra.mxu0 0.0
    %3468 = vmatpush.msra.mxu0 0.0
    %3469 = vmatpush.msra.mxu0 0.0
    %3470 = vmatpush.msra.mxu0 0.0
    %3471 = vmatpush.msra.mxu0 0.0
    %3472 = vmatpush.msra.mxu0 0.0
    %3473 = vmatpush.msra.mxu0 0.0
    %3474 = vmatpush.msra.mxu0 0.0
    %3475 = vmatpush.msra.mxu0 0.0
    %3476 = vmatpush.msra.mxu0 0.0
    %3477 = vmatpush.msra.mxu0 0.0
    %3478 = vmatpush.msra.mxu0 0.0
    %3479 = vmatpush.msra.mxu0 %v114
    %3480 = vmatmul.f32.gmra.mxu0 %v3456
    %v3481 = vpop.f32.mrf.mxu0
    %v3482 = vadd.f32 0.0, %v3481
    %3483 = vmatmul.f32.gmra.mxu0 %v3459
    %v3484 = vpop.f32.mrf.mxu0
    %v3485 = vadd.f32 0.0, %v3484
    %3486 = vmatmul.f32.gmra.mxu0 %v3462
    %v3487 = vpop.f32.mrf.mxu0
    %v3488 = vadd.f32 0.0, %v3487
    %3489 = vdwg.mxu0
    %v3490 = vadd.f32 %v1314, %v3482
    %v3491 = vadd.f32 %v1314, %v3485
    %v3492 = vadd.f32 %v1314, %v3488
    %3493 = vrot.lane.b32.xlu0 %v3319, 120
    %v3494 = vpop.permute.xlu0 %3493
    %3495 = vrot.lane.b32.xlu0 %v3322, 120
    %v3496 = vpop.permute.xlu0 %3495
    %3497 = vrot.lane.b32.xlu0 %v3325, 120
    %v3498 = vpop.permute.xlu0 %3497
    %3499 = vrot.lane.b32.xlu0 %v3319, 88
    %v3500 = vpop.permute.xlu0 %3499
    %3501 = vrot.lane.b32.xlu0 %v3322, 88
    %v3502 = vpop.permute.xlu0 %3501
    %3503 = vrot.lane.b32.xlu0 %v3325, 88
    %v3504 = vpop.permute.xlu0 %3503
    %v3505 = vsel %vm342, %v3494, 0
    %v3507 = vsel %vm342, %v3496, 0
    %v3509 = vsel %vm342, %v3498, 0
    %v3511 = vsel %vm342, %v3500, 0
    %v3513 = vsel %vm342, %v3502, 0
    %v3515 = vsel %vm342, %v3504, 0
    %3517 = vmatpush.xpose.msra.mxu0 0.0
    %3518 = vmatpush.xpose.msra.mxu0 0.0
    %3519 = vmatpush.xpose.msra.mxu0 0.0
    %3520 = vmatpush.xpose.msra.mxu0 0.0
    %3521 = vmatpush.xpose.msra.mxu0 0.0
    %3522 = vmatpush.xpose.msra.mxu0 0.0
    %3523 = vmatpush.xpose.msra.mxu0 0.0
    %3524 = vmatpush.xpose.msra.mxu0 0.0
    %3525 = vmatpush.xpose.msra.mxu0 0.0
    %3526 = vmatpush.xpose.msra.mxu0 0.0
    %3527 = vmatpush.xpose.msra.mxu0 0.0
    %3528 = vmatpush.xpose.msra.mxu0 0.0
    %3529 = vmatpush.xpose.msra.mxu0 0.0
    %3530 = vmatpush.xpose.msra.mxu0 %v3515
    %3531 = vmatpush.xpose.msra.mxu0 %v3513
    %3532 = vmatpush.xpose.msra.mxu0 %v3511
    %3533 = vmatmul.f32.gmra.mxu0 %v3505
    %v3534 = vpop.f32.mrf.mxu0
    %v3535 = vadd.f32 0.0, %v3534
    %3536 = vmatmul.f32.gmra.mxu0 %v3507
    %v3537 = vpop.f32.mrf.mxu0
    %v3538 = vadd.f32 0.0, %v3537
    %3539 = vmatmul.f32.gmra.mxu0 %v3509
    %v3540 = vpop.f32.mrf.mxu0
    %v3541 = vadd.f32 0.0, %v3540
    %3542 = vdwg.mxu0
    %v3543 = vmul.f32 %v3535, 0.35355338
    %v3544 = vmul.f32 %v3538, 0.35355338
    %v3545 = vmul.f32 %v3541, 0.35355338
    %v3546 = vsel %vm384, %v3543, -inf
    %3547 = vmax.xlane.f32.xlu0 %v3546
    %v3548 = vpop.xlane.xlu0 %3547
    %v3549 = vsel %vm384, %v3544, -inf
    %3550 = vmax.xlane.f32.xlu0 %v3549
    %v3551 = vpop.xlane.xlu0 %3550
    %v3552 = vsel %vm391, %v3545, -inf
    %3553 = vmax.xlane.f32.xlu0 %v3552
    %v3554 = vpop.xlane.xlu0 %3553
    %v3555 = vsub.f32 %v3543, %v3548
    %v3556 = vsub.f32 %v3544, %v3551
    %v3557 = vsub.f32 %v3545, %v3554
    %v3558 = vmul.f32 %v3555, 1.442695
    %v3559 = vpow.pop %v3558
    %v3560 = vmul.f32 %v3556, 1.442695
    %v3561 = vpow.pop %v3560
    %v3562 = vmul.f32 %v3557, 1.442695
    %v3563 = vpow.pop %v3562
    %v3564 = vsel %vm384, %v3559, 0.0
    %3565 = vadd.xlane.f32.xlu0 %v3564
    %v3566 = vpop.xlane.xlu0 %3565
    %v3567 = vsel %vm384, %v3561, 0.0
    %3568 = vadd.xlane.f32.xlu0 %v3567
    %v3569 = vpop.xlane.xlu0 %3568
    %v3570 = vsel %vm391, %v3563, 0.0
    %3571 = vadd.xlane.f32.xlu0 %v3570
    %v3572 = vpop.xlane.xlu0 %3571
    %v3573 = vrcp.pop %v3566
    %v3574 = vrcp.pop %v3569
    %v3575 = vrcp.pop %v3572
    %v3576 = vmul.f32 %v3559, %v3573
    %v3577 = vmul.f32 %v3561, %v3574
    %v3578 = vmul.f32 %v3563, %v3575
    %3579 = vrot.lane.b32.xlu0 %v3319, 56
    %v3580 = vpop.permute.xlu0 %3579
    %3581 = vrot.lane.b32.xlu0 %v3322, 56
    %v3582 = vpop.permute.xlu0 %3581
    %3583 = vrot.lane.b32.xlu0 %v3325, 56
    %v3584 = vpop.permute.xlu0 %3583
    %v3588 = vsel %vm384, %v3576, 0
    %v3591 = vsel %vm384, %v3577, 0
    %v3594 = vsel %vm384, %v3578, 0
    %v3596 = vsel %vm436, %v3584, 0
    %3598 = vmatpush.msra.mxu0 0.0
    %3599 = vmatpush.msra.mxu0 0.0
    %3600 = vmatpush.msra.mxu0 0.0
    %3601 = vmatpush.msra.mxu0 0.0
    %3602 = vmatpush.msra.mxu0 0.0
    %3603 = vmatpush.msra.mxu0 0.0
    %3604 = vmatpush.msra.mxu0 0.0
    %3605 = vmatpush.msra.mxu0 0.0
    %3606 = vmatpush.msra.mxu0 0.0
    %3607 = vmatpush.msra.mxu0 0.0
    %3608 = vmatpush.msra.mxu0 0.0
    %3609 = vmatpush.msra.mxu0 0.0
    %3610 = vmatpush.msra.mxu0 0.0
    %3611 = vmatpush.msra.mxu0 %v3596
    %3612 = vmatpush.msra.mxu0 %v3582
    %3613 = vmatpush.msra.mxu0 %v3580
    %3614 = vmatmul.f32.gmra.mxu0 %v3588
    %v3615 = vpop.f32.mrf.mxu0
    %v3616 = vadd.f32 0.0, %v3615
    %3617 = vmatmul.f32.gmra.mxu0 %v3591
    %v3618 = vpop.f32.mrf.mxu0
    %v3619 = vadd.f32 0.0, %v3618
    %3620 = vmatmul.f32.gmra.mxu0 %v3594
    %v3621 = vpop.f32.mrf.mxu0
    %v3622 = vadd.f32 0.0, %v3621
    %3623 = vdwg.mxu0
    %v3625 = vsel %vm342, %v3616, 0
    %v3628 = vsel %vm342, %v3619, 0
    %v3631 = vsel %vm342, %v3622, 0
    %3633 = vmatpush.msra.mxu0 0.0
    %3634 = vmatpush.msra.mxu0 0.0
    %3635 = vmatpush.msra.mxu0 0.0
    %3636 = vmatpush.msra.mxu0 0.0
    %3637 = vmatpush.msra.mxu0 0.0
    %3638 = vmatpush.msra.mxu0 0.0
    %3639 = vmatpush.msra.mxu0 0.0
    %3640 = vmatpush.msra.mxu0 0.0
    %3641 = vmatpush.msra.mxu0 0.0
    %3642 = vmatpush.msra.mxu0 0.0
    %3643 = vmatpush.msra.mxu0 0.0
    %3644 = vmatpush.msra.mxu0 0.0
    %3645 = vmatpush.msra.mxu0 0.0
    %3646 = vmatpush.msra.mxu0 0.0
    %3647 = vmatpush.msra.mxu0 0.0
    %3648 = vmatpush.msra.mxu0 %v115
    %3649 = vmatmul.f32.gmra.mxu0 %v3625
    %v3650 = vpop.f32.mrf.mxu0
    %v3651 = vadd.f32 0.0, %v3650
    %3652 = vmatmul.f32.gmra.mxu0 %v3628
    %v3653 = vpop.f32.mrf.mxu0
    %v3654 = vadd.f32 0.0, %v3653
    %3655 = vmatmul.f32.gmra.mxu0 %v3631
    %v3656 = vpop.f32.mrf.mxu0
    %v3657 = vadd.f32 0.0, %v3656
    %3658 = vdwg.mxu0
    %v3659 = vadd.f32 %v3490, %v3651
    %v3660 = vadd.f32 %v3491, %v3654
    %v3661 = vadd.f32 %v3492, %v3657
    %3662 = vrot.lane.b32.xlu0 %v3319, 112
    %v3663 = vpop.permute.xlu0 %3662
    %3664 = vrot.lane.b32.xlu0 %v3322, 112
    %v3665 = vpop.permute.xlu0 %3664
    %3666 = vrot.lane.b32.xlu0 %v3325, 112
    %v3667 = vpop.permute.xlu0 %3666
    %3668 = vrot.lane.b32.xlu0 %v3319, 80
    %v3669 = vpop.permute.xlu0 %3668
    %3670 = vrot.lane.b32.xlu0 %v3322, 80
    %v3671 = vpop.permute.xlu0 %3670
    %3672 = vrot.lane.b32.xlu0 %v3325, 80
    %v3673 = vpop.permute.xlu0 %3672
    %v3674 = vsel %vm342, %v3663, 0
    %v3676 = vsel %vm342, %v3665, 0
    %v3678 = vsel %vm342, %v3667, 0
    %v3680 = vsel %vm342, %v3669, 0
    %v3682 = vsel %vm342, %v3671, 0
    %v3684 = vsel %vm342, %v3673, 0
    %3686 = vmatpush.xpose.msra.mxu0 0.0
    %3687 = vmatpush.xpose.msra.mxu0 0.0
    %3688 = vmatpush.xpose.msra.mxu0 0.0
    %3689 = vmatpush.xpose.msra.mxu0 0.0
    %3690 = vmatpush.xpose.msra.mxu0 0.0
    %3691 = vmatpush.xpose.msra.mxu0 0.0
    %3692 = vmatpush.xpose.msra.mxu0 0.0
    %3693 = vmatpush.xpose.msra.mxu0 0.0
    %3694 = vmatpush.xpose.msra.mxu0 0.0
    %3695 = vmatpush.xpose.msra.mxu0 0.0
    %3696 = vmatpush.xpose.msra.mxu0 0.0
    %3697 = vmatpush.xpose.msra.mxu0 0.0
    %3698 = vmatpush.xpose.msra.mxu0 0.0
    %3699 = vmatpush.xpose.msra.mxu0 %v3684
    %3700 = vmatpush.xpose.msra.mxu0 %v3682
    %3701 = vmatpush.xpose.msra.mxu0 %v3680
    %3702 = vmatmul.f32.gmra.mxu0 %v3674
    %v3703 = vpop.f32.mrf.mxu0
    %v3704 = vadd.f32 0.0, %v3703
    %3705 = vmatmul.f32.gmra.mxu0 %v3676
    %v3706 = vpop.f32.mrf.mxu0
    %v3707 = vadd.f32 0.0, %v3706
    %3708 = vmatmul.f32.gmra.mxu0 %v3678
    %v3709 = vpop.f32.mrf.mxu0
    %v3710 = vadd.f32 0.0, %v3709
    %3711 = vdwg.mxu0
    %v3712 = vmul.f32 %v3704, 0.35355338
    %v3713 = vmul.f32 %v3707, 0.35355338
    %v3714 = vmul.f32 %v3710, 0.35355338
    %v3715 = vsel %vm384, %v3712, -inf
    %3716 = vmax.xlane.f32.xlu0 %v3715
    %v3717 = vpop.xlane.xlu0 %3716
    %v3718 = vsel %vm384, %v3713, -inf
    %3719 = vmax.xlane.f32.xlu0 %v3718
    %v3720 = vpop.xlane.xlu0 %3719
    %v3721 = vsel %vm391, %v3714, -inf
    %3722 = vmax.xlane.f32.xlu0 %v3721
    %v3723 = vpop.xlane.xlu0 %3722
    %v3724 = vsub.f32 %v3712, %v3717
    %v3725 = vsub.f32 %v3713, %v3720
    %v3726 = vsub.f32 %v3714, %v3723
    %v3727 = vmul.f32 %v3724, 1.442695
    %v3728 = vpow.pop %v3727
    %v3729 = vmul.f32 %v3725, 1.442695
    %v3730 = vpow.pop %v3729
    %v3731 = vmul.f32 %v3726, 1.442695
    %v3732 = vpow.pop %v3731
    %v3733 = vsel %vm384, %v3728, 0.0
    %3734 = vadd.xlane.f32.xlu0 %v3733
    %v3735 = vpop.xlane.xlu0 %3734
    %v3736 = vsel %vm384, %v3730, 0.0
    %3737 = vadd.xlane.f32.xlu0 %v3736
    %v3738 = vpop.xlane.xlu0 %3737
    %v3739 = vsel %vm391, %v3732, 0.0
    %3740 = vadd.xlane.f32.xlu0 %v3739
    %v3741 = vpop.xlane.xlu0 %3740
    %v3742 = vrcp.pop %v3735
    %v3743 = vrcp.pop %v3738
    %v3744 = vrcp.pop %v3741
    %v3745 = vmul.f32 %v3728, %v3742
    %v3746 = vmul.f32 %v3730, %v3743
    %v3747 = vmul.f32 %v3732, %v3744
    %3748 = vrot.lane.b32.xlu0 %v3319, 48
    %v3749 = vpop.permute.xlu0 %3748
    %3750 = vrot.lane.b32.xlu0 %v3322, 48
    %v3751 = vpop.permute.xlu0 %3750
    %3752 = vrot.lane.b32.xlu0 %v3325, 48
    %v3753 = vpop.permute.xlu0 %3752
    %v3757 = vsel %vm384, %v3745, 0
    %v3760 = vsel %vm384, %v3746, 0
    %v3763 = vsel %vm384, %v3747, 0
    %v3765 = vsel %vm436, %v3753, 0
    %3767 = vmatpush.msra.mxu0 0.0
    %3768 = vmatpush.msra.mxu0 0.0
    %3769 = vmatpush.msra.mxu0 0.0
    %3770 = vmatpush.msra.mxu0 0.0
    %3771 = vmatpush.msra.mxu0 0.0
    %3772 = vmatpush.msra.mxu0 0.0
    %3773 = vmatpush.msra.mxu0 0.0
    %3774 = vmatpush.msra.mxu0 0.0
    %3775 = vmatpush.msra.mxu0 0.0
    %3776 = vmatpush.msra.mxu0 0.0
    %3777 = vmatpush.msra.mxu0 0.0
    %3778 = vmatpush.msra.mxu0 0.0
    %3779 = vmatpush.msra.mxu0 0.0
    %3780 = vmatpush.msra.mxu0 %v3765
    %3781 = vmatpush.msra.mxu0 %v3751
    %3782 = vmatpush.msra.mxu0 %v3749
    %3783 = vmatmul.f32.gmra.mxu0 %v3757
    %v3784 = vpop.f32.mrf.mxu0
    %v3785 = vadd.f32 0.0, %v3784
    %3786 = vmatmul.f32.gmra.mxu0 %v3760
    %v3787 = vpop.f32.mrf.mxu0
    %v3788 = vadd.f32 0.0, %v3787
    %3789 = vmatmul.f32.gmra.mxu0 %v3763
    %v3790 = vpop.f32.mrf.mxu0
    %v3791 = vadd.f32 0.0, %v3790
    %3792 = vdwg.mxu0
    %v3794 = vsel %vm342, %v3785, 0
    %v3797 = vsel %vm342, %v3788, 0
    %v3800 = vsel %vm342, %v3791, 0
    %3802 = vmatpush.msra.mxu0 0.0
    %3803 = vmatpush.msra.mxu0 0.0
    %3804 = vmatpush.msra.mxu0 0.0
    %3805 = vmatpush.msra.mxu0 0.0
    %3806 = vmatpush.msra.mxu0 0.0
    %3807 = vmatpush.msra.mxu0 0.0
    %3808 = vmatpush.msra.mxu0 0.0
    %3809 = vmatpush.msra.mxu0 0.0
    %3810 = vmatpush.msra.mxu0 0.0
    %3811 = vmatpush.msra.mxu0 0.0
    %3812 = vmatpush.msra.mxu0 0.0
    %3813 = vmatpush.msra.mxu0 0.0
    %3814 = vmatpush.msra.mxu0 0.0
    %3815 = vmatpush.msra.mxu0 0.0
    %3816 = vmatpush.msra.mxu0 0.0
    %3817 = vmatpush.msra.mxu0 %v116
    %3818 = vmatmul.f32.gmra.mxu0 %v3794
    %v3819 = vpop.f32.mrf.mxu0
    %v3820 = vadd.f32 0.0, %v3819
    %3821 = vmatmul.f32.gmra.mxu0 %v3797
    %v3822 = vpop.f32.mrf.mxu0
    %v3823 = vadd.f32 0.0, %v3822
    %3824 = vmatmul.f32.gmra.mxu0 %v3800
    %v3825 = vpop.f32.mrf.mxu0
    %v3826 = vadd.f32 0.0, %v3825
    %3827 = vdwg.mxu0
    %v3828 = vadd.f32 %v3659, %v3820
    %v3829 = vadd.f32 %v3660, %v3823
    %v3830 = vadd.f32 %v3661, %v3826
    %3831 = vrot.lane.b32.xlu0 %v3319, 104
    %v3832 = vpop.permute.xlu0 %3831
    %3833 = vrot.lane.b32.xlu0 %v3322, 104
    %v3834 = vpop.permute.xlu0 %3833
    %3835 = vrot.lane.b32.xlu0 %v3325, 104
    %v3836 = vpop.permute.xlu0 %3835
    %3837 = vrot.lane.b32.xlu0 %v3319, 72
    %v3838 = vpop.permute.xlu0 %3837
    %3839 = vrot.lane.b32.xlu0 %v3322, 72
    %v3840 = vpop.permute.xlu0 %3839
    %3841 = vrot.lane.b32.xlu0 %v3325, 72
    %v3842 = vpop.permute.xlu0 %3841
    %v3843 = vsel %vm342, %v3832, 0
    %v3845 = vsel %vm342, %v3834, 0
    %v3847 = vsel %vm342, %v3836, 0
    %v3849 = vsel %vm342, %v3838, 0
    %v3851 = vsel %vm342, %v3840, 0
    %v3853 = vsel %vm342, %v3842, 0
    %3855 = vmatpush.xpose.msra.mxu0 0.0
    %3856 = vmatpush.xpose.msra.mxu0 0.0
    %3857 = vmatpush.xpose.msra.mxu0 0.0
    %3858 = vmatpush.xpose.msra.mxu0 0.0
    %3859 = vmatpush.xpose.msra.mxu0 0.0
    %3860 = vmatpush.xpose.msra.mxu0 0.0
    %3861 = vmatpush.xpose.msra.mxu0 0.0
    %3862 = vmatpush.xpose.msra.mxu0 0.0
    %3863 = vmatpush.xpose.msra.mxu0 0.0
    %3864 = vmatpush.xpose.msra.mxu0 0.0
    %3865 = vmatpush.xpose.msra.mxu0 0.0
    %3866 = vmatpush.xpose.msra.mxu0 0.0
    %3867 = vmatpush.xpose.msra.mxu0 0.0
    %3868 = vmatpush.xpose.msra.mxu0 %v3853
    %3869 = vmatpush.xpose.msra.mxu0 %v3851
    %3870 = vmatpush.xpose.msra.mxu0 %v3849
    %3871 = vmatmul.f32.gmra.mxu0 %v3843
    %v3872 = vpop.f32.mrf.mxu0
    %v3873 = vadd.f32 0.0, %v3872
    %3874 = vmatmul.f32.gmra.mxu0 %v3845
    %v3875 = vpop.f32.mrf.mxu0
    %v3876 = vadd.f32 0.0, %v3875
    %3877 = vmatmul.f32.gmra.mxu0 %v3847
    %v3878 = vpop.f32.mrf.mxu0
    %v3879 = vadd.f32 0.0, %v3878
    %3880 = vdwg.mxu0
    %v3881 = vmul.f32 %v3873, 0.35355338
    %v3882 = vmul.f32 %v3876, 0.35355338
    %v3883 = vmul.f32 %v3879, 0.35355338
    %v3884 = vsel %vm384, %v3881, -inf
    %3885 = vmax.xlane.f32.xlu0 %v3884
    %v3886 = vpop.xlane.xlu0 %3885
    %v3887 = vsel %vm384, %v3882, -inf
    %3888 = vmax.xlane.f32.xlu0 %v3887
    %v3889 = vpop.xlane.xlu0 %3888
    %v3890 = vsel %vm391, %v3883, -inf
    %3891 = vmax.xlane.f32.xlu0 %v3890
    %v3892 = vpop.xlane.xlu0 %3891
    %v3893 = vsub.f32 %v3881, %v3886
    %v3894 = vsub.f32 %v3882, %v3889
    %v3895 = vsub.f32 %v3883, %v3892
    %v3896 = vmul.f32 %v3893, 1.442695
    %v3897 = vpow.pop %v3896
    %v3898 = vmul.f32 %v3894, 1.442695
    %v3899 = vpow.pop %v3898
    %v3900 = vmul.f32 %v3895, 1.442695
    %v3901 = vpow.pop %v3900
    %v3902 = vsel %vm384, %v3897, 0.0
    %3903 = vadd.xlane.f32.xlu0 %v3902
    %v3904 = vpop.xlane.xlu0 %3903
    %v3905 = vsel %vm384, %v3899, 0.0
    %3906 = vadd.xlane.f32.xlu0 %v3905
    %v3907 = vpop.xlane.xlu0 %3906
    %v3908 = vsel %vm391, %v3901, 0.0
    %3909 = vadd.xlane.f32.xlu0 %v3908
    %v3910 = vpop.xlane.xlu0 %3909
    %v3911 = vrcp.pop %v3904
    %v3912 = vrcp.pop %v3907
    %v3913 = vrcp.pop %v3910
    %v3914 = vmul.f32 %v3897, %v3911
    %v3915 = vmul.f32 %v3899, %v3912
    %v3916 = vmul.f32 %v3901, %v3913
    %3917 = vrot.lane.b32.xlu0 %v3319, 40
    %v3918 = vpop.permute.xlu0 %3917
    %3919 = vrot.lane.b32.xlu0 %v3322, 40
    %v3920 = vpop.permute.xlu0 %3919
    %3921 = vrot.lane.b32.xlu0 %v3325, 40
    %v3922 = vpop.permute.xlu0 %3921
    %v3926 = vsel %vm384, %v3914, 0
    %v3929 = vsel %vm384, %v3915, 0
    %v3932 = vsel %vm384, %v3916, 0
    %v3934 = vsel %vm436, %v3922, 0
    %3936 = vmatpush.msra.mxu0 0.0
    %3937 = vmatpush.msra.mxu0 0.0
    %3938 = vmatpush.msra.mxu0 0.0
    %3939 = vmatpush.msra.mxu0 0.0
    %3940 = vmatpush.msra.mxu0 0.0
    %3941 = vmatpush.msra.mxu0 0.0
    %3942 = vmatpush.msra.mxu0 0.0
    %3943 = vmatpush.msra.mxu0 0.0
    %3944 = vmatpush.msra.mxu0 0.0
    %3945 = vmatpush.msra.mxu0 0.0
    %3946 = vmatpush.msra.mxu0 0.0
    %3947 = vmatpush.msra.mxu0 0.0
    %3948 = vmatpush.msra.mxu0 0.0
    %3949 = vmatpush.msra.mxu0 %v3934
    %3950 = vmatpush.msra.mxu0 %v3920
    %3951 = vmatpush.msra.mxu0 %v3918
    %3952 = vmatmul.f32.gmra.mxu0 %v3926
    %v3953 = vpop.f32.mrf.mxu0
    %v3954 = vadd.f32 0.0, %v3953
    %3955 = vmatmul.f32.gmra.mxu0 %v3929
    %v3956 = vpop.f32.mrf.mxu0
    %v3957 = vadd.f32 0.0, %v3956
    %3958 = vmatmul.f32.gmra.mxu0 %v3932
    %v3959 = vpop.f32.mrf.mxu0
    %v3960 = vadd.f32 0.0, %v3959
    %3961 = vdwg.mxu0
    %v3963 = vsel %vm342, %v3954, 0
    %v3966 = vsel %vm342, %v3957, 0
    %v3969 = vsel %vm342, %v3960, 0
    %3971 = vmatpush.msra.mxu0 0.0
    %3972 = vmatpush.msra.mxu0 0.0
    %3973 = vmatpush.msra.mxu0 0.0
    %3974 = vmatpush.msra.mxu0 0.0
    %3975 = vmatpush.msra.mxu0 0.0
    %3976 = vmatpush.msra.mxu0 0.0
    %3977 = vmatpush.msra.mxu0 0.0
    %3978 = vmatpush.msra.mxu0 0.0
    %3979 = vmatpush.msra.mxu0 0.0
    %3980 = vmatpush.msra.mxu0 0.0
    %3981 = vmatpush.msra.mxu0 0.0
    %3982 = vmatpush.msra.mxu0 0.0
    %3983 = vmatpush.msra.mxu0 0.0
    %3984 = vmatpush.msra.mxu0 0.0
    %3985 = vmatpush.msra.mxu0 0.0
    %3986 = vmatpush.msra.mxu0 %v117
    %3987 = vmatmul.f32.gmra.mxu0 %v3963
    %v3988 = vpop.f32.mrf.mxu0
    %v3989 = vadd.f32 0.0, %v3988
    %3990 = vmatmul.f32.gmra.mxu0 %v3966
    %v3991 = vpop.f32.mrf.mxu0
    %v3992 = vadd.f32 0.0, %v3991
    %3993 = vmatmul.f32.gmra.mxu0 %v3969
    %v3994 = vpop.f32.mrf.mxu0
    %v3995 = vadd.f32 0.0, %v3994
    %3996 = vdwg.mxu0
    %v3997 = vadd.f32 %v3828, %v3989
    %v3998 = vadd.f32 %v3829, %v3992
    %v3999 = vadd.f32 %v3830, %v3995
    %v4000 = vadd.f32 %v3217, %v3997
    %v4001 = vadd.f32 %v3218, %v3998
    %v4002 = vadd.f32 %v3219, %v3999
    %v4003 = vsel %vm207, %v4000, 0.0
    %4004 = vadd.xlane.f32.xlu0 %v4003
    %v4005 = vpop.xlane.xlu0 %4004
    %v4006 = vsel %vm207, %v4001, 0.0
    %4007 = vadd.xlane.f32.xlu0 %v4006
    %v4008 = vpop.xlane.xlu0 %4007
    %v4009 = vsel %vm214, %v4002, 0.0
    %4010 = vadd.xlane.f32.xlu0 %v4009
    %v4011 = vpop.xlane.xlu0 %4010
    %v4012 = vmul.f32 %v4005, %v224
    %v4013 = vmul.f32 %v4008, %v224
    %v4014 = vmul.f32 %v4011, %v224
    %v4015 = vsub.f32 %v4000, %v4012
    %v4016 = vsub.f32 %v4001, %v4013
    %v4017 = vsub.f32 %v4002, %v4014
    %v4018 = vmul.f32 %v4015, %v4015
    %v4019 = vmul.f32 %v4016, %v4016
    %v4020 = vmul.f32 %v4017, %v4017
    %v4021 = vsel %vm207, %v4018, 0.0
    %4022 = vadd.xlane.f32.xlu0 %v4021
    %v4023 = vpop.xlane.xlu0 %4022
    %v4024 = vsel %vm207, %v4019, 0.0
    %4025 = vadd.xlane.f32.xlu0 %v4024
    %v4026 = vpop.xlane.xlu0 %4025
    %v4027 = vsel %vm214, %v4020, 0.0
    %4028 = vadd.xlane.f32.xlu0 %v4027
    %v4029 = vpop.xlane.xlu0 %4028
    %v4030 = vmul.f32 %v4023, %v224
    %v4031 = vmul.f32 %v4026, %v224
    %v4032 = vmul.f32 %v4029, %v224
    %v4033 = vadd.f32 %v4030, 1e-05
    %v4034 = vadd.f32 %v4031, 1e-05
    %v4035 = vadd.f32 %v4032, 1e-05
    %v4036 = vrsqrt.pop %v4033
    %v4037 = vmul.f32 %v4036, %v4033
    %v4038 = vmul.f32 %v4037, %v4036
    %v4039 = vmul.f32 0.5, %v4038
    %v4040 = vsub.f32 1.5, %v4039
    %v4041 = vmul.f32 %v4036, %v4040
    %vm4042 = vweird.f32 %v4033
    %vm4043 = vweird.f32 %v4036
    %vm4044 = vmor %vm4042, %vm4043
    %v4045 = vsel %vm4044, %v4036, %v4041
    %v4046 = vrsqrt.pop %v4034
    %v4047 = vmul.f32 %v4046, %v4034
    %v4048 = vmul.f32 %v4047, %v4046
    %v4049 = vmul.f32 0.5, %v4048
    %v4050 = vsub.f32 1.5, %v4049
    %v4051 = vmul.f32 %v4046, %v4050
    %vm4052 = vweird.f32 %v4034
    %vm4053 = vweird.f32 %v4046
    %vm4054 = vmor %vm4052, %vm4053
    %v4055 = vsel %vm4054, %v4046, %v4051
    %v4056 = vrsqrt.pop %v4035
    %v4057 = vmul.f32 %v4056, %v4035
    %v4058 = vmul.f32 %v4057, %v4056
    %v4059 = vmul.f32 0.5, %v4058
    %v4060 = vsub.f32 1.5, %v4059
    %v4061 = vmul.f32 %v4056, %v4060
    %vm4062 = vweird.f32 %v4035
    %vm4063 = vweird.f32 %v4056
    %vm4064 = vmor %vm4062, %vm4063
    %v4065 = vsel %vm4064, %v4056, %v4061
    %v4066 = vmul.f32 %v4015, %v4045
    %v4067 = vmul.f32 %v4016, %v4055
    %v4068 = vmul.f32 %v4017, %v4065
    %v4069 = vmul.f32 %v4066, %v2058
    %v4070 = vmul.f32 %v4067, %v2058
    %v4071 = vmul.f32 %v4068, %v2058
    %v4072 = vadd.f32 %v4069, %v2064
    %v4073 = vadd.f32 %v4070, %v2064
    %v4074 = vadd.f32 %v4071, %v2064
    %v4076 = vsel %vm207, %v4072, 0
    %v4079 = vsel %vm207, %v4073, 0
    %v4082 = vsel %vm207, %v4074, 0
    %4084 = vmatpush.msra.mxu0 0.0
    %4085 = vmatpush.msra.mxu0 0.0
    %4086 = vmatpush.msra.mxu0 0.0
    %4087 = vmatpush.msra.mxu0 0.0
    %4088 = vmatpush.msra.mxu0 0.0
    %4089 = vmatpush.msra.mxu0 0.0
    %4090 = vmatpush.msra.mxu0 0.0
    %4091 = vmatpush.msra.mxu0 0.0
    %4092 = vmatpush.msra.mxu0 0.0
    %4093 = vmatpush.msra.mxu0 0.0
    %4094 = vmatpush.msra.mxu0 0.0
    %4095 = vmatpush.msra.mxu0 0.0
    %4096 = vmatpush.msra.mxu0 %v128
    %4097 = vmatpush.msra.mxu0 %v127
    %4098 = vmatpush.msra.mxu0 %v126
    %4099 = vmatpush.msra.mxu0 %v125
    %4100 = vmatmul.f32.gmra.mxu0 %v4076
    %v4101 = vpop.f32.mrf.mxu0
    %v4102 = vadd.f32 %v2070, %v4101
    %4103 = vmatmul.f32.gmra.mxu0 %v4079
    %v4104 = vpop.f32.mrf.mxu0
    %v4105 = vadd.f32 %v2070, %v4104
    %4106 = vmatmul.f32.gmra.mxu0 %v4082
    %v4107 = vpop.f32.mrf.mxu0
    %v4108 = vadd.f32 %v2070, %v4107
    %4109 = vdwg.mxu0
    %v4110 = vmul.f32 %v4102, %v4102
    %v4111 = vmul.f32 %v4105, %v4105
    %v4112 = vmul.f32 %v4108, %v4108
    %v4113 = vmul.f32 %v4102, %v4110
    %v4114 = vmul.f32 %v4105, %v4111
    %v4115 = vmul.f32 %v4108, %v4112
    %v4116 = vmul.f32 %v4113, 0.044715
    %v4117 = vmul.f32 %v4114, 0.044715
    %v4118 = vmul.f32 %v4115, 0.044715
    %v4119 = vadd.f32 %v4102, %v4116
    %v4120 = vadd.f32 %v4105, %v4117
    %v4121 = vadd.f32 %v4108, %v4118
    %v4122 = vmul.f32 %v4119, 0.7978846
    %v4123 = vmul.f32 %v4120, 0.7978846
    %v4124 = vmul.f32 %v4121, 0.7978846
    %v4125 = vtanh.pop %v4122
    %v4126 = vtanh.pop %v4123
    %v4127 = vtanh.pop %v4124
    %v4128 = vadd.f32 %v4125, 1.0
    %v4129 = vadd.f32 %v4126, 1.0
    %v4130 = vadd.f32 %v4127, 1.0
    %v4131 = vmul.f32 %v4128, 0.5
    %v4132 = vmul.f32 %v4129, 0.5
    %v4133 = vmul.f32 %v4130, 0.5
    %v4134 = vmul.f32 %v4102, %v4131
    %v4135 = vmul.f32 %v4105, %v4132
    %v4136 = vmul.f32 %v4108, %v4133
    %v4138 = vsel %vm1159, %v4134, 0
    %v4141 = vsel %vm1159, %v4135, 0
    %v4144 = vsel %vm1159, %v4136, 0
    %4146 = vmatpush.msra.mxu0 0.0
    %4147 = vmatpush.msra.mxu0 0.0
    %4148 = vmatpush.msra.mxu0 0.0
    %4149 = vmatpush.msra.mxu0 0.0
    %4150 = vmatpush.msra.mxu0 0.0
    %4151 = vmatpush.msra.mxu0 0.0
    %4152 = vmatpush.msra.mxu0 0.0
    %4153 = vmatpush.msra.mxu0 0.0
    %4154 = vmatpush.msra.mxu0 %v139
    %4155 = vmatpush.msra.mxu0 %v138
    %4156 = vmatpush.msra.mxu0 %v137
    %4157 = vmatpush.msra.mxu0 %v136
    %4158 = vmatpush.msra.mxu0 %v135
    %4159 = vmatpush.msra.mxu0 %v134
    %4160 = vmatpush.msra.mxu0 %v133
    %4161 = vmatpush.msra.mxu0 %v132
    %4162 = vmatmul.f32.gmra.mxu0 %v4138
    %v4163 = vpop.f32.mrf.mxu0
    %v4164 = vadd.f32 %v2135, %v4163
    %4165 = vmatmul.f32.gmra.mxu0 %v4141
    %v4166 = vpop.f32.mrf.mxu0
    %4167 = vmatmul.f32.gmra.mxu0 %v4144
    %v4168 = vpop.f32.mrf.mxu0
    %4169 = vdwg.mxu0
    %v4170 = vadd.f32 %v4000, %v4164
    %v4171 = vsel %vm214, %v4170, 0.0
    %4172 = vadd.xlane.f32.xlu0 %v4171
    %v4173 = vpop.xlane.xlu0 %4172
    %v4174 = vmul.f32 %v4173, %v224
    %v4175 = vsub.f32 %v4170, %v4174
    %v4176 = vmul.f32 %v4175, %v4175
    %v4177 = vsel %vm214, %v4176, 0.0
    %4178 = vadd.xlane.f32.xlu0 %v4177
    %v4179 = vpop.xlane.xlu0 %4178
    %v4180 = vmul.f32 %v4179, %v224
    %v4181 = vadd.f32 %v4180, 1e-05
    %v4182 = vrsqrt.pop %v4181
    %v4183 = vmul.f32 %v4182, %v4181
    %v4184 = vmul.f32 %v4183, %v4182
    %v4185 = vmul.f32 0.5, %v4184
    %v4186 = vsub.f32 1.5, %v4185
    %v4187 = vmul.f32 %v4182, %v4186
    %vm4188 = vweird.f32 %v4181
    %vm4189 = vweird.f32 %v4182
    %vm4190 = vmor %vm4188, %vm4189
    %v4191 = vsel %vm4190, %v4182, %v4187
    %v4192 = vmul.f32 %v4175, %v4191
    %v4193 = vmul.f32 %v4192, %v142
    %v4194 = vadd.f32 %v4193, %v143
    %v4196 = vsel %vm207, %v4194, 0
    %4198 = vmatpush.msra.mxu0 0.0
    %4199 = vmatpush.msra.mxu0 0.0
    %4200 = vmatpush.msra.mxu0 0.0
    %4201 = vmatpush.msra.mxu0 0.0
    %4202 = vmatpush.msra.mxu0 0.0
    %4203 = vmatpush.msra.mxu0 0.0
    %4204 = vmatpush.msra.mxu0 0.0
    %4205 = vmatpush.msra.mxu0 0.0
    %4206 = vmatpush.msra.mxu0 0.0
    %4207 = vmatpush.msra.mxu0 0.0
    %4208 = vmatpush.msra.mxu0 0.0
    %4209 = vmatpush.msra.mxu0 0.0
    %4210 = vmatpush.msra.mxu0 %v147
    %4211 = vmatpush.msra.mxu0 %v146
    %4212 = vmatpush.msra.mxu0 %v145
    %4213 = vmatpush.msra.mxu0 %v144
    %4214 = vmatmul.f32.gmra.mxu0 %v4196
    %v4215 = vpop.f32.mrf.mxu0
    %v4216 = vadd.f32 %v148, %v4215
    %4217 = vdwg.mxu0
    %4218 = vst.msk [vmem:[#allocation2 + $0x1] sm:$0x1] %vm2218, %v4216
    // Predicated region
    $region82: #{vit_forward.1} parent=1 // pred_check
      _
    $region83: #{vit_forward.1} parent=1 // pred_check_branch
      %4220 = sbr.rel (0) target = $region85
    $region84: #{vit_forward.1} parent=1 // pred_region
      %4222 = vsyncadd [#allocation3], 0
      %s4224 = sshll.u32 [#allocation2], 4
      %s4225 = int_to_ptr.vmem [resolvable:$true] %s4224
      %s4226 = sshll.u32 %s20, 4
      %s4227 = int_to_ptr.hbm [resolvable:$true] %s4226
      %4229 = dma.vmem_to_hbm [thread:$0]  %s4225, 32, %s4227, [#allocation3]
    $region85: #{vit_forward.1} parent=1 // pred_fallthru
      _
    // Predicated region
    $region86: #{vit_forward.1} parent=1 // pred_check
      _
    $region87: #{vit_forward.1} parent=1 // pred_check_branch
      %4231 = sbr.rel (0) target = $region89
    $region88: #{vit_forward.1} parent=1 // pred_region
      %4233 = dma.done [#allocation3], 32
    $region89: #{vit_forward.1} parent=1 // pred_fallthru
      _
    %4234 = vsyncpa [#allocation3], 1

</llo_original>
